<compile_context>
chip_gen: v7x
topology: tpu7x:2x2x1
jax: 0.10.0
libtpu: 0.0.40
codegen_flags: <defaults>
</compile_context>

<pallas_src>
import functools

import numpy as np
import jax
import jax.numpy as jnp
from jax import lax
from jax.experimental import pallas as pl
from jax.experimental.pallas import tpu as pltpu


# ----------------------------------------------------------------------------
# VMEM budget per TPU generation
# ----------------------------------------------------------------------------
@functools.lru_cache(maxsize=None)
def _vmem_limit_bytes():
    try:
        cap = int(pltpu.get_tpu_info().vmem_capacity_bytes)
    except Exception:
        cap = 64 * 1024 * 1024  # conservative (v7x-sized) fallback
    # ~3/4 of physical VMEM, capped: leaves headroom for the double-buffered
    # x/out DMA.  (v7x: 48 MiB of 64; v5e/v6e: ~96-100 MiB of 128.)
    return max(16 * 1024 * 1024, min(cap * 3 // 4, 100 * 1024 * 1024))


# ----------------------------------------------------------------------------
# Fused kernel factory
# ----------------------------------------------------------------------------
def _make_fused_kernel(T, Bc, layer_dims):
    """Build the fused DemapperLSTM trunk kernel for one batch chunk.

    Ref order: x(T*Bc, IN0); per layer: wih(IN, 8H), whh(H, 8H), b(1, 8H);
    fc_w(2H_last, Cpad); fc_b(1, Cpad); out(T*Bc, Cpad);
    scratch: gx(T*Bc, 8Hmax), hf(T*Bc, Hmax), hb(T*Bc, Hmax)  (reused per layer).

    Weight column layout per layer: [W_f(i,f,g,o) | W_b(i,f,g,o)] (PyTorch gate
    order, both directions stacked along the output dim). Bias is b_ih + b_hh.
    """
    L = len(layer_dims)
    full_unroll = (T * L) <= 32
    fori_unroll = 4 if T % 4 == 0 else (2 if T % 2 == 0 else 1)

    def kernel(*refs):
        x_ref = refs[0]
        w_refs = refs[1:1 + 3 * L]
        fc_w_ref = refs[1 + 3 * L]
        fc_b_ref = refs[2 + 3 * L]
        out_ref = refs[3 + 3 * L]
        gx_scr = refs[4 + 3 * L]
        hf_scr = refs[5 + 3 * L]
        hb_scr = refs[6 + 3 * L]

        mm = fc_w_ref.dtype  # matmul operand dtype (f32 or bf16)

        def rows(ti):
            start = ti * Bc
            if not isinstance(start, int) and Bc % 8 == 0:
                start = pl.multiple_of(start, Bc)
            return pl.ds(start, Bc)

        h_prev = None  # hidden size of previous layer (None => read x_ref)
        for l in range(L):
            _, H = layer_dims[l]
            wih_ref, whh_ref, b_ref = w_refs[3 * l:3 * l + 3]

            # ---- hoisted input projection: all steps, both directions ------
            # relu is applied to every layer's input (incl. the embedding).
            if l == 0:
                g = jnp.dot(jnp.maximum(x_ref[...], 0.0).astype(mm),
                            wih_ref[...], preferred_element_type=jnp.float32)
            else:
                hp = h_prev
                # No feature-dim concat: split W_ih into its fwd/bwd row halves
                # and read the previous layer's per-direction output refs.
                g = (jnp.dot(jnp.maximum(hf_scr[:, 0:hp], 0.0).astype(mm),
                             wih_ref[0:hp, :],
                             preferred_element_type=jnp.float32)
                     + jnp.dot(jnp.maximum(hb_scr[:, 0:hp], 0.0).astype(mm),
                               wih_ref[hp:2 * hp, :],
                               preferred_element_type=jnp.float32))
            gx_scr[:, 0:8 * H] = g + b_ref[...]

            # TODO(synk): pad H to a lane multiple (128) so gate slices and the
            # h stores below are lane-dense when H % 128 != 0.
            def lstm_cell(gates, c):
                i = jax.nn.sigmoid(gates[:, 0 * H:1 * H])
                f = jax.nn.sigmoid(gates[:, 1 * H:2 * H])
                gg = jnp.tanh(gates[:, 2 * H:3 * H])
                o = jax.nn.sigmoid(gates[:, 3 * H:4 * H])
                c_new = f * c + i * gg
                return o * jnp.tanh(c_new), c_new

            def step(t, h_f, c_f, h_b, c_b):
                rt = T - 1 - t
                # Per-direction recurrent matmuls; weights stay in VMEM refs.
                # TODO(synk): keep W_hh resident in the MXU across the time
                # loop (pltpu.matmul_push_rhs / matmul_acc_lhs) to avoid
                # re-pushing the RHS every step.
                hh_f = jnp.dot(h_f.astype(mm), whh_ref[:, 0:4 * H],
                               preferred_element_type=jnp.float32)
                hh_b = jnp.dot(h_b.astype(mm), whh_ref[:, 4 * H:8 * H],
                               preferred_element_type=jnp.float32)
                h_f, c_f = lstm_cell(gx_scr[rows(t), 0:4 * H] + hh_f, c_f)
                h_b, c_b = lstm_cell(gx_scr[rows(rt), 4 * H:8 * H] + hh_b, c_b)
                # Only the layer outputs touch VMEM; h/c stay in vregs.
                hf_scr[rows(t), 0:H] = h_f
                hb_scr[rows(rt), 0:H] = h_b
                return h_f, c_f, h_b, c_b

            z = jnp.zeros((Bc, H), jnp.float32)
            if full_unroll:
                h_f = c_f = h_b = c_b = z
                for t in range(T):
                    h_f, c_f, h_b, c_b = step(t, h_f, c_f, h_b, c_b)
            else:
                lax.fori_loop(0, T, lambda t, c: step(t, *c), (z, z, z, z),
                              unroll=fori_unroll)

            h_prev = H

        # ---- final ReLU + Linear; lane-dense (Cpad % 128 == 0) output store --
        hp = h_prev
        out = (jnp.dot(jnp.maximum(hf_scr[:, 0:hp], 0.0).astype(mm),
                       fc_w_ref[0:hp, :], preferred_element_type=jnp.float32)
               + jnp.dot(jnp.maximum(hb_scr[:, 0:hp], 0.0).astype(mm),
                         fc_w_ref[hp:2 * hp, :],
                         preferred_element_type=jnp.float32)
               + fc_b_ref[...])
        out_ref[...] = out.astype(out_ref.dtype)

    return kernel


# ----------------------------------------------------------------------------
# Wrapper
# ----------------------------------------------------------------------------
@functools.partial(jax.jit, static_argnums=(2, 3, 4))
def demapper_lstm_forward(params, bt_x, n_out, matmul_dtype=jnp.float32,
                          batch_chunks=1):
    """Fused DemapperLSTM forward.  Set batch_chunks=2 on v7x (2 TCs/chip)."""
    B, T = bt_x.shape
    assert B % batch_chunks == 0, (B, batch_chunks)
    nbc = batch_chunks
    Bc = B // nbc

    emb_table = params["embedding"]
    F0 = emb_table.shape[1]

    # Chunk-major, time-major gather: only the tiny int32 index tensor is
    # permuted, never the (B, T, F0) f32 embedded tensor (no HBM transpose).
    idx = bt_x.reshape(nbc, Bc, T).transpose(0, 2, 1)             # (nbc, T, Bc)
    x = jnp.take(emb_table, idx, axis=0).reshape(nbc, T * Bc, F0)

    layer_dims = [(w.shape[0], w.shape[1] // 8) for (w, _, _) in params["lstm"]]
    h_max = max(h for _, h in layer_dims)
    c_pad = params["fc_w"].shape[1]

    # TODO(synk): tile the sequence (grid axis over T-chunks with carried h/c)
    # for sequences too long for whole-sequence VMEM residency; the backward
    # direction makes this a two-pass change.
    kernel = _make_fused_kernel(T, Bc, layer_dims)

    def _full(arr):  # whole (2-D) array VMEM-resident, same block every step
        return pl.BlockSpec(arr.shape, lambda i: (0, 0))

    # TODO(synk): for large models keep per-layer weights in HBM (pl.ANY) and
    # double-buffer layer l+1's weights via pltpu.make_async_copy while layer l
    # runs (v7x 64 MiB VMEM).
    inputs = [x]
    in_specs = [pl.BlockSpec((None, T * Bc, F0), lambda i: (i, 0, 0))]
    for wih, whh, b in params["lstm"]:
        wih = wih.astype(matmul_dtype)
        whh = whh.astype(matmul_dtype)
        inputs += [wih, whh, b]
        in_specs += [_full(wih), _full(whh), _full(b)]
    fc_w = params["fc_w"].astype(matmul_dtype)
    fc_b = params["fc_b"]
    inputs += [fc_w, fc_b]
    in_specs += [_full(fc_w), _full(fc_b)]

    out_flat = pl.pallas_call(
        kernel,
        out_shape=jax.ShapeDtypeStruct((nbc, T * Bc, c_pad), jnp.float32),
        grid=(nbc,),
        in_specs=in_specs,
        out_specs=pl.BlockSpec((None, T * Bc, c_pad), lambda i: (i, 0, 0)),
        scratch_shapes=[
            pltpu.VMEM((T * Bc, 8 * h_max), jnp.float32),  # hoisted input proj
            pltpu.VMEM((T * Bc, h_max), jnp.float32),      # fwd layer outputs
            pltpu.VMEM((T * Bc, h_max), jnp.float32),      # bwd layer outputs
        ],
        compiler_params=pltpu.CompilerParams(
            dimension_semantics=("parallel",),
            vmem_limit_bytes=_vmem_limit_bytes(),
        ),
    )(*inputs)

    # (nbc, T*Bc, Cpad) -> (B, T, Cout); padded fc columns are exact zeros.
    out = (out_flat.reshape(nbc, T, Bc, c_pad)
           .transpose(0, 2, 1, 3)
           .reshape(B, T, c_pad))[:, :, :n_out]
    return out


# ----------------------------------------------------------------------------
# Deterministic parameter construction (shapes from DemapperLSTM.__init__),
# stored directly in the stacked/padded kernel layout (always f32; the wrapper
# casts matmul operands if a narrower matmul dtype is requested).
# ----------------------------------------------------------------------------
def _uniform(key, shape, bound):
    return jax.random.uniform(key, shape, jnp.float32, -bound, bound)


def init_params(key, vocab_in, out_alphabet_len, hidden_sizes):
    # Matches: Embedding(len(in_mapper)+1, hidden_sizes[0]);
    # hidden_sizes += [len(out_mapper)]; per layer bi-LSTM(in=sz[n], hid=sz[n+1]//2);
    # out_fc = Linear(sz[-1]//2*2, len(out_mapper)+1).
    sizes = list(hidden_sizes) + [out_alphabet_len]
    params = {}
    key, k_emb = jax.random.split(key)
    params["embedding"] = jax.random.normal(
        k_emb, (vocab_in, hidden_sizes[0]), jnp.float32)
    layers = []
    for n in range(len(sizes) - 1):
        in_sz = sizes[n]
        hid = sizes[n + 1] // 2
        bound = 1.0 / np.sqrt(hid)
        per_dir = {}
        for d in ("fwd", "bwd"):
            key, k1, k2, k3, k4 = jax.random.split(key, 5)
            wih = _uniform(k1, (in_sz, 4 * hid), bound)               # W_ih^T
            whh = _uniform(k2, (hid, 4 * hid), bound)                 # W_hh^T
            b = _uniform(k3, (4 * hid,), bound) + _uniform(k4, (4 * hid,), bound)
            per_dir[d] = (wih, whh, b)
        wih_both = jnp.concatenate([per_dir["fwd"][0], per_dir["bwd"][0]], axis=1)
        whh_both = jnp.concatenate([per_dir["fwd"][1], per_dir["bwd"][1]], axis=1)
        b_both = jnp.concatenate([per_dir["fwd"][2], per_dir["bwd"][2]],
                                 axis=0).reshape(1, 8 * hid)
        layers.append((wih_both, whh_both, b_both))
    params["lstm"] = layers

    cin = (sizes[-1] // 2) * 2
    cout = out_alphabet_len + 1
    c_pad = ((cout + 127) // 128) * 128          # lane-dense output store
    bound = 1.0 / np.sqrt(cin)
    key, kw, kb = jax.random.split(key, 3)
    fc_w = _uniform(kw, (cin, cout), bound)      # W_fc^T
    fc_b = _uniform(kb, (1, cout), bound)
    # NOTE: padded columns must remain exactly zero (sliced off post-kernel).
    params["fc_w"] = jnp.zeros((cin, c_pad), jnp.float32).at[:, :cout].set(fc_w)
    params["fc_b"] = jnp.zeros((1, c_pad), jnp.float32).at[:, :cout].set(fc_b)
    return params


# ----------------------------------------------------------------------------
# Pure-JAX reference (same math, lax.scan) for a numerical sanity check
# ----------------------------------------------------------------------------
def _lstm_dir_ref(x, wih, whh, b):
    H = whh.shape[0]
    B = x.shape[1]

    def step(carry, x_t):
        h, c = carry
        g = jnp.maximum(x_t, 0.0) @ wih + h @ whh + b
        i = jax.nn.sigmoid(g[:, :H])
        f = jax.nn.sigmoid(g[:, H:2 * H])
        gg = jnp.tanh(g[:, 2 * H:3 * H])
        o = jax.nn.sigmoid(g[:, 3 * H:])
        c = f * c + i * gg
        h = o * jnp.tanh(c)
        return (h, c), h

    init = (jnp.zeros((B, H), jnp.float32), jnp.zeros((B, H), jnp.float32))
    _, hs = lax.scan(step, init, x)
    return hs


def forward_ref(params, bt_x, n_out):
    btc = jnp.take(params["embedding"], bt_x, axis=0)
    tbc = jnp.transpose(btc, (1, 0, 2))
    for wih_both, whh_both, b_both in params["lstm"]:
        H = whh_both.shape[0]
        h_f = _lstm_dir_ref(tbc, wih_both[:, :4 * H], whh_both[:, :4 * H],
                            b_both[:, :4 * H])
        h_b = jnp.flip(
            _lstm_dir_ref(jnp.flip(tbc, 0), wih_both[:, 4 * H:],
                          whh_both[:, 4 * H:], b_both[:, 4 * H:]), 0)
        tbc = jnp.concatenate([h_f, h_b], -1)
    btc = jnp.transpose(tbc, (1, 0, 2))
    y = jnp.maximum(btc, 0.0) @ params["fc_w"] + params["fc_b"][0]
    return y[:, :, :n_out]


# ----------------------------------------------------------------------------
if __name__ == "__main__":
    key = jax.random.PRNGKey(0)

    # ---- config 1: tiny model, fully-unrolled time loop, f32 matmuls -------
    B, T = 2, 8
    in_alphabet_len = 12      # len(input_mapper)  -> embedding vocab = 13
    out_alphabet_len = 16     # len(output_mapper) (even)
    hidden_sizes = [32, 32]
    n_out = out_alphabet_len + 1

    key, pkey, xkey = jax.random.split(key, 3)
    params = init_params(pkey, in_alphabet_len + 1, out_alphabet_len, hidden_sizes)
    bt_x = jax.random.randint(xkey, (B, T), 0, in_alphabet_len + 1, dtype=jnp.int32)

    out = jax.block_until_ready(
        demapper_lstm_forward(params, bt_x, n_out, jnp.float32, 1))
    assert out.shape == (B, T, n_out), out.shape
    ref = jax.block_until_ready(forward_ref(params, bt_x, n_out))
    np.testing.assert_allclose(np.asarray(out), np.asarray(ref),
                               rtol=2e-3, atol=2e-3)

    # ---- config 2: lane-aligned H=128, fori_loop(unroll=4) path, bf16 MXU
    #      operands, 2-way parallel batch grid (v7x megacore) ----------------
    B2, T2 = 4, 20
    out_alphabet_len2 = 256
    hidden_sizes2 = [256, 256]
    n_out2 = out_alphabet_len2 + 1
    key, pkey2, xkey2 = jax.random.split(key, 3)
    params2 = init_params(pkey2, in_alphabet_len + 1, out_alphabet_len2,
                          hidden_sizes2)
    bt_x2 = jax.random.randint(xkey2, (B2, T2), 0, in_alphabet_len + 1,
                               dtype=jnp.int32)

    out2 = jax.block_until_ready(
        demapper_lstm_forward(params2, bt_x2, n_out2, jnp.bfloat16, 2))
    assert out2.shape == (B2, T2, n_out2), out2.shape
    ref2 = jax.block_until_ready(forward_ref(params2, bt_x2, n_out2))
    np.testing.assert_allclose(np.asarray(out2), np.asarray(ref2),
                               rtol=1e-1, atol=1e-1)

    print("KERNEL_OK")
</pallas_src>

<mosaic_0001>
module attributes {stable_mosaic.version = 11 : i64} {
  func.func @kernel(%arg0: i32, %arg1: memref<1x16x32xf32, #tpu.memory_space<vmem>>, %arg2: memref<32x128xf32, #tpu.memory_space<vmem>>, %arg3: memref<16x128xf32, #tpu.memory_space<vmem>>, %arg4: memref<1x128xf32, #tpu.memory_space<vmem>>, %arg5: memref<32x64xf32, #tpu.memory_space<vmem>>, %arg6: memref<8x64xf32, #tpu.memory_space<vmem>>, %arg7: memref<1x64xf32, #tpu.memory_space<vmem>>, %arg8: memref<16x128xf32, #tpu.memory_space<vmem>>, %arg9: memref<1x128xf32, #tpu.memory_space<vmem>>, %arg10: memref<1x16x128xf32, #tpu.memory_space<vmem>>, %arg11: memref<16x128xf32, #tpu.memory_space<vmem>>, %arg12: memref<16x16xf32, #tpu.memory_space<vmem>>, %arg13: memref<16x16xf32, #tpu.memory_space<vmem>>) attributes {dimension_semantics = [#tpu.dimension_semantics<parallel>], iteration_bounds = array<i64: 1>, scalar_prefetch = 0 : i64, scratch_operands = 3 : i64, tpu.core_type = #tpu.core_type<tc>, window_params = [{transform_indices = @transform_0, window_bounds = array<i64: 1, 16, 32>}, {pipeline_mode = #tpu.pipeline_mode<synchronous>, transform_indices = @transform_1, window_bounds = array<i64: 32, 128>}, {pipeline_mode = #tpu.pipeline_mode<synchronous>, transform_indices = @transform_2, window_bounds = array<i64: 16, 128>}, {pipeline_mode = #tpu.pipeline_mode<synchronous>, transform_indices = @transform_3, window_bounds = array<i64: 1, 128>}, {pipeline_mode = #tpu.pipeline_mode<synchronous>, transform_indices = @transform_4, window_bounds = array<i64: 32, 64>}, {pipeline_mode = #tpu.pipeline_mode<synchronous>, transform_indices = @transform_5, window_bounds = array<i64: 8, 64>}, {pipeline_mode = #tpu.pipeline_mode<synchronous>, transform_indices = @transform_6, window_bounds = array<i64: 1, 64>}, {pipeline_mode = #tpu.pipeline_mode<synchronous>, transform_indices = @transform_7, window_bounds = array<i64: 16, 128>}, {pipeline_mode = #tpu.pipeline_mode<synchronous>, transform_indices = @transform_8, window_bounds = array<i64: 1, 128>}, {transform_indices = @transform_9, window_bounds = array<i64: 1, 16, 128>}]} {
    %c0 = arith.constant 0 : index
    %c0_0 = arith.constant 0 : index
    %c0_1 = arith.constant 0 : index
    %0 = vector.load %arg1[%c0, %c0_0, %c0_1] : memref<1x16x32xf32, #tpu.memory_space<vmem>>, vector<1x16x32xf32>
    %1 = vector.shape_cast %0 : vector<1x16x32xf32> to vector<16x32xf32>
    %cst = arith.constant 0.000000e+00 : f32
    %2 = vector.broadcast %cst : f32 to vector<16x32xf32>
    %3 = arith.maximumf %1, %2 : vector<16x32xf32>
    %c0_2 = arith.constant 0 : index
    %c0_3 = arith.constant 0 : index
    %4 = vector.load %arg2[%c0_2, %c0_3] : memref<32x128xf32, #tpu.memory_space<vmem>>, vector<32x128xf32>
    %cst_4 = arith.constant dense<0.000000e+00> : vector<16x128xf32>
    %5 = tpu.matmul %3, %4, %cst_4 {dimension_numbers = #tpu.dot_dimension_numbers<[1], [0], [0], [1], [0, 0, 1, 1], [], []>} : vector<16x32xf32>, vector<32x128xf32>, vector<16x128xf32> -> vector<16x128xf32>
    %c0_5 = arith.constant 0 : index
    %c0_6 = arith.constant 0 : index
    %6 = vector.load %arg4[%c0_5, %c0_6] : memref<1x128xf32, #tpu.memory_space<vmem>>, vector<1x128xf32>
    %7 = vector.broadcast %6 : vector<1x128xf32> to vector<16x128xf32>
    %8 = arith.addf %5, %7 : vector<16x128xf32>
    %c0_7 = arith.constant 0 : index
    %c0_8 = arith.constant 0 : index
    %9 = vector.load %arg11[%c0_7, %c0_8] : memref<16x128xf32, #tpu.memory_space<vmem>>, vector<16x128xf32>
    tpu.vector_store %arg11[%c0_7, %c0_8], %8 {strides = array<i32>} : memref<16x128xf32, #tpu.memory_space<vmem>>, vector<16x128xf32>,
    %cst_9 = arith.constant 0.000000e+00 : f32
    %10 = vector.broadcast %cst_9 : f32 to vector<2x16xf32>
    %c0_10 = arith.constant 0 : index
    %c0_11 = arith.constant 0 : index
    %11 = vector.load %arg3[%c0_10, %c0_11] : memref<16x128xf32, #tpu.memory_space<vmem>>, vector<16x64xf32>
    %cst_12 = arith.constant dense<0.000000e+00> : vector<2x64xf32>
    %12 = tpu.matmul %10, %11, %cst_12 {dimension_numbers = #tpu.dot_dimension_numbers<[1], [0], [0], [1], [0, 0, 1, 1], [], []>} : vector<2x16xf32>, vector<16x64xf32>, vector<2x64xf32> -> vector<2x64xf32>
    %c0_13 = arith.constant 0 : index
    %c64 = arith.constant 64 : index
    %13 = vector.load %arg3[%c0_13, %c64] : memref<16x128xf32, #tpu.memory_space<vmem>>, vector<16x64xf32>
    %cst_14 = arith.constant dense<0.000000e+00> : vector<2x64xf32>
    %14 = tpu.matmul %10, %13, %cst_14 {dimension_numbers = #tpu.dot_dimension_numbers<[1], [0], [0], [1], [0, 0, 1, 1], [], []>} : vector<2x16xf32>, vector<16x64xf32>, vector<2x64xf32> -> vector<2x64xf32>
    %c0_15 = arith.constant 0 : index
    %c0_16 = arith.constant 0 : index
    %15 = vector.load %arg11[%c0_15, %c0_16] : memref<16x128xf32, #tpu.memory_space<vmem>>, vector<2x64xf32>
    %16 = arith.addf %15, %12 : vector<2x64xf32>
    %17 = vector.extract_strided_slice %16 {offsets = [0, 0], sizes = [2, 16], strides = [1, 1]} : vector<2x64xf32> to vector<2x16xf32>
    %18 = arith.negf %17 : vector<2x16xf32>
    %19 = math.exp %18 : vector<2x16xf32>
    %cst_17 = arith.constant 1.000000e+00 : f32
    %20 = vector.broadcast %cst_17 : f32 to vector<2x16xf32>
    %21 = arith.addf %20, %19 : vector<2x16xf32>
    %22 = arith.divf %20, %21 : vector<2x16xf32>
    %23 = vector.extract_strided_slice %16 {offsets = [0, 16], sizes = [2, 16], strides = [1, 1]} : vector<2x64xf32> to vector<2x16xf32>
    %24 = arith.negf %23 : vector<2x16xf32>
    %25 = math.exp %24 : vector<2x16xf32>
    %cst_18 = arith.constant 1.000000e+00 : f32
    %26 = vector.broadcast %cst_18 : f32 to vector<2x16xf32>
    %27 = arith.addf %26, %25 : vector<2x16xf32>
    %28 = arith.divf %26, %27 : vector<2x16xf32>
    %29 = vector.extract_strided_slice %16 {offsets = [0, 32], sizes = [2, 16], strides = [1, 1]} : vector<2x64xf32> to vector<2x16xf32>
    %30 = math.tanh %29 : vector<2x16xf32>
    %31 = vector.extract_strided_slice %16 {offsets = [0, 48], sizes = [2, 16], strides = [1, 1]} : vector<2x64xf32> to vector<2x16xf32>
    %32 = arith.negf %31 : vector<2x16xf32>
    %33 = math.exp %32 : vector<2x16xf32>
    %cst_19 = arith.constant 1.000000e+00 : f32
    %34 = vector.broadcast %cst_19 : f32 to vector<2x16xf32>
    %35 = arith.addf %34, %33 : vector<2x16xf32>
    %36 = arith.divf %34, %35 : vector<2x16xf32>
    %37 = arith.mulf %28, %10 : vector<2x16xf32>
    %38 = arith.mulf %22, %30 : vector<2x16xf32>
    %39 = arith.addf %37, %38 : vector<2x16xf32>
    %40 = math.tanh %39 : vector<2x16xf32>
    %41 = arith.mulf %36, %40 : vector<2x16xf32>
    %c14 = arith.constant 14 : index
    %c64_20 = arith.constant 64 : index
    %42 = vector.load %arg11[%c14, %c64_20] : memref<16x128xf32, #tpu.memory_space<vmem>>, vector<2x64xf32>
    %43 = arith.addf %42, %14 : vector<2x64xf32>
    %44 = vector.extract_strided_slice %43 {offsets = [0, 0], sizes = [2, 16], strides = [1, 1]} : vector<2x64xf32> to vector<2x16xf32>
    %45 = arith.negf %44 : vector<2x16xf32>
    %46 = math.exp %45 : vector<2x16xf32>
    %cst_21 = arith.constant 1.000000e+00 : f32
    %47 = vector.broadcast %cst_21 : f32 to vector<2x16xf32>
    %48 = arith.addf %47, %46 : vector<2x16xf32>
    %49 = arith.divf %47, %48 : vector<2x16xf32>
    %50 = vector.extract_strided_slice %43 {offsets = [0, 16], sizes = [2, 16], strides = [1, 1]} : vector<2x64xf32> to vector<2x16xf32>
    %51 = arith.negf %50 : vector<2x16xf32>
    %52 = math.exp %51 : vector<2x16xf32>
    %cst_22 = arith.constant 1.000000e+00 : f32
    %53 = vector.broadcast %cst_22 : f32 to vector<2x16xf32>
    %54 = arith.addf %53, %52 : vector<2x16xf32>
    %55 = arith.divf %53, %54 : vector<2x16xf32>
    %56 = vector.extract_strided_slice %43 {offsets = [0, 32], sizes = [2, 16], strides = [1, 1]} : vector<2x64xf32> to vector<2x16xf32>
    %57 = math.tanh %56 : vector<2x16xf32>
    %58 = vector.extract_strided_slice %43 {offsets = [0, 48], sizes = [2, 16], strides = [1, 1]} : vector<2x64xf32> to vector<2x16xf32>
    %59 = arith.negf %58 : vector<2x16xf32>
    %60 = math.exp %59 : vector<2x16xf32>
    %cst_23 = arith.constant 1.000000e+00 : f32
    %61 = vector.broadcast %cst_23 : f32 to vector<2x16xf32>
    %62 = arith.addf %61, %60 : vector<2x16xf32>
    %63 = arith.divf %61, %62 : vector<2x16xf32>
    %64 = arith.mulf %55, %10 : vector<2x16xf32>
    %65 = arith.mulf %49, %57 : vector<2x16xf32>
    %66 = arith.addf %64, %65 : vector<2x16xf32>
    %67 = math.tanh %66 : vector<2x16xf32>
    %68 = arith.mulf %63, %67 : vector<2x16xf32>
    %c0_24 = arith.constant 0 : index
    %c0_25 = arith.constant 0 : index
    %69 = vector.load %arg12[%c0_24, %c0_25] : memref<16x16xf32, #tpu.memory_space<vmem>>, vector<2x16xf32>
    tpu.vector_store %arg12[%c0_24, %c0_25], %41 {strides = array<i32>} : memref<16x16xf32, #tpu.memory_space<vmem>>, vector<2x16xf32>,
    %c14_26 = arith.constant 14 : index
    %c0_27 = arith.constant 0 : index
    %70 = vector.load %arg13[%c14_26, %c0_27] : memref<16x16xf32, #tpu.memory_space<vmem>>, vector<2x16xf32>
    tpu.vector_store %arg13[%c14_26, %c0_27], %68 {strides = array<i32>} : memref<16x16xf32, #tpu.memory_space<vmem>>, vector<2x16xf32>,
    %c0_28 = arith.constant 0 : index
    %c0_29 = arith.constant 0 : index
    %71 = vector.load %arg3[%c0_28, %c0_29] : memref<16x128xf32, #tpu.memory_space<vmem>>, vector<16x64xf32>
    %cst_30 = arith.constant dense<0.000000e+00> : vector<2x64xf32>
    %72 = tpu.matmul %41, %71, %cst_30 {dimension_numbers = #tpu.dot_dimension_numbers<[1], [0], [0], [1], [0, 0, 1, 1], [], []>} : vector<2x16xf32>, vector<16x64xf32>, vector<2x64xf32> -> vector<2x64xf32>
    %c0_31 = arith.constant 0 : index
    %c64_32 = arith.constant 64 : index
    %73 = vector.load %arg3[%c0_31, %c64_32] : memref<16x128xf32, #tpu.memory_space<vmem>>, vector<16x64xf32>
    %cst_33 = arith.constant dense<0.000000e+00> : vector<2x64xf32>
    %74 = tpu.matmul %68, %73, %cst_33 {dimension_numbers = #tpu.dot_dimension_numbers<[1], [0], [0], [1], [0, 0, 1, 1], [], []>} : vector<2x16xf32>, vector<16x64xf32>, vector<2x64xf32> -> vector<2x64xf32>
    %c2 = arith.constant 2 : index
    %c0_34 = arith.constant 0 : index
    %75 = vector.load %arg11[%c2, %c0_34] : memref<16x128xf32, #tpu.memory_space<vmem>>, vector<2x64xf32>
    %76 = arith.addf %75, %72 : vector<2x64xf32>
    %77 = vector.extract_strided_slice %76 {offsets = [0, 0], sizes = [2, 16], strides = [1, 1]} : vector<2x64xf32> to vector<2x16xf32>
    %78 = arith.negf %77 : vector<2x16xf32>
    %79 = math.exp %78 : vector<2x16xf32>
    %cst_35 = arith.constant 1.000000e+00 : f32
    %80 = vector.broadcast %cst_35 : f32 to vector<2x16xf32>
    %81 = arith.addf %80, %79 : vector<2x16xf32>
    %82 = arith.divf %80, %81 : vector<2x16xf32>
    %83 = vector.extract_strided_slice %76 {offsets = [0, 16], sizes = [2, 16], strides = [1, 1]} : vector<2x64xf32> to vector<2x16xf32>
    %84 = arith.negf %83 : vector<2x16xf32>
    %85 = math.exp %84 : vector<2x16xf32>
    %cst_36 = arith.constant 1.000000e+00 : f32
    %86 = vector.broadcast %cst_36 : f32 to vector<2x16xf32>
    %87 = arith.addf %86, %85 : vector<2x16xf32>
    %88 = arith.divf %86, %87 : vector<2x16xf32>
    %89 = vector.extract_strided_slice %76 {offsets = [0, 32], sizes = [2, 16], strides = [1, 1]} : vector<2x64xf32> to vector<2x16xf32>
    %90 = math.tanh %89 : vector<2x16xf32>
    %91 = vector.extract_strided_slice %76 {offsets = [0, 48], sizes = [2, 16], strides = [1, 1]} : vector<2x64xf32> to vector<2x16xf32>
    %92 = arith.negf %91 : vector<2x16xf32>
    %93 = math.exp %92 : vector<2x16xf32>
    %cst_37 = arith.constant 1.000000e+00 : f32
    %94 = vector.broadcast %cst_37 : f32 to vector<2x16xf32>
    %95 = arith.addf %94, %93 : vector<2x16xf32>
    %96 = arith.divf %94, %95 : vector<2x16xf32>
    %97 = arith.mulf %88, %39 : vector<2x16xf32>
    %98 = arith.mulf %82, %90 : vector<2x16xf32>
    %99 = arith.addf %97, %98 : vector<2x16xf32>
    %100 = math.tanh %99 : vector<2x16xf32>
    %101 = arith.mulf %96, %100 : vector<2x16xf32>
    %c12 = arith.constant 12 : index
    %c64_38 = arith.constant 64 : index
    %102 = vector.load %arg11[%c12, %c64_38] : memref<16x128xf32, #tpu.memory_space<vmem>>, vector<2x64xf32>
    %103 = arith.addf %102, %74 : vector<2x64xf32>
    %104 = vector.extract_strided_slice %103 {offsets = [0, 0], sizes = [2, 16], strides = [1, 1]} : vector<2x64xf32> to vector<2x16xf32>
    %105 = arith.negf %104 : vector<2x16xf32>
    %106 = math.exp %105 : vector<2x16xf32>
    %cst_39 = arith.constant 1.000000e+00 : f32
    %107 = vector.broadcast %cst_39 : f32 to vector<2x16xf32>
    %108 = arith.addf %107, %106 : vector<2x16xf32>
    %109 = arith.divf %107, %108 : vector<2x16xf32>
    %110 = vector.extract_strided_slice %103 {offsets = [0, 16], sizes = [2, 16], strides = [1, 1]} : vector<2x64xf32> to vector<2x16xf32>
    %111 = arith.negf %110 : vector<2x16xf32>
    %112 = math.exp %111 : vector<2x16xf32>
    %cst_40 = arith.constant 1.000000e+00 : f32
    %113 = vector.broadcast %cst_40 : f32 to vector<2x16xf32>
    %114 = arith.addf %113, %112 : vector<2x16xf32>
    %115 = arith.divf %113, %114 : vector<2x16xf32>
    %116 = vector.extract_strided_slice %103 {offsets = [0, 32], sizes = [2, 16], strides = [1, 1]} : vector<2x64xf32> to vector<2x16xf32>
    %117 = math.tanh %116 : vector<2x16xf32>
    %118 = vector.extract_strided_slice %103 {offsets = [0, 48], sizes = [2, 16], strides = [1, 1]} : vector<2x64xf32> to vector<2x16xf32>
    %119 = arith.negf %118 : vector<2x16xf32>
    %120 = math.exp %119 : vector<2x16xf32>
    %cst_41 = arith.constant 1.000000e+00 : f32
    %121 = vector.broadcast %cst_41 : f32 to vector<2x16xf32>
    %122 = arith.addf %121, %120 : vector<2x16xf32>
    %123 = arith.divf %121, %122 : vector<2x16xf32>
    %124 = arith.mulf %115, %66 : vector<2x16xf32>
    %125 = arith.mulf %109, %117 : vector<2x16xf32>
    %126 = arith.addf %124, %125 : vector<2x16xf32>
    %127 = math.tanh %126 : vector<2x16xf32>
    %128 = arith.mulf %123, %127 : vector<2x16xf32>
    %c2_42 = arith.constant 2 : index
    %c0_43 = arith.constant 0 : index
    %129 = vector.load %arg12[%c2_42, %c0_43] : memref<16x16xf32, #tpu.memory_space<vmem>>, vector<2x16xf32>
    tpu.vector_store %arg12[%c2_42, %c0_43], %101 {strides = array<i32>} : memref<16x16xf32, #tpu.memory_space<vmem>>, vector<2x16xf32>,
    %c12_44 = arith.constant 12 : index
    %c0_45 = arith.constant 0 : index
    %130 = vector.load %arg13[%c12_44, %c0_45] : memref<16x16xf32, #tpu.memory_space<vmem>>, vector<2x16xf32>
    tpu.vector_store %arg13[%c12_44, %c0_45], %128 {strides = array<i32>} : memref<16x16xf32, #tpu.memory_space<vmem>>, vector<2x16xf32>,
    %c0_46 = arith.constant 0 : index
    %c0_47 = arith.constant 0 : index
    %131 = vector.load %arg3[%c0_46, %c0_47] : memref<16x128xf32, #tpu.memory_space<vmem>>, vector<16x64xf32>
    %cst_48 = arith.constant dense<0.000000e+00> : vector<2x64xf32>
    %132 = tpu.matmul %101, %131, %cst_48 {dimension_numbers = #tpu.dot_dimension_numbers<[1], [0], [0], [1], [0, 0, 1, 1], [], []>} : vector<2x16xf32>, vector<16x64xf32>, vector<2x64xf32> -> vector<2x64xf32>
    %c0_49 = arith.constant 0 : index
    %c64_50 = arith.constant 64 : index
    %133 = vector.load %arg3[%c0_49, %c64_50] : memref<16x128xf32, #tpu.memory_space<vmem>>, vector<16x64xf32>
    %cst_51 = arith.constant dense<0.000000e+00> : vector<2x64xf32>
    %134 = tpu.matmul %128, %133, %cst_51 {dimension_numbers = #tpu.dot_dimension_numbers<[1], [0], [0], [1], [0, 0, 1, 1], [], []>} : vector<2x16xf32>, vector<16x64xf32>, vector<2x64xf32> -> vector<2x64xf32>
    %c4 = arith.constant 4 : index
    %c0_52 = arith.constant 0 : index
    %135 = vector.load %arg11[%c4, %c0_52] : memref<16x128xf32, #tpu.memory_space<vmem>>, vector<2x64xf32>
    %136 = arith.addf %135, %132 : vector<2x64xf32>
    %137 = vector.extract_strided_slice %136 {offsets = [0, 0], sizes = [2, 16], strides = [1, 1]} : vector<2x64xf32> to vector<2x16xf32>
    %138 = arith.negf %137 : vector<2x16xf32>
    %139 = math.exp %138 : vector<2x16xf32>
    %cst_53 = arith.constant 1.000000e+00 : f32
    %140 = vector.broadcast %cst_53 : f32 to vector<2x16xf32>
    %141 = arith.addf %140, %139 : vector<2x16xf32>
    %142 = arith.divf %140, %141 : vector<2x16xf32>
    %143 = vector.extract_strided_slice %136 {offsets = [0, 16], sizes = [2, 16], strides = [1, 1]} : vector<2x64xf32> to vector<2x16xf32>
    %144 = arith.negf %143 : vector<2x16xf32>
    %145 = math.exp %144 : vector<2x16xf32>
    %cst_54 = arith.constant 1.000000e+00 : f32
    %146 = vector.broadcast %cst_54 : f32 to vector<2x16xf32>
    %147 = arith.addf %146, %145 : vector<2x16xf32>
    %148 = arith.divf %146, %147 : vector<2x16xf32>
    %149 = vector.extract_strided_slice %136 {offsets = [0, 32], sizes = [2, 16], strides = [1, 1]} : vector<2x64xf32> to vector<2x16xf32>
    %150 = math.tanh %149 : vector<2x16xf32>
    %151 = vector.extract_strided_slice %136 {offsets = [0, 48], sizes = [2, 16], strides = [1, 1]} : vector<2x64xf32> to vector<2x16xf32>
    %152 = arith.negf %151 : vector<2x16xf32>
    %153 = math.exp %152 : vector<2x16xf32>
    %cst_55 = arith.constant 1.000000e+00 : f32
    %154 = vector.broadcast %cst_55 : f32 to vector<2x16xf32>
    %155 = arith.addf %154, %153 : vector<2x16xf32>
    %156 = arith.divf %154, %155 : vector<2x16xf32>
    %157 = arith.mulf %148, %99 : vector<2x16xf32>
    %158 = arith.mulf %142, %150 : vector<2x16xf32>
    %159 = arith.addf %157, %158 : vector<2x16xf32>
    %160 = math.tanh %159 : vector<2x16xf32>
    %161 = arith.mulf %156, %160 : vector<2x16xf32>
    %c10 = arith.constant 10 : index
    %c64_56 = arith.constant 64 : index
    %162 = vector.load %arg11[%c10, %c64_56] : memref<16x128xf32, #tpu.memory_space<vmem>>, vector<2x64xf32>
    %163 = arith.addf %162, %134 : vector<2x64xf32>
    %164 = vector.extract_strided_slice %163 {offsets = [0, 0], sizes = [2, 16], strides = [1, 1]} : vector<2x64xf32> to vector<2x16xf32>
    %165 = arith.negf %164 : vector<2x16xf32>
    %166 = math.exp %165 : vector<2x16xf32>
    %cst_57 = arith.constant 1.000000e+00 : f32
    %167 = vector.broadcast %cst_57 : f32 to vector<2x16xf32>
    %168 = arith.addf %167, %166 : vector<2x16xf32>
    %169 = arith.divf %167, %168 : vector<2x16xf32>
    %170 = vector.extract_strided_slice %163 {offsets = [0, 16], sizes = [2, 16], strides = [1, 1]} : vector<2x64xf32> to vector<2x16xf32>
    %171 = arith.negf %170 : vector<2x16xf32>
    %172 = math.exp %171 : vector<2x16xf32>
    %cst_58 = arith.constant 1.000000e+00 : f32
    %173 = vector.broadcast %cst_58 : f32 to vector<2x16xf32>
    %174 = arith.addf %173, %172 : vector<2x16xf32>
    %175 = arith.divf %173, %174 : vector<2x16xf32>
    %176 = vector.extract_strided_slice %163 {offsets = [0, 32], sizes = [2, 16], strides = [1, 1]} : vector<2x64xf32> to vector<2x16xf32>
    %177 = math.tanh %176 : vector<2x16xf32>
    %178 = vector.extract_strided_slice %163 {offsets = [0, 48], sizes = [2, 16], strides = [1, 1]} : vector<2x64xf32> to vector<2x16xf32>
    %179 = arith.negf %178 : vector<2x16xf32>
    %180 = math.exp %179 : vector<2x16xf32>
    %cst_59 = arith.constant 1.000000e+00 : f32
    %181 = vector.broadcast %cst_59 : f32 to vector<2x16xf32>
    %182 = arith.addf %181, %180 : vector<2x16xf32>
    %183 = arith.divf %181, %182 : vector<2x16xf32>
    %184 = arith.mulf %175, %126 : vector<2x16xf32>
    %185 = arith.mulf %169, %177 : vector<2x16xf32>
    %186 = arith.addf %184, %185 : vector<2x16xf32>
    %187 = math.tanh %186 : vector<2x16xf32>
    %188 = arith.mulf %183, %187 : vector<2x16xf32>
    %c4_60 = arith.constant 4 : index
    %c0_61 = arith.constant 0 : index
    %189 = vector.load %arg12[%c4_60, %c0_61] : memref<16x16xf32, #tpu.memory_space<vmem>>, vector<2x16xf32>
    tpu.vector_store %arg12[%c4_60, %c0_61], %161 {strides = array<i32>} : memref<16x16xf32, #tpu.memory_space<vmem>>, vector<2x16xf32>,
    %c10_62 = arith.constant 10 : index
    %c0_63 = arith.constant 0 : index
    %190 = vector.load %arg13[%c10_62, %c0_63] : memref<16x16xf32, #tpu.memory_space<vmem>>, vector<2x16xf32>
    tpu.vector_store %arg13[%c10_62, %c0_63], %188 {strides = array<i32>} : memref<16x16xf32, #tpu.memory_space<vmem>>, vector<2x16xf32>,
    %c0_64 = arith.constant 0 : index
    %c0_65 = arith.constant 0 : index
    %191 = vector.load %arg3[%c0_64, %c0_65] : memref<16x128xf32, #tpu.memory_space<vmem>>, vector<16x64xf32>
    %cst_66 = arith.constant dense<0.000000e+00> : vector<2x64xf32>
    %192 = tpu.matmul %161, %191, %cst_66 {dimension_numbers = #tpu.dot_dimension_numbers<[1], [0], [0], [1], [0, 0, 1, 1], [], []>} : vector<2x16xf32>, vector<16x64xf32>, vector<2x64xf32> -> vector<2x64xf32>
    %c0_67 = arith.constant 0 : index
    %c64_68 = arith.constant 64 : index
    %193 = vector.load %arg3[%c0_67, %c64_68] : memref<16x128xf32, #tpu.memory_space<vmem>>, vector<16x64xf32>
    %cst_69 = arith.constant dense<0.000000e+00> : vector<2x64xf32>
    %194 = tpu.matmul %188, %193, %cst_69 {dimension_numbers = #tpu.dot_dimension_numbers<[1], [0], [0], [1], [0, 0, 1, 1], [], []>} : vector<2x16xf32>, vector<16x64xf32>, vector<2x64xf32> -> vector<2x64xf32>
    %c6 = arith.constant 6 : index
    %c0_70 = arith.constant 0 : index
    %195 = vector.load %arg11[%c6, %c0_70] : memref<16x128xf32, #tpu.memory_space<vmem>>, vector<2x64xf32>
    %196 = arith.addf %195, %192 : vector<2x64xf32>
    %197 = vector.extract_strided_slice %196 {offsets = [0, 0], sizes = [2, 16], strides = [1, 1]} : vector<2x64xf32> to vector<2x16xf32>
    %198 = arith.negf %197 : vector<2x16xf32>
    %199 = math.exp %198 : vector<2x16xf32>
    %cst_71 = arith.constant 1.000000e+00 : f32
    %200 = vector.broadcast %cst_71 : f32 to vector<2x16xf32>
    %201 = arith.addf %200, %199 : vector<2x16xf32>
    %202 = arith.divf %200, %201 : vector<2x16xf32>
    %203 = vector.extract_strided_slice %196 {offsets = [0, 16], sizes = [2, 16], strides = [1, 1]} : vector<2x64xf32> to vector<2x16xf32>
    %204 = arith.negf %203 : vector<2x16xf32>
    %205 = math.exp %204 : vector<2x16xf32>
    %cst_72 = arith.constant 1.000000e+00 : f32
    %206 = vector.broadcast %cst_72 : f32 to vector<2x16xf32>
    %207 = arith.addf %206, %205 : vector<2x16xf32>
    %208 = arith.divf %206, %207 : vector<2x16xf32>
    %209 = vector.extract_strided_slice %196 {offsets = [0, 32], sizes = [2, 16], strides = [1, 1]} : vector<2x64xf32> to vector<2x16xf32>
    %210 = math.tanh %209 : vector<2x16xf32>
    %211 = vector.extract_strided_slice %196 {offsets = [0, 48], sizes = [2, 16], strides = [1, 1]} : vector<2x64xf32> to vector<2x16xf32>
    %212 = arith.negf %211 : vector<2x16xf32>
    %213 = math.exp %212 : vector<2x16xf32>
    %cst_73 = arith.constant 1.000000e+00 : f32
    %214 = vector.broadcast %cst_73 : f32 to vector<2x16xf32>
    %215 = arith.addf %214, %213 : vector<2x16xf32>
    %216 = arith.divf %214, %215 : vector<2x16xf32>
    %217 = arith.mulf %208, %159 : vector<2x16xf32>
    %218 = arith.mulf %202, %210 : vector<2x16xf32>
    %219 = arith.addf %217, %218 : vector<2x16xf32>
    %220 = math.tanh %219 : vector<2x16xf32>
    %221 = arith.mulf %216, %220 : vector<2x16xf32>
    %c8 = arith.constant 8 : index
    %c64_74 = arith.constant 64 : index
    %222 = vector.load %arg11[%c8, %c64_74] : memref<16x128xf32, #tpu.memory_space<vmem>>, vector<2x64xf32>
    %223 = arith.addf %222, %194 : vector<2x64xf32>
    %224 = vector.extract_strided_slice %223 {offsets = [0, 0], sizes = [2, 16], strides = [1, 1]} : vector<2x64xf32> to vector<2x16xf32>
    %225 = arith.negf %224 : vector<2x16xf32>
    %226 = math.exp %225 : vector<2x16xf32>
    %cst_75 = arith.constant 1.000000e+00 : f32
    %227 = vector.broadcast %cst_75 : f32 to vector<2x16xf32>
    %228 = arith.addf %227, %226 : vector<2x16xf32>
    %229 = arith.divf %227, %228 : vector<2x16xf32>
    %230 = vector.extract_strided_slice %223 {offsets = [0, 16], sizes = [2, 16], strides = [1, 1]} : vector<2x64xf32> to vector<2x16xf32>
    %231 = arith.negf %230 : vector<2x16xf32>
    %232 = math.exp %231 : vector<2x16xf32>
    %cst_76 = arith.constant 1.000000e+00 : f32
    %233 = vector.broadcast %cst_76 : f32 to vector<2x16xf32>
    %234 = arith.addf %233, %232 : vector<2x16xf32>
    %235 = arith.divf %233, %234 : vector<2x16xf32>
    %236 = vector.extract_strided_slice %223 {offsets = [0, 32], sizes = [2, 16], strides = [1, 1]} : vector<2x64xf32> to vector<2x16xf32>
    %237 = math.tanh %236 : vector<2x16xf32>
    %238 = vector.extract_strided_slice %223 {offsets = [0, 48], sizes = [2, 16], strides = [1, 1]} : vector<2x64xf32> to vector<2x16xf32>
    %239 = arith.negf %238 : vector<2x16xf32>
    %240 = math.exp %239 : vector<2x16xf32>
    %cst_77 = arith.constant 1.000000e+00 : f32
    %241 = vector.broadcast %cst_77 : f32 to vector<2x16xf32>
    %242 = arith.addf %241, %240 : vector<2x16xf32>
    %243 = arith.divf %241, %242 : vector<2x16xf32>
    %244 = arith.mulf %235, %186 : vector<2x16xf32>
    %245 = arith.mulf %229, %237 : vector<2x16xf32>
    %246 = arith.addf %244, %245 : vector<2x16xf32>
    %247 = math.tanh %246 : vector<2x16xf32>
    %248 = arith.mulf %243, %247 : vector<2x16xf32>
    %c6_78 = arith.constant 6 : index
    %c0_79 = arith.constant 0 : index
    %249 = vector.load %arg12[%c6_78, %c0_79] : memref<16x16xf32, #tpu.memory_space<vmem>>, vector<2x16xf32>
    tpu.vector_store %arg12[%c6_78, %c0_79], %221 {strides = array<i32>} : memref<16x16xf32, #tpu.memory_space<vmem>>, vector<2x16xf32>,
    %c8_80 = arith.constant 8 : index
    %c0_81 = arith.constant 0 : index
    %250 = vector.load %arg13[%c8_80, %c0_81] : memref<16x16xf32, #tpu.memory_space<vmem>>, vector<2x16xf32>
    tpu.vector_store %arg13[%c8_80, %c0_81], %248 {strides = array<i32>} : memref<16x16xf32, #tpu.memory_space<vmem>>, vector<2x16xf32>,
    %c0_82 = arith.constant 0 : index
    %c0_83 = arith.constant 0 : index
    %251 = vector.load %arg3[%c0_82, %c0_83] : memref<16x128xf32, #tpu.memory_space<vmem>>, vector<16x64xf32>
    %cst_84 = arith.constant dense<0.000000e+00> : vector<2x64xf32>
    %252 = tpu.matmul %221, %251, %cst_84 {dimension_numbers = #tpu.dot_dimension_numbers<[1], [0], [0], [1], [0, 0, 1, 1], [], []>} : vector<2x16xf32>, vector<16x64xf32>, vector<2x64xf32> -> vector<2x64xf32>
    %c0_85 = arith.constant 0 : index
    %c64_86 = arith.constant 64 : index
    %253 = vector.load %arg3[%c0_85, %c64_86] : memref<16x128xf32, #tpu.memory_space<vmem>>, vector<16x64xf32>
    %cst_87 = arith.constant dense<0.000000e+00> : vector<2x64xf32>
    %254 = tpu.matmul %248, %253, %cst_87 {dimension_numbers = #tpu.dot_dimension_numbers<[1], [0], [0], [1], [0, 0, 1, 1], [], []>} : vector<2x16xf32>, vector<16x64xf32>, vector<2x64xf32> -> vector<2x64xf32>
    %c8_88 = arith.constant 8 : index
    %c0_89 = arith.constant 0 : index
    %255 = vector.load %arg11[%c8_88, %c0_89] : memref<16x128xf32, #tpu.memory_space<vmem>>, vector<2x64xf32>
    %256 = arith.addf %255, %252 : vector<2x64xf32>
    %257 = vector.extract_strided_slice %256 {offsets = [0, 0], sizes = [2, 16], strides = [1, 1]} : vector<2x64xf32> to vector<2x16xf32>
    %258 = arith.negf %257 : vector<2x16xf32>
    %259 = math.exp %258 : vector<2x16xf32>
    %cst_90 = arith.constant 1.000000e+00 : f32
    %260 = vector.broadcast %cst_90 : f32 to vector<2x16xf32>
    %261 = arith.addf %260, %259 : vector<2x16xf32>
    %262 = arith.divf %260, %261 : vector<2x16xf32>
    %263 = vector.extract_strided_slice %256 {offsets = [0, 16], sizes = [2, 16], strides = [1, 1]} : vector<2x64xf32> to vector<2x16xf32>
    %264 = arith.negf %263 : vector<2x16xf32>
    %265 = math.exp %264 : vector<2x16xf32>
    %cst_91 = arith.constant 1.000000e+00 : f32
    %266 = vector.broadcast %cst_91 : f32 to vector<2x16xf32>
    %267 = arith.addf %266, %265 : vector<2x16xf32>
    %268 = arith.divf %266, %267 : vector<2x16xf32>
    %269 = vector.extract_strided_slice %256 {offsets = [0, 32], sizes = [2, 16], strides = [1, 1]} : vector<2x64xf32> to vector<2x16xf32>
    %270 = math.tanh %269 : vector<2x16xf32>
    %271 = vector.extract_strided_slice %256 {offsets = [0, 48], sizes = [2, 16], strides = [1, 1]} : vector<2x64xf32> to vector<2x16xf32>
    %272 = arith.negf %271 : vector<2x16xf32>
    %273 = math.exp %272 : vector<2x16xf32>
    %cst_92 = arith.constant 1.000000e+00 : f32
    %274 = vector.broadcast %cst_92 : f32 to vector<2x16xf32>
    %275 = arith.addf %274, %273 : vector<2x16xf32>
    %276 = arith.divf %274, %275 : vector<2x16xf32>
    %277 = arith.mulf %268, %219 : vector<2x16xf32>
    %278 = arith.mulf %262, %270 : vector<2x16xf32>
    %279 = arith.addf %277, %278 : vector<2x16xf32>
    %280 = math.tanh %279 : vector<2x16xf32>
    %281 = arith.mulf %276, %280 : vector<2x16xf32>
    %c6_93 = arith.constant 6 : index
    %c64_94 = arith.constant 64 : index
    %282 = vector.load %arg11[%c6_93, %c64_94] : memref<16x128xf32, #tpu.memory_space<vmem>>, vector<2x64xf32>
    %283 = arith.addf %282, %254 : vector<2x64xf32>
    %284 = vector.extract_strided_slice %283 {offsets = [0, 0], sizes = [2, 16], strides = [1, 1]} : vector<2x64xf32> to vector<2x16xf32>
    %285 = arith.negf %284 : vector<2x16xf32>
    %286 = math.exp %285 : vector<2x16xf32>
    %cst_95 = arith.constant 1.000000e+00 : f32
    %287 = vector.broadcast %cst_95 : f32 to vector<2x16xf32>
    %288 = arith.addf %287, %286 : vector<2x16xf32>
    %289 = arith.divf %287, %288 : vector<2x16xf32>
    %290 = vector.extract_strided_slice %283 {offsets = [0, 16], sizes = [2, 16], strides = [1, 1]} : vector<2x64xf32> to vector<2x16xf32>
    %291 = arith.negf %290 : vector<2x16xf32>
    %292 = math.exp %291 : vector<2x16xf32>
    %cst_96 = arith.constant 1.000000e+00 : f32
    %293 = vector.broadcast %cst_96 : f32 to vector<2x16xf32>
    %294 = arith.addf %293, %292 : vector<2x16xf32>
    %295 = arith.divf %293, %294 : vector<2x16xf32>
    %296 = vector.extract_strided_slice %283 {offsets = [0, 32], sizes = [2, 16], strides = [1, 1]} : vector<2x64xf32> to vector<2x16xf32>
    %297 = math.tanh %296 : vector<2x16xf32>
    %298 = vector.extract_strided_slice %283 {offsets = [0, 48], sizes = [2, 16], strides = [1, 1]} : vector<2x64xf32> to vector<2x16xf32>
    %299 = arith.negf %298 : vector<2x16xf32>
    %300 = math.exp %299 : vector<2x16xf32>
    %cst_97 = arith.constant 1.000000e+00 : f32
    %301 = vector.broadcast %cst_97 : f32 to vector<2x16xf32>
    %302 = arith.addf %301, %300 : vector<2x16xf32>
    %303 = arith.divf %301, %302 : vector<2x16xf32>
    %304 = arith.mulf %295, %246 : vector<2x16xf32>
    %305 = arith.mulf %289, %297 : vector<2x16xf32>
    %306 = arith.addf %304, %305 : vector<2x16xf32>
    %307 = math.tanh %306 : vector<2x16xf32>
    %308 = arith.mulf %303, %307 : vector<2x16xf32>
    %c8_98 = arith.constant 8 : index
    %c0_99 = arith.constant 0 : index
    %309 = vector.load %arg12[%c8_98, %c0_99] : memref<16x16xf32, #tpu.memory_space<vmem>>, vector<2x16xf32>
    tpu.vector_store %arg12[%c8_98, %c0_99], %281 {strides = array<i32>} : memref<16x16xf32, #tpu.memory_space<vmem>>, vector<2x16xf32>,
    %c6_100 = arith.constant 6 : index
    %c0_101 = arith.constant 0 : index
    %310 = vector.load %arg13[%c6_100, %c0_101] : memref<16x16xf32, #tpu.memory_space<vmem>>, vector<2x16xf32>
    tpu.vector_store %arg13[%c6_100, %c0_101], %308 {strides = array<i32>} : memref<16x16xf32, #tpu.memory_space<vmem>>, vector<2x16xf32>,
    %c0_102 = arith.constant 0 : index
    %c0_103 = arith.constant 0 : index
    %311 = vector.load %arg3[%c0_102, %c0_103] : memref<16x128xf32, #tpu.memory_space<vmem>>, vector<16x64xf32>
    %cst_104 = arith.constant dense<0.000000e+00> : vector<2x64xf32>
    %312 = tpu.matmul %281, %311, %cst_104 {dimension_numbers = #tpu.dot_dimension_numbers<[1], [0], [0], [1], [0, 0, 1, 1], [], []>} : vector<2x16xf32>, vector<16x64xf32>, vector<2x64xf32> -> vector<2x64xf32>
    %c0_105 = arith.constant 0 : index
    %c64_106 = arith.constant 64 : index
    %313 = vector.load %arg3[%c0_105, %c64_106] : memref<16x128xf32, #tpu.memory_space<vmem>>, vector<16x64xf32>
    %cst_107 = arith.constant dense<0.000000e+00> : vector<2x64xf32>
    %314 = tpu.matmul %308, %313, %cst_107 {dimension_numbers = #tpu.dot_dimension_numbers<[1], [0], [0], [1], [0, 0, 1, 1], [], []>} : vector<2x16xf32>, vector<16x64xf32>, vector<2x64xf32> -> vector<2x64xf32>
    %c10_108 = arith.constant 10 : index
    %c0_109 = arith.constant 0 : index
    %315 = vector.load %arg11[%c10_108, %c0_109] : memref<16x128xf32, #tpu.memory_space<vmem>>, vector<2x64xf32>
    %316 = arith.addf %315, %312 : vector<2x64xf32>
    %317 = vector.extract_strided_slice %316 {offsets = [0, 0], sizes = [2, 16], strides = [1, 1]} : vector<2x64xf32> to vector<2x16xf32>
    %318 = arith.negf %317 : vector<2x16xf32>
    %319 = math.exp %318 : vector<2x16xf32>
    %cst_110 = arith.constant 1.000000e+00 : f32
    %320 = vector.broadcast %cst_110 : f32 to vector<2x16xf32>
    %321 = arith.addf %320, %319 : vector<2x16xf32>
    %322 = arith.divf %320, %321 : vector<2x16xf32>
    %323 = vector.extract_strided_slice %316 {offsets = [0, 16], sizes = [2, 16], strides = [1, 1]} : vector<2x64xf32> to vector<2x16xf32>
    %324 = arith.negf %323 : vector<2x16xf32>
    %325 = math.exp %324 : vector<2x16xf32>
    %cst_111 = arith.constant 1.000000e+00 : f32
    %326 = vector.broadcast %cst_111 : f32 to vector<2x16xf32>
    %327 = arith.addf %326, %325 : vector<2x16xf32>
    %328 = arith.divf %326, %327 : vector<2x16xf32>
    %329 = vector.extract_strided_slice %316 {offsets = [0, 32], sizes = [2, 16], strides = [1, 1]} : vector<2x64xf32> to vector<2x16xf32>
    %330 = math.tanh %329 : vector<2x16xf32>
    %331 = vector.extract_strided_slice %316 {offsets = [0, 48], sizes = [2, 16], strides = [1, 1]} : vector<2x64xf32> to vector<2x16xf32>
    %332 = arith.negf %331 : vector<2x16xf32>
    %333 = math.exp %332 : vector<2x16xf32>
    %cst_112 = arith.constant 1.000000e+00 : f32
    %334 = vector.broadcast %cst_112 : f32 to vector<2x16xf32>
    %335 = arith.addf %334, %333 : vector<2x16xf32>
    %336 = arith.divf %334, %335 : vector<2x16xf32>
    %337 = arith.mulf %328, %279 : vector<2x16xf32>
    %338 = arith.mulf %322, %330 : vector<2x16xf32>
    %339 = arith.addf %337, %338 : vector<2x16xf32>
    %340 = math.tanh %339 : vector<2x16xf32>
    %341 = arith.mulf %336, %340 : vector<2x16xf32>
    %c4_113 = arith.constant 4 : index
    %c64_114 = arith.constant 64 : index
    %342 = vector.load %arg11[%c4_113, %c64_114] : memref<16x128xf32, #tpu.memory_space<vmem>>, vector<2x64xf32>
    %343 = arith.addf %342, %314 : vector<2x64xf32>
    %344 = vector.extract_strided_slice %343 {offsets = [0, 0], sizes = [2, 16], strides = [1, 1]} : vector<2x64xf32> to vector<2x16xf32>
    %345 = arith.negf %344 : vector<2x16xf32>
    %346 = math.exp %345 : vector<2x16xf32>
    %cst_115 = arith.constant 1.000000e+00 : f32
    %347 = vector.broadcast %cst_115 : f32 to vector<2x16xf32>
    %348 = arith.addf %347, %346 : vector<2x16xf32>
    %349 = arith.divf %347, %348 : vector<2x16xf32>
    %350 = vector.extract_strided_slice %343 {offsets = [0, 16], sizes = [2, 16], strides = [1, 1]} : vector<2x64xf32> to vector<2x16xf32>
    %351 = arith.negf %350 : vector<2x16xf32>
    %352 = math.exp %351 : vector<2x16xf32>
    %cst_116 = arith.constant 1.000000e+00 : f32
    %353 = vector.broadcast %cst_116 : f32 to vector<2x16xf32>
    %354 = arith.addf %353, %352 : vector<2x16xf32>
    %355 = arith.divf %353, %354 : vector<2x16xf32>
    %356 = vector.extract_strided_slice %343 {offsets = [0, 32], sizes = [2, 16], strides = [1, 1]} : vector<2x64xf32> to vector<2x16xf32>
    %357 = math.tanh %356 : vector<2x16xf32>
    %358 = vector.extract_strided_slice %343 {offsets = [0, 48], sizes = [2, 16], strides = [1, 1]} : vector<2x64xf32> to vector<2x16xf32>
    %359 = arith.negf %358 : vector<2x16xf32>
    %360 = math.exp %359 : vector<2x16xf32>
    %cst_117 = arith.constant 1.000000e+00 : f32
    %361 = vector.broadcast %cst_117 : f32 to vector<2x16xf32>
    %362 = arith.addf %361, %360 : vector<2x16xf32>
    %363 = arith.divf %361, %362 : vector<2x16xf32>
    %364 = arith.mulf %355, %306 : vector<2x16xf32>
    %365 = arith.mulf %349, %357 : vector<2x16xf32>
    %366 = arith.addf %364, %365 : vector<2x16xf32>
    %367 = math.tanh %366 : vector<2x16xf32>
    %368 = arith.mulf %363, %367 : vector<2x16xf32>
    %c10_118 = arith.constant 10 : index
    %c0_119 = arith.constant 0 : index
    %369 = vector.load %arg12[%c10_118, %c0_119] : memref<16x16xf32, #tpu.memory_space<vmem>>, vector<2x16xf32>
    tpu.vector_store %arg12[%c10_118, %c0_119], %341 {strides = array<i32>} : memref<16x16xf32, #tpu.memory_space<vmem>>, vector<2x16xf32>,
    %c4_120 = arith.constant 4 : index
    %c0_121 = arith.constant 0 : index
    %370 = vector.load %arg13[%c4_120, %c0_121] : memref<16x16xf32, #tpu.memory_space<vmem>>, vector<2x16xf32>
    tpu.vector_store %arg13[%c4_120, %c0_121], %368 {strides = array<i32>} : memref<16x16xf32, #tpu.memory_space<vmem>>, vector<2x16xf32>,
    %c0_122 = arith.constant 0 : index
    %c0_123 = arith.constant 0 : index
    %371 = vector.load %arg3[%c0_122, %c0_123] : memref<16x128xf32, #tpu.memory_space<vmem>>, vector<16x64xf32>
    %cst_124 = arith.constant dense<0.000000e+00> : vector<2x64xf32>
    %372 = tpu.matmul %341, %371, %cst_124 {dimension_numbers = #tpu.dot_dimension_numbers<[1], [0], [0], [1], [0, 0, 1, 1], [], []>} : vector<2x16xf32>, vector<16x64xf32>, vector<2x64xf32> -> vector<2x64xf32>
    %c0_125 = arith.constant 0 : index
    %c64_126 = arith.constant 64 : index
    %373 = vector.load %arg3[%c0_125, %c64_126] : memref<16x128xf32, #tpu.memory_space<vmem>>, vector<16x64xf32>
    %cst_127 = arith.constant dense<0.000000e+00> : vector<2x64xf32>
    %374 = tpu.matmul %368, %373, %cst_127 {dimension_numbers = #tpu.dot_dimension_numbers<[1], [0], [0], [1], [0, 0, 1, 1], [], []>} : vector<2x16xf32>, vector<16x64xf32>, vector<2x64xf32> -> vector<2x64xf32>
    %c12_128 = arith.constant 12 : index
    %c0_129 = arith.constant 0 : index
    %375 = vector.load %arg11[%c12_128, %c0_129] : memref<16x128xf32, #tpu.memory_space<vmem>>, vector<2x64xf32>
    %376 = arith.addf %375, %372 : vector<2x64xf32>
    %377 = vector.extract_strided_slice %376 {offsets = [0, 0], sizes = [2, 16], strides = [1, 1]} : vector<2x64xf32> to vector<2x16xf32>
    %378 = arith.negf %377 : vector<2x16xf32>
    %379 = math.exp %378 : vector<2x16xf32>
    %cst_130 = arith.constant 1.000000e+00 : f32
    %380 = vector.broadcast %cst_130 : f32 to vector<2x16xf32>
    %381 = arith.addf %380, %379 : vector<2x16xf32>
    %382 = arith.divf %380, %381 : vector<2x16xf32>
    %383 = vector.extract_strided_slice %376 {offsets = [0, 16], sizes = [2, 16], strides = [1, 1]} : vector<2x64xf32> to vector<2x16xf32>
    %384 = arith.negf %383 : vector<2x16xf32>
    %385 = math.exp %384 : vector<2x16xf32>
    %cst_131 = arith.constant 1.000000e+00 : f32
    %386 = vector.broadcast %cst_131 : f32 to vector<2x16xf32>
    %387 = arith.addf %386, %385 : vector<2x16xf32>
    %388 = arith.divf %386, %387 : vector<2x16xf32>
    %389 = vector.extract_strided_slice %376 {offsets = [0, 32], sizes = [2, 16], strides = [1, 1]} : vector<2x64xf32> to vector<2x16xf32>
    %390 = math.tanh %389 : vector<2x16xf32>
    %391 = vector.extract_strided_slice %376 {offsets = [0, 48], sizes = [2, 16], strides = [1, 1]} : vector<2x64xf32> to vector<2x16xf32>
    %392 = arith.negf %391 : vector<2x16xf32>
    %393 = math.exp %392 : vector<2x16xf32>
    %cst_132 = arith.constant 1.000000e+00 : f32
    %394 = vector.broadcast %cst_132 : f32 to vector<2x16xf32>
    %395 = arith.addf %394, %393 : vector<2x16xf32>
    %396 = arith.divf %394, %395 : vector<2x16xf32>
    %397 = arith.mulf %388, %339 : vector<2x16xf32>
    %398 = arith.mulf %382, %390 : vector<2x16xf32>
    %399 = arith.addf %397, %398 : vector<2x16xf32>
    %400 = math.tanh %399 : vector<2x16xf32>
    %401 = arith.mulf %396, %400 : vector<2x16xf32>
    %c2_133 = arith.constant 2 : index
    %c64_134 = arith.constant 64 : index
    %402 = vector.load %arg11[%c2_133, %c64_134] : memref<16x128xf32, #tpu.memory_space<vmem>>, vector<2x64xf32>
    %403 = arith.addf %402, %374 : vector<2x64xf32>
    %404 = vector.extract_strided_slice %403 {offsets = [0, 0], sizes = [2, 16], strides = [1, 1]} : vector<2x64xf32> to vector<2x16xf32>
    %405 = arith.negf %404 : vector<2x16xf32>
    %406 = math.exp %405 : vector<2x16xf32>
    %cst_135 = arith.constant 1.000000e+00 : f32
    %407 = vector.broadcast %cst_135 : f32 to vector<2x16xf32>
    %408 = arith.addf %407, %406 : vector<2x16xf32>
    %409 = arith.divf %407, %408 : vector<2x16xf32>
    %410 = vector.extract_strided_slice %403 {offsets = [0, 16], sizes = [2, 16], strides = [1, 1]} : vector<2x64xf32> to vector<2x16xf32>
    %411 = arith.negf %410 : vector<2x16xf32>
    %412 = math.exp %411 : vector<2x16xf32>
    %cst_136 = arith.constant 1.000000e+00 : f32
    %413 = vector.broadcast %cst_136 : f32 to vector<2x16xf32>
    %414 = arith.addf %413, %412 : vector<2x16xf32>
    %415 = arith.divf %413, %414 : vector<2x16xf32>
    %416 = vector.extract_strided_slice %403 {offsets = [0, 32], sizes = [2, 16], strides = [1, 1]} : vector<2x64xf32> to vector<2x16xf32>
    %417 = math.tanh %416 : vector<2x16xf32>
    %418 = vector.extract_strided_slice %403 {offsets = [0, 48], sizes = [2, 16], strides = [1, 1]} : vector<2x64xf32> to vector<2x16xf32>
    %419 = arith.negf %418 : vector<2x16xf32>
    %420 = math.exp %419 : vector<2x16xf32>
    %cst_137 = arith.constant 1.000000e+00 : f32
    %421 = vector.broadcast %cst_137 : f32 to vector<2x16xf32>
    %422 = arith.addf %421, %420 : vector<2x16xf32>
    %423 = arith.divf %421, %422 : vector<2x16xf32>
    %424 = arith.mulf %415, %366 : vector<2x16xf32>
    %425 = arith.mulf %409, %417 : vector<2x16xf32>
    %426 = arith.addf %424, %425 : vector<2x16xf32>
    %427 = math.tanh %426 : vector<2x16xf32>
    %428 = arith.mulf %423, %427 : vector<2x16xf32>
    %c12_138 = arith.constant 12 : index
    %c0_139 = arith.constant 0 : index
    %429 = vector.load %arg12[%c12_138, %c0_139] : memref<16x16xf32, #tpu.memory_space<vmem>>, vector<2x16xf32>
    tpu.vector_store %arg12[%c12_138, %c0_139], %401 {strides = array<i32>} : memref<16x16xf32, #tpu.memory_space<vmem>>, vector<2x16xf32>,
    %c2_140 = arith.constant 2 : index
    %c0_141 = arith.constant 0 : index
    %430 = vector.load %arg13[%c2_140, %c0_141] : memref<16x16xf32, #tpu.memory_space<vmem>>, vector<2x16xf32>
    tpu.vector_store %arg13[%c2_140, %c0_141], %428 {strides = array<i32>} : memref<16x16xf32, #tpu.memory_space<vmem>>, vector<2x16xf32>,
    %c0_142 = arith.constant 0 : index
    %c0_143 = arith.constant 0 : index
    %431 = vector.load %arg3[%c0_142, %c0_143] : memref<16x128xf32, #tpu.memory_space<vmem>>, vector<16x64xf32>
    %cst_144 = arith.constant dense<0.000000e+00> : vector<2x64xf32>
    %432 = tpu.matmul %401, %431, %cst_144 {dimension_numbers = #tpu.dot_dimension_numbers<[1], [0], [0], [1], [0, 0, 1, 1], [], []>} : vector<2x16xf32>, vector<16x64xf32>, vector<2x64xf32> -> vector<2x64xf32>
    %c0_145 = arith.constant 0 : index
    %c64_146 = arith.constant 64 : index
    %433 = vector.load %arg3[%c0_145, %c64_146] : memref<16x128xf32, #tpu.memory_space<vmem>>, vector<16x64xf32>
    %cst_147 = arith.constant dense<0.000000e+00> : vector<2x64xf32>
    %434 = tpu.matmul %428, %433, %cst_147 {dimension_numbers = #tpu.dot_dimension_numbers<[1], [0], [0], [1], [0, 0, 1, 1], [], []>} : vector<2x16xf32>, vector<16x64xf32>, vector<2x64xf32> -> vector<2x64xf32>
    %c14_148 = arith.constant 14 : index
    %c0_149 = arith.constant 0 : index
    %435 = vector.load %arg11[%c14_148, %c0_149] : memref<16x128xf32, #tpu.memory_space<vmem>>, vector<2x64xf32>
    %436 = arith.addf %435, %432 : vector<2x64xf32>
    %437 = vector.extract_strided_slice %436 {offsets = [0, 0], sizes = [2, 16], strides = [1, 1]} : vector<2x64xf32> to vector<2x16xf32>
    %438 = arith.negf %437 : vector<2x16xf32>
    %439 = math.exp %438 : vector<2x16xf32>
    %cst_150 = arith.constant 1.000000e+00 : f32
    %440 = vector.broadcast %cst_150 : f32 to vector<2x16xf32>
    %441 = arith.addf %440, %439 : vector<2x16xf32>
    %442 = arith.divf %440, %441 : vector<2x16xf32>
    %443 = vector.extract_strided_slice %436 {offsets = [0, 16], sizes = [2, 16], strides = [1, 1]} : vector<2x64xf32> to vector<2x16xf32>
    %444 = arith.negf %443 : vector<2x16xf32>
    %445 = math.exp %444 : vector<2x16xf32>
    %cst_151 = arith.constant 1.000000e+00 : f32
    %446 = vector.broadcast %cst_151 : f32 to vector<2x16xf32>
    %447 = arith.addf %446, %445 : vector<2x16xf32>
    %448 = arith.divf %446, %447 : vector<2x16xf32>
    %449 = vector.extract_strided_slice %436 {offsets = [0, 32], sizes = [2, 16], strides = [1, 1]} : vector<2x64xf32> to vector<2x16xf32>
    %450 = math.tanh %449 : vector<2x16xf32>
    %451 = vector.extract_strided_slice %436 {offsets = [0, 48], sizes = [2, 16], strides = [1, 1]} : vector<2x64xf32> to vector<2x16xf32>
    %452 = arith.negf %451 : vector<2x16xf32>
    %453 = math.exp %452 : vector<2x16xf32>
    %cst_152 = arith.constant 1.000000e+00 : f32
    %454 = vector.broadcast %cst_152 : f32 to vector<2x16xf32>
    %455 = arith.addf %454, %453 : vector<2x16xf32>
    %456 = arith.divf %454, %455 : vector<2x16xf32>
    %457 = arith.mulf %448, %399 : vector<2x16xf32>
    %458 = arith.mulf %442, %450 : vector<2x16xf32>
    %459 = arith.addf %457, %458 : vector<2x16xf32>
    %460 = math.tanh %459 : vector<2x16xf32>
    %461 = arith.mulf %456, %460 : vector<2x16xf32>
    %c0_153 = arith.constant 0 : index
    %c64_154 = arith.constant 64 : index
    %462 = vector.load %arg11[%c0_153, %c64_154] : memref<16x128xf32, #tpu.memory_space<vmem>>, vector<2x64xf32>
    %463 = arith.addf %462, %434 : vector<2x64xf32>
    %464 = vector.extract_strided_slice %463 {offsets = [0, 0], sizes = [2, 16], strides = [1, 1]} : vector<2x64xf32> to vector<2x16xf32>
    %465 = arith.negf %464 : vector<2x16xf32>
    %466 = math.exp %465 : vector<2x16xf32>
    %cst_155 = arith.constant 1.000000e+00 : f32
    %467 = vector.broadcast %cst_155 : f32 to vector<2x16xf32>
    %468 = arith.addf %467, %466 : vector<2x16xf32>
    %469 = arith.divf %467, %468 : vector<2x16xf32>
    %470 = vector.extract_strided_slice %463 {offsets = [0, 16], sizes = [2, 16], strides = [1, 1]} : vector<2x64xf32> to vector<2x16xf32>
    %471 = arith.negf %470 : vector<2x16xf32>
    %472 = math.exp %471 : vector<2x16xf32>
    %cst_156 = arith.constant 1.000000e+00 : f32
    %473 = vector.broadcast %cst_156 : f32 to vector<2x16xf32>
    %474 = arith.addf %473, %472 : vector<2x16xf32>
    %475 = arith.divf %473, %474 : vector<2x16xf32>
    %476 = vector.extract_strided_slice %463 {offsets = [0, 32], sizes = [2, 16], strides = [1, 1]} : vector<2x64xf32> to vector<2x16xf32>
    %477 = math.tanh %476 : vector<2x16xf32>
    %478 = vector.extract_strided_slice %463 {offsets = [0, 48], sizes = [2, 16], strides = [1, 1]} : vector<2x64xf32> to vector<2x16xf32>
    %479 = arith.negf %478 : vector<2x16xf32>
    %480 = math.exp %479 : vector<2x16xf32>
    %cst_157 = arith.constant 1.000000e+00 : f32
    %481 = vector.broadcast %cst_157 : f32 to vector<2x16xf32>
    %482 = arith.addf %481, %480 : vector<2x16xf32>
    %483 = arith.divf %481, %482 : vector<2x16xf32>
    %484 = arith.mulf %475, %426 : vector<2x16xf32>
    %485 = arith.mulf %469, %477 : vector<2x16xf32>
    %486 = arith.addf %484, %485 : vector<2x16xf32>
    %487 = math.tanh %486 : vector<2x16xf32>
    %488 = arith.mulf %483, %487 : vector<2x16xf32>
    %c14_158 = arith.constant 14 : index
    %c0_159 = arith.constant 0 : index
    %489 = vector.load %arg12[%c14_158, %c0_159] : memref<16x16xf32, #tpu.memory_space<vmem>>, vector<2x16xf32>
    tpu.vector_store %arg12[%c14_158, %c0_159], %461 {strides = array<i32>} : memref<16x16xf32, #tpu.memory_space<vmem>>, vector<2x16xf32>,
    %c0_160 = arith.constant 0 : index
    %c0_161 = arith.constant 0 : index
    %490 = vector.load %arg13[%c0_160, %c0_161] : memref<16x16xf32, #tpu.memory_space<vmem>>, vector<2x16xf32>
    tpu.vector_store %arg13[%c0_160, %c0_161], %488 {strides = array<i32>} : memref<16x16xf32, #tpu.memory_space<vmem>>, vector<2x16xf32>,
    %c0_162 = arith.constant 0 : index
    %c0_163 = arith.constant 0 : index
    %491 = vector.load %arg12[%c0_162, %c0_163] : memref<16x16xf32, #tpu.memory_space<vmem>>, vector<16x16xf32>
    %cst_164 = arith.constant 0.000000e+00 : f32
    %492 = vector.broadcast %cst_164 : f32 to vector<16x16xf32>
    %493 = arith.maximumf %491, %492 : vector<16x16xf32>
    %c0_165 = arith.constant 0 : index
    %c0_166 = arith.constant 0 : index
    %494 = vector.load %arg5[%c0_165, %c0_166] : memref<32x64xf32, #tpu.memory_space<vmem>>, vector<16x64xf32>
    %cst_167 = arith.constant dense<0.000000e+00> : vector<16x64xf32>
    %495 = tpu.matmul %493, %494, %cst_167 {dimension_numbers = #tpu.dot_dimension_numbers<[1], [0], [0], [1], [0, 0, 1, 1], [], []>} : vector<16x16xf32>, vector<16x64xf32>, vector<16x64xf32> -> vector<16x64xf32>
    %c0_168 = arith.constant 0 : index
    %c0_169 = arith.constant 0 : index
    %496 = vector.load %arg13[%c0_168, %c0_169] : memref<16x16xf32, #tpu.memory_space<vmem>>, vector<16x16xf32>
    %cst_170 = arith.constant 0.000000e+00 : f32
    %497 = vector.broadcast %cst_170 : f32 to vector<16x16xf32>
    %498 = arith.maximumf %496, %497 : vector<16x16xf32>
    %c16 = arith.constant 16 : index
    %c0_171 = arith.constant 0 : index
    %499 = vector.load %arg5[%c16, %c0_171] : memref<32x64xf32, #tpu.memory_space<vmem>>, vector<16x64xf32>
    %cst_172 = arith.constant dense<0.000000e+00> : vector<16x64xf32>
    %500 = tpu.matmul %498, %499, %cst_172 {dimension_numbers = #tpu.dot_dimension_numbers<[1], [0], [0], [1], [0, 0, 1, 1], [], []>} : vector<16x16xf32>, vector<16x64xf32>, vector<16x64xf32> -> vector<16x64xf32>
    %501 = arith.addf %495, %500 : vector<16x64xf32>
    %c0_173 = arith.constant 0 : index
    %c0_174 = arith.constant 0 : index
    %502 = vector.load %arg7[%c0_173, %c0_174] : memref<1x64xf32, #tpu.memory_space<vmem>>, vector<1x64xf32>
    %503 = vector.broadcast %502 : vector<1x64xf32> to vector<16x64xf32>
    %504 = arith.addf %501, %503 : vector<16x64xf32>
    %c0_175 = arith.constant 0 : index
    %c0_176 = arith.constant 0 : index
    %505 = vector.load %arg11[%c0_175, %c0_176] : memref<16x128xf32, #tpu.memory_space<vmem>>, vector<16x64xf32>
    tpu.vector_store %arg11[%c0_175, %c0_176], %504 {strides = array<i32>} : memref<16x128xf32, #tpu.memory_space<vmem>>, vector<16x64xf32>,
    %cst_177 = arith.constant 0.000000e+00 : f32
    %506 = vector.broadcast %cst_177 : f32 to vector<2x8xf32>
    %c0_178 = arith.constant 0 : index
    %c0_179 = arith.constant 0 : index
    %507 = vector.load %arg6[%c0_178, %c0_179] : memref<8x64xf32, #tpu.memory_space<vmem>>, vector<8x32xf32>
    %cst_180 = arith.constant dense<0.000000e+00> : vector<2x32xf32>
    %508 = tpu.matmul %506, %507, %cst_180 {dimension_numbers = #tpu.dot_dimension_numbers<[1], [0], [0], [1], [0, 0, 1, 1], [], []>} : vector<2x8xf32>, vector<8x32xf32>, vector<2x32xf32> -> vector<2x32xf32>
    %c0_181 = arith.constant 0 : index
    %c32 = arith.constant 32 : index
    %509 = vector.load %arg6[%c0_181, %c32] : memref<8x64xf32, #tpu.memory_space<vmem>>, vector<8x32xf32>
    %cst_182 = arith.constant dense<0.000000e+00> : vector<2x32xf32>
    %510 = tpu.matmul %506, %509, %cst_182 {dimension_numbers = #tpu.dot_dimension_numbers<[1], [0], [0], [1], [0, 0, 1, 1], [], []>} : vector<2x8xf32>, vector<8x32xf32>, vector<2x32xf32> -> vector<2x32xf32>
    %c0_183 = arith.constant 0 : index
    %c0_184 = arith.constant 0 : index
    %511 = vector.load %arg11[%c0_183, %c0_184] : memref<16x128xf32, #tpu.memory_space<vmem>>, vector<2x32xf32>
    %512 = arith.addf %511, %508 : vector<2x32xf32>
    %513 = vector.extract_strided_slice %512 {offsets = [0, 0], sizes = [2, 8], strides = [1, 1]} : vector<2x32xf32> to vector<2x8xf32>
    %514 = arith.negf %513 : vector<2x8xf32>
    %515 = math.exp %514 : vector<2x8xf32>
    %cst_185 = arith.constant 1.000000e+00 : f32
    %516 = vector.broadcast %cst_185 : f32 to vector<2x8xf32>
    %517 = arith.addf %516, %515 : vector<2x8xf32>
    %518 = arith.divf %516, %517 : vector<2x8xf32>
    %519 = vector.extract_strided_slice %512 {offsets = [0, 8], sizes = [2, 8], strides = [1, 1]} : vector<2x32xf32> to vector<2x8xf32>
    %520 = arith.negf %519 : vector<2x8xf32>
    %521 = math.exp %520 : vector<2x8xf32>
    %cst_186 = arith.constant 1.000000e+00 : f32
    %522 = vector.broadcast %cst_186 : f32 to vector<2x8xf32>
    %523 = arith.addf %522, %521 : vector<2x8xf32>
    %524 = arith.divf %522, %523 : vector<2x8xf32>
    %525 = vector.extract_strided_slice %512 {offsets = [0, 16], sizes = [2, 8], strides = [1, 1]} : vector<2x32xf32> to vector<2x8xf32>
    %526 = math.tanh %525 : vector<2x8xf32>
    %527 = vector.extract_strided_slice %512 {offsets = [0, 24], sizes = [2, 8], strides = [1, 1]} : vector<2x32xf32> to vector<2x8xf32>
    %528 = arith.negf %527 : vector<2x8xf32>
    %529 = math.exp %528 : vector<2x8xf32>
    %cst_187 = arith.constant 1.000000e+00 : f32
    %530 = vector.broadcast %cst_187 : f32 to vector<2x8xf32>
    %531 = arith.addf %530, %529 : vector<2x8xf32>
    %532 = arith.divf %530, %531 : vector<2x8xf32>
    %533 = arith.mulf %524, %506 : vector<2x8xf32>
    %534 = arith.mulf %518, %526 : vector<2x8xf32>
    %535 = arith.addf %533, %534 : vector<2x8xf32>
    %536 = math.tanh %535 : vector<2x8xf32>
    %537 = arith.mulf %532, %536 : vector<2x8xf32>
    %c14_188 = arith.constant 14 : index
    %c32_189 = arith.constant 32 : index
    %538 = vector.load %arg11[%c14_188, %c32_189] : memref<16x128xf32, #tpu.memory_space<vmem>>, vector<2x32xf32>
    %539 = arith.addf %538, %510 : vector<2x32xf32>
    %540 = vector.extract_strided_slice %539 {offsets = [0, 0], sizes = [2, 8], strides = [1, 1]} : vector<2x32xf32> to vector<2x8xf32>
    %541 = arith.negf %540 : vector<2x8xf32>
    %542 = math.exp %541 : vector<2x8xf32>
    %cst_190 = arith.constant 1.000000e+00 : f32
    %543 = vector.broadcast %cst_190 : f32 to vector<2x8xf32>
    %544 = arith.addf %543, %542 : vector<2x8xf32>
    %545 = arith.divf %543, %544 : vector<2x8xf32>
    %546 = vector.extract_strided_slice %539 {offsets = [0, 8], sizes = [2, 8], strides = [1, 1]} : vector<2x32xf32> to vector<2x8xf32>
    %547 = arith.negf %546 : vector<2x8xf32>
    %548 = math.exp %547 : vector<2x8xf32>
    %cst_191 = arith.constant 1.000000e+00 : f32
    %549 = vector.broadcast %cst_191 : f32 to vector<2x8xf32>
    %550 = arith.addf %549, %548 : vector<2x8xf32>
    %551 = arith.divf %549, %550 : vector<2x8xf32>
    %552 = vector.extract_strided_slice %539 {offsets = [0, 16], sizes = [2, 8], strides = [1, 1]} : vector<2x32xf32> to vector<2x8xf32>
    %553 = math.tanh %552 : vector<2x8xf32>
    %554 = vector.extract_strided_slice %539 {offsets = [0, 24], sizes = [2, 8], strides = [1, 1]} : vector<2x32xf32> to vector<2x8xf32>
    %555 = arith.negf %554 : vector<2x8xf32>
    %556 = math.exp %555 : vector<2x8xf32>
    %cst_192 = arith.constant 1.000000e+00 : f32
    %557 = vector.broadcast %cst_192 : f32 to vector<2x8xf32>
    %558 = arith.addf %557, %556 : vector<2x8xf32>
    %559 = arith.divf %557, %558 : vector<2x8xf32>
    %560 = arith.mulf %551, %506 : vector<2x8xf32>
    %561 = arith.mulf %545, %553 : vector<2x8xf32>
    %562 = arith.addf %560, %561 : vector<2x8xf32>
    %563 = math.tanh %562 : vector<2x8xf32>
    %564 = arith.mulf %559, %563 : vector<2x8xf32>
    %c0_193 = arith.constant 0 : index
    %c0_194 = arith.constant 0 : index
    %565 = vector.load %arg12[%c0_193, %c0_194] : memref<16x16xf32, #tpu.memory_space<vmem>>, vector<2x8xf32>
    tpu.vector_store %arg12[%c0_193, %c0_194], %537 {strides = array<i32>} : memref<16x16xf32, #tpu.memory_space<vmem>>, vector<2x8xf32>,
    %c14_195 = arith.constant 14 : index
    %c0_196 = arith.constant 0 : index
    %566 = vector.load %arg13[%c14_195, %c0_196] : memref<16x16xf32, #tpu.memory_space<vmem>>, vector<2x8xf32>
    tpu.vector_store %arg13[%c14_195, %c0_196], %564 {strides = array<i32>} : memref<16x16xf32, #tpu.memory_space<vmem>>, vector<2x8xf32>,
    %c0_197 = arith.constant 0 : index
    %c0_198 = arith.constant 0 : index
    %567 = vector.load %arg6[%c0_197, %c0_198] : memref<8x64xf32, #tpu.memory_space<vmem>>, vector<8x32xf32>
    %cst_199 = arith.constant dense<0.000000e+00> : vector<2x32xf32>
    %568 = tpu.matmul %537, %567, %cst_199 {dimension_numbers = #tpu.dot_dimension_numbers<[1], [0], [0], [1], [0, 0, 1, 1], [], []>} : vector<2x8xf32>, vector<8x32xf32>, vector<2x32xf32> -> vector<2x32xf32>
    %c0_200 = arith.constant 0 : index
    %c32_201 = arith.constant 32 : index
    %569 = vector.load %arg6[%c0_200, %c32_201] : memref<8x64xf32, #tpu.memory_space<vmem>>, vector<8x32xf32>
    %cst_202 = arith.constant dense<0.000000e+00> : vector<2x32xf32>
    %570 = tpu.matmul %564, %569, %cst_202 {dimension_numbers = #tpu.dot_dimension_numbers<[1], [0], [0], [1], [0, 0, 1, 1], [], []>} : vector<2x8xf32>, vector<8x32xf32>, vector<2x32xf32> -> vector<2x32xf32>
    %c2_203 = arith.constant 2 : index
    %c0_204 = arith.constant 0 : index
    %571 = vector.load %arg11[%c2_203, %c0_204] : memref<16x128xf32, #tpu.memory_space<vmem>>, vector<2x32xf32>
    %572 = arith.addf %571, %568 : vector<2x32xf32>
    %573 = vector.extract_strided_slice %572 {offsets = [0, 0], sizes = [2, 8], strides = [1, 1]} : vector<2x32xf32> to vector<2x8xf32>
    %574 = arith.negf %573 : vector<2x8xf32>
    %575 = math.exp %574 : vector<2x8xf32>
    %cst_205 = arith.constant 1.000000e+00 : f32
    %576 = vector.broadcast %cst_205 : f32 to vector<2x8xf32>
    %577 = arith.addf %576, %575 : vector<2x8xf32>
    %578 = arith.divf %576, %577 : vector<2x8xf32>
    %579 = vector.extract_strided_slice %572 {offsets = [0, 8], sizes = [2, 8], strides = [1, 1]} : vector<2x32xf32> to vector<2x8xf32>
    %580 = arith.negf %579 : vector<2x8xf32>
    %581 = math.exp %580 : vector<2x8xf32>
    %cst_206 = arith.constant 1.000000e+00 : f32
    %582 = vector.broadcast %cst_206 : f32 to vector<2x8xf32>
    %583 = arith.addf %582, %581 : vector<2x8xf32>
    %584 = arith.divf %582, %583 : vector<2x8xf32>
    %585 = vector.extract_strided_slice %572 {offsets = [0, 16], sizes = [2, 8], strides = [1, 1]} : vector<2x32xf32> to vector<2x8xf32>
    %586 = math.tanh %585 : vector<2x8xf32>
    %587 = vector.extract_strided_slice %572 {offsets = [0, 24], sizes = [2, 8], strides = [1, 1]} : vector<2x32xf32> to vector<2x8xf32>
    %588 = arith.negf %587 : vector<2x8xf32>
    %589 = math.exp %588 : vector<2x8xf32>
    %cst_207 = arith.constant 1.000000e+00 : f32
    %590 = vector.broadcast %cst_207 : f32 to vector<2x8xf32>
    %591 = arith.addf %590, %589 : vector<2x8xf32>
    %592 = arith.divf %590, %591 : vector<2x8xf32>
    %593 = arith.mulf %584, %535 : vector<2x8xf32>
    %594 = arith.mulf %578, %586 : vector<2x8xf32>
    %595 = arith.addf %593, %594 : vector<2x8xf32>
    %596 = math.tanh %595 : vector<2x8xf32>
    %597 = arith.mulf %592, %596 : vector<2x8xf32>
    %c12_208 = arith.constant 12 : index
    %c32_209 = arith.constant 32 : index
    %598 = vector.load %arg11[%c12_208, %c32_209] : memref<16x128xf32, #tpu.memory_space<vmem>>, vector<2x32xf32>
    %599 = arith.addf %598, %570 : vector<2x32xf32>
    %600 = vector.extract_strided_slice %599 {offsets = [0, 0], sizes = [2, 8], strides = [1, 1]} : vector<2x32xf32> to vector<2x8xf32>
    %601 = arith.negf %600 : vector<2x8xf32>
    %602 = math.exp %601 : vector<2x8xf32>
    %cst_210 = arith.constant 1.000000e+00 : f32
    %603 = vector.broadcast %cst_210 : f32 to vector<2x8xf32>
    %604 = arith.addf %603, %602 : vector<2x8xf32>
    %605 = arith.divf %603, %604 : vector<2x8xf32>
    %606 = vector.extract_strided_slice %599 {offsets = [0, 8], sizes = [2, 8], strides = [1, 1]} : vector<2x32xf32> to vector<2x8xf32>
    %607 = arith.negf %606 : vector<2x8xf32>
    %608 = math.exp %607 : vector<2x8xf32>
    %cst_211 = arith.constant 1.000000e+00 : f32
    %609 = vector.broadcast %cst_211 : f32 to vector<2x8xf32>
    %610 = arith.addf %609, %608 : vector<2x8xf32>
    %611 = arith.divf %609, %610 : vector<2x8xf32>
    %612 = vector.extract_strided_slice %599 {offsets = [0, 16], sizes = [2, 8], strides = [1, 1]} : vector<2x32xf32> to vector<2x8xf32>
    %613 = math.tanh %612 : vector<2x8xf32>
    %614 = vector.extract_strided_slice %599 {offsets = [0, 24], sizes = [2, 8], strides = [1, 1]} : vector<2x32xf32> to vector<2x8xf32>
    %615 = arith.negf %614 : vector<2x8xf32>
    %616 = math.exp %615 : vector<2x8xf32>
    %cst_212 = arith.constant 1.000000e+00 : f32
    %617 = vector.broadcast %cst_212 : f32 to vector<2x8xf32>
    %618 = arith.addf %617, %616 : vector<2x8xf32>
    %619 = arith.divf %617, %618 : vector<2x8xf32>
    %620 = arith.mulf %611, %562 : vector<2x8xf32>
    %621 = arith.mulf %605, %613 : vector<2x8xf32>
    %622 = arith.addf %620, %621 : vector<2x8xf32>
    %623 = math.tanh %622 : vector<2x8xf32>
    %624 = arith.mulf %619, %623 : vector<2x8xf32>
    %c2_213 = arith.constant 2 : index
    %c0_214 = arith.constant 0 : index
    %625 = vector.load %arg12[%c2_213, %c0_214] : memref<16x16xf32, #tpu.memory_space<vmem>>, vector<2x8xf32>
    tpu.vector_store %arg12[%c2_213, %c0_214], %597 {strides = array<i32>} : memref<16x16xf32, #tpu.memory_space<vmem>>, vector<2x8xf32>,
    %c12_215 = arith.constant 12 : index
    %c0_216 = arith.constant 0 : index
    %626 = vector.load %arg13[%c12_215, %c0_216] : memref<16x16xf32, #tpu.memory_space<vmem>>, vector<2x8xf32>
    tpu.vector_store %arg13[%c12_215, %c0_216], %624 {strides = array<i32>} : memref<16x16xf32, #tpu.memory_space<vmem>>, vector<2x8xf32>,
    %c0_217 = arith.constant 0 : index
    %c0_218 = arith.constant 0 : index
    %627 = vector.load %arg6[%c0_217, %c0_218] : memref<8x64xf32, #tpu.memory_space<vmem>>, vector<8x32xf32>
    %cst_219 = arith.constant dense<0.000000e+00> : vector<2x32xf32>
    %628 = tpu.matmul %597, %627, %cst_219 {dimension_numbers = #tpu.dot_dimension_numbers<[1], [0], [0], [1], [0, 0, 1, 1], [], []>} : vector<2x8xf32>, vector<8x32xf32>, vector<2x32xf32> -> vector<2x32xf32>
    %c0_220 = arith.constant 0 : index
    %c32_221 = arith.constant 32 : index
    %629 = vector.load %arg6[%c0_220, %c32_221] : memref<8x64xf32, #tpu.memory_space<vmem>>, vector<8x32xf32>
    %cst_222 = arith.constant dense<0.000000e+00> : vector<2x32xf32>
    %630 = tpu.matmul %624, %629, %cst_222 {dimension_numbers = #tpu.dot_dimension_numbers<[1], [0], [0], [1], [0, 0, 1, 1], [], []>} : vector<2x8xf32>, vector<8x32xf32>, vector<2x32xf32> -> vector<2x32xf32>
    %c4_223 = arith.constant 4 : index
    %c0_224 = arith.constant 0 : index
    %631 = vector.load %arg11[%c4_223, %c0_224] : memref<16x128xf32, #tpu.memory_space<vmem>>, vector<2x32xf32>
    %632 = arith.addf %631, %628 : vector<2x32xf32>
    %633 = vector.extract_strided_slice %632 {offsets = [0, 0], sizes = [2, 8], strides = [1, 1]} : vector<2x32xf32> to vector<2x8xf32>
    %634 = arith.negf %633 : vector<2x8xf32>
    %635 = math.exp %634 : vector<2x8xf32>
    %cst_225 = arith.constant 1.000000e+00 : f32
    %636 = vector.broadcast %cst_225 : f32 to vector<2x8xf32>
    %637 = arith.addf %636, %635 : vector<2x8xf32>
    %638 = arith.divf %636, %637 : vector<2x8xf32>
    %639 = vector.extract_strided_slice %632 {offsets = [0, 8], sizes = [2, 8], strides = [1, 1]} : vector<2x32xf32> to vector<2x8xf32>
    %640 = arith.negf %639 : vector<2x8xf32>
    %641 = math.exp %640 : vector<2x8xf32>
    %cst_226 = arith.constant 1.000000e+00 : f32
    %642 = vector.broadcast %cst_226 : f32 to vector<2x8xf32>
    %643 = arith.addf %642, %641 : vector<2x8xf32>
    %644 = arith.divf %642, %643 : vector<2x8xf32>
    %645 = vector.extract_strided_slice %632 {offsets = [0, 16], sizes = [2, 8], strides = [1, 1]} : vector<2x32xf32> to vector<2x8xf32>
    %646 = math.tanh %645 : vector<2x8xf32>
    %647 = vector.extract_strided_slice %632 {offsets = [0, 24], sizes = [2, 8], strides = [1, 1]} : vector<2x32xf32> to vector<2x8xf32>
    %648 = arith.negf %647 : vector<2x8xf32>
    %649 = math.exp %648 : vector<2x8xf32>
    %cst_227 = arith.constant 1.000000e+00 : f32
    %650 = vector.broadcast %cst_227 : f32 to vector<2x8xf32>
    %651 = arith.addf %650, %649 : vector<2x8xf32>
    %652 = arith.divf %650, %651 : vector<2x8xf32>
    %653 = arith.mulf %644, %595 : vector<2x8xf32>
    %654 = arith.mulf %638, %646 : vector<2x8xf32>
    %655 = arith.addf %653, %654 : vector<2x8xf32>
    %656 = math.tanh %655 : vector<2x8xf32>
    %657 = arith.mulf %652, %656 : vector<2x8xf32>
    %c10_228 = arith.constant 10 : index
    %c32_229 = arith.constant 32 : index
    %658 = vector.load %arg11[%c10_228, %c32_229] : memref<16x128xf32, #tpu.memory_space<vmem>>, vector<2x32xf32>
    %659 = arith.addf %658, %630 : vector<2x32xf32>
    %660 = vector.extract_strided_slice %659 {offsets = [0, 0], sizes = [2, 8], strides = [1, 1]} : vector<2x32xf32> to vector<2x8xf32>
    %661 = arith.negf %660 : vector<2x8xf32>
    %662 = math.exp %661 : vector<2x8xf32>
    %cst_230 = arith.constant 1.000000e+00 : f32
    %663 = vector.broadcast %cst_230 : f32 to vector<2x8xf32>
    %664 = arith.addf %663, %662 : vector<2x8xf32>
    %665 = arith.divf %663, %664 : vector<2x8xf32>
    %666 = vector.extract_strided_slice %659 {offsets = [0, 8], sizes = [2, 8], strides = [1, 1]} : vector<2x32xf32> to vector<2x8xf32>
    %667 = arith.negf %666 : vector<2x8xf32>
    %668 = math.exp %667 : vector<2x8xf32>
    %cst_231 = arith.constant 1.000000e+00 : f32
    %669 = vector.broadcast %cst_231 : f32 to vector<2x8xf32>
    %670 = arith.addf %669, %668 : vector<2x8xf32>
    %671 = arith.divf %669, %670 : vector<2x8xf32>
    %672 = vector.extract_strided_slice %659 {offsets = [0, 16], sizes = [2, 8], strides = [1, 1]} : vector<2x32xf32> to vector<2x8xf32>
    %673 = math.tanh %672 : vector<2x8xf32>
    %674 = vector.extract_strided_slice %659 {offsets = [0, 24], sizes = [2, 8], strides = [1, 1]} : vector<2x32xf32> to vector<2x8xf32>
    %675 = arith.negf %674 : vector<2x8xf32>
    %676 = math.exp %675 : vector<2x8xf32>
    %cst_232 = arith.constant 1.000000e+00 : f32
    %677 = vector.broadcast %cst_232 : f32 to vector<2x8xf32>
    %678 = arith.addf %677, %676 : vector<2x8xf32>
    %679 = arith.divf %677, %678 : vector<2x8xf32>
    %680 = arith.mulf %671, %622 : vector<2x8xf32>
    %681 = arith.mulf %665, %673 : vector<2x8xf32>
    %682 = arith.addf %680, %681 : vector<2x8xf32>
    %683 = math.tanh %682 : vector<2x8xf32>
    %684 = arith.mulf %679, %683 : vector<2x8xf32>
    %c4_233 = arith.constant 4 : index
    %c0_234 = arith.constant 0 : index
    %685 = vector.load %arg12[%c4_233, %c0_234] : memref<16x16xf32, #tpu.memory_space<vmem>>, vector<2x8xf32>
    tpu.vector_store %arg12[%c4_233, %c0_234], %657 {strides = array<i32>} : memref<16x16xf32, #tpu.memory_space<vmem>>, vector<2x8xf32>,
    %c10_235 = arith.constant 10 : index
    %c0_236 = arith.constant 0 : index
    %686 = vector.load %arg13[%c10_235, %c0_236] : memref<16x16xf32, #tpu.memory_space<vmem>>, vector<2x8xf32>
    tpu.vector_store %arg13[%c10_235, %c0_236], %684 {strides = array<i32>} : memref<16x16xf32, #tpu.memory_space<vmem>>, vector<2x8xf32>,
    %c0_237 = arith.constant 0 : index
    %c0_238 = arith.constant 0 : index
    %687 = vector.load %arg6[%c0_237, %c0_238] : memref<8x64xf32, #tpu.memory_space<vmem>>, vector<8x32xf32>
    %cst_239 = arith.constant dense<0.000000e+00> : vector<2x32xf32>
    %688 = tpu.matmul %657, %687, %cst_239 {dimension_numbers = #tpu.dot_dimension_numbers<[1], [0], [0], [1], [0, 0, 1, 1], [], []>} : vector<2x8xf32>, vector<8x32xf32>, vector<2x32xf32> -> vector<2x32xf32>
    %c0_240 = arith.constant 0 : index
    %c32_241 = arith.constant 32 : index
    %689 = vector.load %arg6[%c0_240, %c32_241] : memref<8x64xf32, #tpu.memory_space<vmem>>, vector<8x32xf32>
    %cst_242 = arith.constant dense<0.000000e+00> : vector<2x32xf32>
    %690 = tpu.matmul %684, %689, %cst_242 {dimension_numbers = #tpu.dot_dimension_numbers<[1], [0], [0], [1], [0, 0, 1, 1], [], []>} : vector<2x8xf32>, vector<8x32xf32>, vector<2x32xf32> -> vector<2x32xf32>
    %c6_243 = arith.constant 6 : index
    %c0_244 = arith.constant 0 : index
    %691 = vector.load %arg11[%c6_243, %c0_244] : memref<16x128xf32, #tpu.memory_space<vmem>>, vector<2x32xf32>
    %692 = arith.addf %691, %688 : vector<2x32xf32>
    %693 = vector.extract_strided_slice %692 {offsets = [0, 0], sizes = [2, 8], strides = [1, 1]} : vector<2x32xf32> to vector<2x8xf32>
    %694 = arith.negf %693 : vector<2x8xf32>
    %695 = math.exp %694 : vector<2x8xf32>
    %cst_245 = arith.constant 1.000000e+00 : f32
    %696 = vector.broadcast %cst_245 : f32 to vector<2x8xf32>
    %697 = arith.addf %696, %695 : vector<2x8xf32>
    %698 = arith.divf %696, %697 : vector<2x8xf32>
    %699 = vector.extract_strided_slice %692 {offsets = [0, 8], sizes = [2, 8], strides = [1, 1]} : vector<2x32xf32> to vector<2x8xf32>
    %700 = arith.negf %699 : vector<2x8xf32>
    %701 = math.exp %700 : vector<2x8xf32>
    %cst_246 = arith.constant 1.000000e+00 : f32
    %702 = vector.broadcast %cst_246 : f32 to vector<2x8xf32>
    %703 = arith.addf %702, %701 : vector<2x8xf32>
    %704 = arith.divf %702, %703 : vector<2x8xf32>
    %705 = vector.extract_strided_slice %692 {offsets = [0, 16], sizes = [2, 8], strides = [1, 1]} : vector<2x32xf32> to vector<2x8xf32>
    %706 = math.tanh %705 : vector<2x8xf32>
    %707 = vector.extract_strided_slice %692 {offsets = [0, 24], sizes = [2, 8], strides = [1, 1]} : vector<2x32xf32> to vector<2x8xf32>
    %708 = arith.negf %707 : vector<2x8xf32>
    %709 = math.exp %708 : vector<2x8xf32>
    %cst_247 = arith.constant 1.000000e+00 : f32
    %710 = vector.broadcast %cst_247 : f32 to vector<2x8xf32>
    %711 = arith.addf %710, %709 : vector<2x8xf32>
    %712 = arith.divf %710, %711 : vector<2x8xf32>
    %713 = arith.mulf %704, %655 : vector<2x8xf32>
    %714 = arith.mulf %698, %706 : vector<2x8xf32>
    %715 = arith.addf %713, %714 : vector<2x8xf32>
    %716 = math.tanh %715 : vector<2x8xf32>
    %717 = arith.mulf %712, %716 : vector<2x8xf32>
    %c8_248 = arith.constant 8 : index
    %c32_249 = arith.constant 32 : index
    %718 = vector.load %arg11[%c8_248, %c32_249] : memref<16x128xf32, #tpu.memory_space<vmem>>, vector<2x32xf32>
    %719 = arith.addf %718, %690 : vector<2x32xf32>
    %720 = vector.extract_strided_slice %719 {offsets = [0, 0], sizes = [2, 8], strides = [1, 1]} : vector<2x32xf32> to vector<2x8xf32>
    %721 = arith.negf %720 : vector<2x8xf32>
    %722 = math.exp %721 : vector<2x8xf32>
    %cst_250 = arith.constant 1.000000e+00 : f32
    %723 = vector.broadcast %cst_250 : f32 to vector<2x8xf32>
    %724 = arith.addf %723, %722 : vector<2x8xf32>
    %725 = arith.divf %723, %724 : vector<2x8xf32>
    %726 = vector.extract_strided_slice %719 {offsets = [0, 8], sizes = [2, 8], strides = [1, 1]} : vector<2x32xf32> to vector<2x8xf32>
    %727 = arith.negf %726 : vector<2x8xf32>
    %728 = math.exp %727 : vector<2x8xf32>
    %cst_251 = arith.constant 1.000000e+00 : f32
    %729 = vector.broadcast %cst_251 : f32 to vector<2x8xf32>
    %730 = arith.addf %729, %728 : vector<2x8xf32>
    %731 = arith.divf %729, %730 : vector<2x8xf32>
    %732 = vector.extract_strided_slice %719 {offsets = [0, 16], sizes = [2, 8], strides = [1, 1]} : vector<2x32xf32> to vector<2x8xf32>
    %733 = math.tanh %732 : vector<2x8xf32>
    %734 = vector.extract_strided_slice %719 {offsets = [0, 24], sizes = [2, 8], strides = [1, 1]} : vector<2x32xf32> to vector<2x8xf32>
    %735 = arith.negf %734 : vector<2x8xf32>
    %736 = math.exp %735 : vector<2x8xf32>
    %cst_252 = arith.constant 1.000000e+00 : f32
    %737 = vector.broadcast %cst_252 : f32 to vector<2x8xf32>
    %738 = arith.addf %737, %736 : vector<2x8xf32>
    %739 = arith.divf %737, %738 : vector<2x8xf32>
    %740 = arith.mulf %731, %682 : vector<2x8xf32>
    %741 = arith.mulf %725, %733 : vector<2x8xf32>
    %742 = arith.addf %740, %741 : vector<2x8xf32>
    %743 = math.tanh %742 : vector<2x8xf32>
    %744 = arith.mulf %739, %743 : vector<2x8xf32>
    %c6_253 = arith.constant 6 : index
    %c0_254 = arith.constant 0 : index
    %745 = vector.load %arg12[%c6_253, %c0_254] : memref<16x16xf32, #tpu.memory_space<vmem>>, vector<2x8xf32>
    tpu.vector_store %arg12[%c6_253, %c0_254], %717 {strides = array<i32>} : memref<16x16xf32, #tpu.memory_space<vmem>>, vector<2x8xf32>,
    %c8_255 = arith.constant 8 : index
    %c0_256 = arith.constant 0 : index
    %746 = vector.load %arg13[%c8_255, %c0_256] : memref<16x16xf32, #tpu.memory_space<vmem>>, vector<2x8xf32>
    tpu.vector_store %arg13[%c8_255, %c0_256], %744 {strides = array<i32>} : memref<16x16xf32, #tpu.memory_space<vmem>>, vector<2x8xf32>,
    %c0_257 = arith.constant 0 : index
    %c0_258 = arith.constant 0 : index
    %747 = vector.load %arg6[%c0_257, %c0_258] : memref<8x64xf32, #tpu.memory_space<vmem>>, vector<8x32xf32>
    %cst_259 = arith.constant dense<0.000000e+00> : vector<2x32xf32>
    %748 = tpu.matmul %717, %747, %cst_259 {dimension_numbers = #tpu.dot_dimension_numbers<[1], [0], [0], [1], [0, 0, 1, 1], [], []>} : vector<2x8xf32>, vector<8x32xf32>, vector<2x32xf32> -> vector<2x32xf32>
    %c0_260 = arith.constant 0 : index
    %c32_261 = arith.constant 32 : index
    %749 = vector.load %arg6[%c0_260, %c32_261] : memref<8x64xf32, #tpu.memory_space<vmem>>, vector<8x32xf32>
    %cst_262 = arith.constant dense<0.000000e+00> : vector<2x32xf32>
    %750 = tpu.matmul %744, %749, %cst_262 {dimension_numbers = #tpu.dot_dimension_numbers<[1], [0], [0], [1], [0, 0, 1, 1], [], []>} : vector<2x8xf32>, vector<8x32xf32>, vector<2x32xf32> -> vector<2x32xf32>
    %c8_263 = arith.constant 8 : index
    %c0_264 = arith.constant 0 : index
    %751 = vector.load %arg11[%c8_263, %c0_264] : memref<16x128xf32, #tpu.memory_space<vmem>>, vector<2x32xf32>
    %752 = arith.addf %751, %748 : vector<2x32xf32>
    %753 = vector.extract_strided_slice %752 {offsets = [0, 0], sizes = [2, 8], strides = [1, 1]} : vector<2x32xf32> to vector<2x8xf32>
    %754 = arith.negf %753 : vector<2x8xf32>
    %755 = math.exp %754 : vector<2x8xf32>
    %cst_265 = arith.constant 1.000000e+00 : f32
    %756 = vector.broadcast %cst_265 : f32 to vector<2x8xf32>
    %757 = arith.addf %756, %755 : vector<2x8xf32>
    %758 = arith.divf %756, %757 : vector<2x8xf32>
    %759 = vector.extract_strided_slice %752 {offsets = [0, 8], sizes = [2, 8], strides = [1, 1]} : vector<2x32xf32> to vector<2x8xf32>
    %760 = arith.negf %759 : vector<2x8xf32>
    %761 = math.exp %760 : vector<2x8xf32>
    %cst_266 = arith.constant 1.000000e+00 : f32
    %762 = vector.broadcast %cst_266 : f32 to vector<2x8xf32>
    %763 = arith.addf %762, %761 : vector<2x8xf32>
    %764 = arith.divf %762, %763 : vector<2x8xf32>
    %765 = vector.extract_strided_slice %752 {offsets = [0, 16], sizes = [2, 8], strides = [1, 1]} : vector<2x32xf32> to vector<2x8xf32>
    %766 = math.tanh %765 : vector<2x8xf32>
    %767 = vector.extract_strided_slice %752 {offsets = [0, 24], sizes = [2, 8], strides = [1, 1]} : vector<2x32xf32> to vector<2x8xf32>
    %768 = arith.negf %767 : vector<2x8xf32>
    %769 = math.exp %768 : vector<2x8xf32>
    %cst_267 = arith.constant 1.000000e+00 : f32
    %770 = vector.broadcast %cst_267 : f32 to vector<2x8xf32>
    %771 = arith.addf %770, %769 : vector<2x8xf32>
    %772 = arith.divf %770, %771 : vector<2x8xf32>
    %773 = arith.mulf %764, %715 : vector<2x8xf32>
    %774 = arith.mulf %758, %766 : vector<2x8xf32>
    %775 = arith.addf %773, %774 : vector<2x8xf32>
    %776 = math.tanh %775 : vector<2x8xf32>
    %777 = arith.mulf %772, %776 : vector<2x8xf32>
    %c6_268 = arith.constant 6 : index
    %c32_269 = arith.constant 32 : index
    %778 = vector.load %arg11[%c6_268, %c32_269] : memref<16x128xf32, #tpu.memory_space<vmem>>, vector<2x32xf32>
    %779 = arith.addf %778, %750 : vector<2x32xf32>
    %780 = vector.extract_strided_slice %779 {offsets = [0, 0], sizes = [2, 8], strides = [1, 1]} : vector<2x32xf32> to vector<2x8xf32>
    %781 = arith.negf %780 : vector<2x8xf32>
    %782 = math.exp %781 : vector<2x8xf32>
    %cst_270 = arith.constant 1.000000e+00 : f32
    %783 = vector.broadcast %cst_270 : f32 to vector<2x8xf32>
    %784 = arith.addf %783, %782 : vector<2x8xf32>
    %785 = arith.divf %783, %784 : vector<2x8xf32>
    %786 = vector.extract_strided_slice %779 {offsets = [0, 8], sizes = [2, 8], strides = [1, 1]} : vector<2x32xf32> to vector<2x8xf32>
    %787 = arith.negf %786 : vector<2x8xf32>
    %788 = math.exp %787 : vector<2x8xf32>
    %cst_271 = arith.constant 1.000000e+00 : f32
    %789 = vector.broadcast %cst_271 : f32 to vector<2x8xf32>
    %790 = arith.addf %789, %788 : vector<2x8xf32>
    %791 = arith.divf %789, %790 : vector<2x8xf32>
    %792 = vector.extract_strided_slice %779 {offsets = [0, 16], sizes = [2, 8], strides = [1, 1]} : vector<2x32xf32> to vector<2x8xf32>
    %793 = math.tanh %792 : vector<2x8xf32>
    %794 = vector.extract_strided_slice %779 {offsets = [0, 24], sizes = [2, 8], strides = [1, 1]} : vector<2x32xf32> to vector<2x8xf32>
    %795 = arith.negf %794 : vector<2x8xf32>
    %796 = math.exp %795 : vector<2x8xf32>
    %cst_272 = arith.constant 1.000000e+00 : f32
    %797 = vector.broadcast %cst_272 : f32 to vector<2x8xf32>
    %798 = arith.addf %797, %796 : vector<2x8xf32>
    %799 = arith.divf %797, %798 : vector<2x8xf32>
    %800 = arith.mulf %791, %742 : vector<2x8xf32>
    %801 = arith.mulf %785, %793 : vector<2x8xf32>
    %802 = arith.addf %800, %801 : vector<2x8xf32>
    %803 = math.tanh %802 : vector<2x8xf32>
    %804 = arith.mulf %799, %803 : vector<2x8xf32>
    %c8_273 = arith.constant 8 : index
    %c0_274 = arith.constant 0 : index
    %805 = vector.load %arg12[%c8_273, %c0_274] : memref<16x16xf32, #tpu.memory_space<vmem>>, vector<2x8xf32>
    tpu.vector_store %arg12[%c8_273, %c0_274], %777 {strides = array<i32>} : memref<16x16xf32, #tpu.memory_space<vmem>>, vector<2x8xf32>,
    %c6_275 = arith.constant 6 : index
    %c0_276 = arith.constant 0 : index
    %806 = vector.load %arg13[%c6_275, %c0_276] : memref<16x16xf32, #tpu.memory_space<vmem>>, vector<2x8xf32>
    tpu.vector_store %arg13[%c6_275, %c0_276], %804 {strides = array<i32>} : memref<16x16xf32, #tpu.memory_space<vmem>>, vector<2x8xf32>,
    %c0_277 = arith.constant 0 : index
    %c0_278 = arith.constant 0 : index
    %807 = vector.load %arg6[%c0_277, %c0_278] : memref<8x64xf32, #tpu.memory_space<vmem>>, vector<8x32xf32>
    %cst_279 = arith.constant dense<0.000000e+00> : vector<2x32xf32>
    %808 = tpu.matmul %777, %807, %cst_279 {dimension_numbers = #tpu.dot_dimension_numbers<[1], [0], [0], [1], [0, 0, 1, 1], [], []>} : vector<2x8xf32>, vector<8x32xf32>, vector<2x32xf32> -> vector<2x32xf32>
    %c0_280 = arith.constant 0 : index
    %c32_281 = arith.constant 32 : index
    %809 = vector.load %arg6[%c0_280, %c32_281] : memref<8x64xf32, #tpu.memory_space<vmem>>, vector<8x32xf32>
    %cst_282 = arith.constant dense<0.000000e+00> : vector<2x32xf32>
    %810 = tpu.matmul %804, %809, %cst_282 {dimension_numbers = #tpu.dot_dimension_numbers<[1], [0], [0], [1], [0, 0, 1, 1], [], []>} : vector<2x8xf32>, vector<8x32xf32>, vector<2x32xf32> -> vector<2x32xf32>
    %c10_283 = arith.constant 10 : index
    %c0_284 = arith.constant 0 : index
    %811 = vector.load %arg11[%c10_283, %c0_284] : memref<16x128xf32, #tpu.memory_space<vmem>>, vector<2x32xf32>
    %812 = arith.addf %811, %808 : vector<2x32xf32>
    %813 = vector.extract_strided_slice %812 {offsets = [0, 0], sizes = [2, 8], strides = [1, 1]} : vector<2x32xf32> to vector<2x8xf32>
    %814 = arith.negf %813 : vector<2x8xf32>
    %815 = math.exp %814 : vector<2x8xf32>
    %cst_285 = arith.constant 1.000000e+00 : f32
    %816 = vector.broadcast %cst_285 : f32 to vector<2x8xf32>
    %817 = arith.addf %816, %815 : vector<2x8xf32>
    %818 = arith.divf %816, %817 : vector<2x8xf32>
    %819 = vector.extract_strided_slice %812 {offsets = [0, 8], sizes = [2, 8], strides = [1, 1]} : vector<2x32xf32> to vector<2x8xf32>
    %820 = arith.negf %819 : vector<2x8xf32>
    %821 = math.exp %820 : vector<2x8xf32>
    %cst_286 = arith.constant 1.000000e+00 : f32
    %822 = vector.broadcast %cst_286 : f32 to vector<2x8xf32>
    %823 = arith.addf %822, %821 : vector<2x8xf32>
    %824 = arith.divf %822, %823 : vector<2x8xf32>
    %825 = vector.extract_strided_slice %812 {offsets = [0, 16], sizes = [2, 8], strides = [1, 1]} : vector<2x32xf32> to vector<2x8xf32>
    %826 = math.tanh %825 : vector<2x8xf32>
    %827 = vector.extract_strided_slice %812 {offsets = [0, 24], sizes = [2, 8], strides = [1, 1]} : vector<2x32xf32> to vector<2x8xf32>
    %828 = arith.negf %827 : vector<2x8xf32>
    %829 = math.exp %828 : vector<2x8xf32>
    %cst_287 = arith.constant 1.000000e+00 : f32
    %830 = vector.broadcast %cst_287 : f32 to vector<2x8xf32>
    %831 = arith.addf %830, %829 : vector<2x8xf32>
    %832 = arith.divf %830, %831 : vector<2x8xf32>
    %833 = arith.mulf %824, %775 : vector<2x8xf32>
    %834 = arith.mulf %818, %826 : vector<2x8xf32>
    %835 = arith.addf %833, %834 : vector<2x8xf32>
    %836 = math.tanh %835 : vector<2x8xf32>
    %837 = arith.mulf %832, %836 : vector<2x8xf32>
    %c4_288 = arith.constant 4 : index
    %c32_289 = arith.constant 32 : index
    %838 = vector.load %arg11[%c4_288, %c32_289] : memref<16x128xf32, #tpu.memory_space<vmem>>, vector<2x32xf32>
    %839 = arith.addf %838, %810 : vector<2x32xf32>
    %840 = vector.extract_strided_slice %839 {offsets = [0, 0], sizes = [2, 8], strides = [1, 1]} : vector<2x32xf32> to vector<2x8xf32>
    %841 = arith.negf %840 : vector<2x8xf32>
    %842 = math.exp %841 : vector<2x8xf32>
    %cst_290 = arith.constant 1.000000e+00 : f32
    %843 = vector.broadcast %cst_290 : f32 to vector<2x8xf32>
    %844 = arith.addf %843, %842 : vector<2x8xf32>
    %845 = arith.divf %843, %844 : vector<2x8xf32>
    %846 = vector.extract_strided_slice %839 {offsets = [0, 8], sizes = [2, 8], strides = [1, 1]} : vector<2x32xf32> to vector<2x8xf32>
    %847 = arith.negf %846 : vector<2x8xf32>
    %848 = math.exp %847 : vector<2x8xf32>
    %cst_291 = arith.constant 1.000000e+00 : f32
    %849 = vector.broadcast %cst_291 : f32 to vector<2x8xf32>
    %850 = arith.addf %849, %848 : vector<2x8xf32>
    %851 = arith.divf %849, %850 : vector<2x8xf32>
    %852 = vector.extract_strided_slice %839 {offsets = [0, 16], sizes = [2, 8], strides = [1, 1]} : vector<2x32xf32> to vector<2x8xf32>
    %853 = math.tanh %852 : vector<2x8xf32>
    %854 = vector.extract_strided_slice %839 {offsets = [0, 24], sizes = [2, 8], strides = [1, 1]} : vector<2x32xf32> to vector<2x8xf32>
    %855 = arith.negf %854 : vector<2x8xf32>
    %856 = math.exp %855 : vector<2x8xf32>
    %cst_292 = arith.constant 1.000000e+00 : f32
    %857 = vector.broadcast %cst_292 : f32 to vector<2x8xf32>
    %858 = arith.addf %857, %856 : vector<2x8xf32>
    %859 = arith.divf %857, %858 : vector<2x8xf32>
    %860 = arith.mulf %851, %802 : vector<2x8xf32>
    %861 = arith.mulf %845, %853 : vector<2x8xf32>
    %862 = arith.addf %860, %861 : vector<2x8xf32>
    %863 = math.tanh %862 : vector<2x8xf32>
    %864 = arith.mulf %859, %863 : vector<2x8xf32>
    %c10_293 = arith.constant 10 : index
    %c0_294 = arith.constant 0 : index
    %865 = vector.load %arg12[%c10_293, %c0_294] : memref<16x16xf32, #tpu.memory_space<vmem>>, vector<2x8xf32>
    tpu.vector_store %arg12[%c10_293, %c0_294], %837 {strides = array<i32>} : memref<16x16xf32, #tpu.memory_space<vmem>>, vector<2x8xf32>,
    %c4_295 = arith.constant 4 : index
    %c0_296 = arith.constant 0 : index
    %866 = vector.load %arg13[%c4_295, %c0_296] : memref<16x16xf32, #tpu.memory_space<vmem>>, vector<2x8xf32>
    tpu.vector_store %arg13[%c4_295, %c0_296], %864 {strides = array<i32>} : memref<16x16xf32, #tpu.memory_space<vmem>>, vector<2x8xf32>,
    %c0_297 = arith.constant 0 : index
    %c0_298 = arith.constant 0 : index
    %867 = vector.load %arg6[%c0_297, %c0_298] : memref<8x64xf32, #tpu.memory_space<vmem>>, vector<8x32xf32>
    %cst_299 = arith.constant dense<0.000000e+00> : vector<2x32xf32>
    %868 = tpu.matmul %837, %867, %cst_299 {dimension_numbers = #tpu.dot_dimension_numbers<[1], [0], [0], [1], [0, 0, 1, 1], [], []>} : vector<2x8xf32>, vector<8x32xf32>, vector<2x32xf32> -> vector<2x32xf32>
    %c0_300 = arith.constant 0 : index
    %c32_301 = arith.constant 32 : index
    %869 = vector.load %arg6[%c0_300, %c32_301] : memref<8x64xf32, #tpu.memory_space<vmem>>, vector<8x32xf32>
    %cst_302 = arith.constant dense<0.000000e+00> : vector<2x32xf32>
    %870 = tpu.matmul %864, %869, %cst_302 {dimension_numbers = #tpu.dot_dimension_numbers<[1], [0], [0], [1], [0, 0, 1, 1], [], []>} : vector<2x8xf32>, vector<8x32xf32>, vector<2x32xf32> -> vector<2x32xf32>
    %c12_303 = arith.constant 12 : index
    %c0_304 = arith.constant 0 : index
    %871 = vector.load %arg11[%c12_303, %c0_304] : memref<16x128xf32, #tpu.memory_space<vmem>>, vector<2x32xf32>
    %872 = arith.addf %871, %868 : vector<2x32xf32>
    %873 = vector.extract_strided_slice %872 {offsets = [0, 0], sizes = [2, 8], strides = [1, 1]} : vector<2x32xf32> to vector<2x8xf32>
    %874 = arith.negf %873 : vector<2x8xf32>
    %875 = math.exp %874 : vector<2x8xf32>
    %cst_305 = arith.constant 1.000000e+00 : f32
    %876 = vector.broadcast %cst_305 : f32 to vector<2x8xf32>
    %877 = arith.addf %876, %875 : vector<2x8xf32>
    %878 = arith.divf %876, %877 : vector<2x8xf32>
    %879 = vector.extract_strided_slice %872 {offsets = [0, 8], sizes = [2, 8], strides = [1, 1]} : vector<2x32xf32> to vector<2x8xf32>
    %880 = arith.negf %879 : vector<2x8xf32>
    %881 = math.exp %880 : vector<2x8xf32>
    %cst_306 = arith.constant 1.000000e+00 : f32
    %882 = vector.broadcast %cst_306 : f32 to vector<2x8xf32>
    %883 = arith.addf %882, %881 : vector<2x8xf32>
    %884 = arith.divf %882, %883 : vector<2x8xf32>
    %885 = vector.extract_strided_slice %872 {offsets = [0, 16], sizes = [2, 8], strides = [1, 1]} : vector<2x32xf32> to vector<2x8xf32>
    %886 = math.tanh %885 : vector<2x8xf32>
    %887 = vector.extract_strided_slice %872 {offsets = [0, 24], sizes = [2, 8], strides = [1, 1]} : vector<2x32xf32> to vector<2x8xf32>
    %888 = arith.negf %887 : vector<2x8xf32>
    %889 = math.exp %888 : vector<2x8xf32>
    %cst_307 = arith.constant 1.000000e+00 : f32
    %890 = vector.broadcast %cst_307 : f32 to vector<2x8xf32>
    %891 = arith.addf %890, %889 : vector<2x8xf32>
    %892 = arith.divf %890, %891 : vector<2x8xf32>
    %893 = arith.mulf %884, %835 : vector<2x8xf32>
    %894 = arith.mulf %878, %886 : vector<2x8xf32>
    %895 = arith.addf %893, %894 : vector<2x8xf32>
    %896 = math.tanh %895 : vector<2x8xf32>
    %897 = arith.mulf %892, %896 : vector<2x8xf32>
    %c2_308 = arith.constant 2 : index
    %c32_309 = arith.constant 32 : index
    %898 = vector.load %arg11[%c2_308, %c32_309] : memref<16x128xf32, #tpu.memory_space<vmem>>, vector<2x32xf32>
    %899 = arith.addf %898, %870 : vector<2x32xf32>
    %900 = vector.extract_strided_slice %899 {offsets = [0, 0], sizes = [2, 8], strides = [1, 1]} : vector<2x32xf32> to vector<2x8xf32>
    %901 = arith.negf %900 : vector<2x8xf32>
    %902 = math.exp %901 : vector<2x8xf32>
    %cst_310 = arith.constant 1.000000e+00 : f32
    %903 = vector.broadcast %cst_310 : f32 to vector<2x8xf32>
    %904 = arith.addf %903, %902 : vector<2x8xf32>
    %905 = arith.divf %903, %904 : vector<2x8xf32>
    %906 = vector.extract_strided_slice %899 {offsets = [0, 8], sizes = [2, 8], strides = [1, 1]} : vector<2x32xf32> to vector<2x8xf32>
    %907 = arith.negf %906 : vector<2x8xf32>
    %908 = math.exp %907 : vector<2x8xf32>
    %cst_311 = arith.constant 1.000000e+00 : f32
    %909 = vector.broadcast %cst_311 : f32 to vector<2x8xf32>
    %910 = arith.addf %909, %908 : vector<2x8xf32>
    %911 = arith.divf %909, %910 : vector<2x8xf32>
    %912 = vector.extract_strided_slice %899 {offsets = [0, 16], sizes = [2, 8], strides = [1, 1]} : vector<2x32xf32> to vector<2x8xf32>
    %913 = math.tanh %912 : vector<2x8xf32>
    %914 = vector.extract_strided_slice %899 {offsets = [0, 24], sizes = [2, 8], strides = [1, 1]} : vector<2x32xf32> to vector<2x8xf32>
    %915 = arith.negf %914 : vector<2x8xf32>
    %916 = math.exp %915 : vector<2x8xf32>
    %cst_312 = arith.constant 1.000000e+00 : f32
    %917 = vector.broadcast %cst_312 : f32 to vector<2x8xf32>
    %918 = arith.addf %917, %916 : vector<2x8xf32>
    %919 = arith.divf %917, %918 : vector<2x8xf32>
    %920 = arith.mulf %911, %862 : vector<2x8xf32>
    %921 = arith.mulf %905, %913 : vector<2x8xf32>
    %922 = arith.addf %920, %921 : vector<2x8xf32>
    %923 = math.tanh %922 : vector<2x8xf32>
    %924 = arith.mulf %919, %923 : vector<2x8xf32>
    %c12_313 = arith.constant 12 : index
    %c0_314 = arith.constant 0 : index
    %925 = vector.load %arg12[%c12_313, %c0_314] : memref<16x16xf32, #tpu.memory_space<vmem>>, vector<2x8xf32>
    tpu.vector_store %arg12[%c12_313, %c0_314], %897 {strides = array<i32>} : memref<16x16xf32, #tpu.memory_space<vmem>>, vector<2x8xf32>,
    %c2_315 = arith.constant 2 : index
    %c0_316 = arith.constant 0 : index
    %926 = vector.load %arg13[%c2_315, %c0_316] : memref<16x16xf32, #tpu.memory_space<vmem>>, vector<2x8xf32>
    tpu.vector_store %arg13[%c2_315, %c0_316], %924 {strides = array<i32>} : memref<16x16xf32, #tpu.memory_space<vmem>>, vector<2x8xf32>,
    %c0_317 = arith.constant 0 : index
    %c0_318 = arith.constant 0 : index
    %927 = vector.load %arg6[%c0_317, %c0_318] : memref<8x64xf32, #tpu.memory_space<vmem>>, vector<8x32xf32>
    %cst_319 = arith.constant dense<0.000000e+00> : vector<2x32xf32>
    %928 = tpu.matmul %897, %927, %cst_319 {dimension_numbers = #tpu.dot_dimension_numbers<[1], [0], [0], [1], [0, 0, 1, 1], [], []>} : vector<2x8xf32>, vector<8x32xf32>, vector<2x32xf32> -> vector<2x32xf32>
    %c0_320 = arith.constant 0 : index
    %c32_321 = arith.constant 32 : index
    %929 = vector.load %arg6[%c0_320, %c32_321] : memref<8x64xf32, #tpu.memory_space<vmem>>, vector<8x32xf32>
    %cst_322 = arith.constant dense<0.000000e+00> : vector<2x32xf32>
    %930 = tpu.matmul %924, %929, %cst_322 {dimension_numbers = #tpu.dot_dimension_numbers<[1], [0], [0], [1], [0, 0, 1, 1], [], []>} : vector<2x8xf32>, vector<8x32xf32>, vector<2x32xf32> -> vector<2x32xf32>
    %c14_323 = arith.constant 14 : index
    %c0_324 = arith.constant 0 : index
    %931 = vector.load %arg11[%c14_323, %c0_324] : memref<16x128xf32, #tpu.memory_space<vmem>>, vector<2x32xf32>
    %932 = arith.addf %931, %928 : vector<2x32xf32>
    %933 = vector.extract_strided_slice %932 {offsets = [0, 0], sizes = [2, 8], strides = [1, 1]} : vector<2x32xf32> to vector<2x8xf32>
    %934 = arith.negf %933 : vector<2x8xf32>
    %935 = math.exp %934 : vector<2x8xf32>
    %cst_325 = arith.constant 1.000000e+00 : f32
    %936 = vector.broadcast %cst_325 : f32 to vector<2x8xf32>
    %937 = arith.addf %936, %935 : vector<2x8xf32>
    %938 = arith.divf %936, %937 : vector<2x8xf32>
    %939 = vector.extract_strided_slice %932 {offsets = [0, 8], sizes = [2, 8], strides = [1, 1]} : vector<2x32xf32> to vector<2x8xf32>
    %940 = arith.negf %939 : vector<2x8xf32>
    %941 = math.exp %940 : vector<2x8xf32>
    %cst_326 = arith.constant 1.000000e+00 : f32
    %942 = vector.broadcast %cst_326 : f32 to vector<2x8xf32>
    %943 = arith.addf %942, %941 : vector<2x8xf32>
    %944 = arith.divf %942, %943 : vector<2x8xf32>
    %945 = vector.extract_strided_slice %932 {offsets = [0, 16], sizes = [2, 8], strides = [1, 1]} : vector<2x32xf32> to vector<2x8xf32>
    %946 = math.tanh %945 : vector<2x8xf32>
    %947 = vector.extract_strided_slice %932 {offsets = [0, 24], sizes = [2, 8], strides = [1, 1]} : vector<2x32xf32> to vector<2x8xf32>
    %948 = arith.negf %947 : vector<2x8xf32>
    %949 = math.exp %948 : vector<2x8xf32>
    %cst_327 = arith.constant 1.000000e+00 : f32
    %950 = vector.broadcast %cst_327 : f32 to vector<2x8xf32>
    %951 = arith.addf %950, %949 : vector<2x8xf32>
    %952 = arith.divf %950, %951 : vector<2x8xf32>
    %953 = arith.mulf %944, %895 : vector<2x8xf32>
    %954 = arith.mulf %938, %946 : vector<2x8xf32>
    %955 = arith.addf %953, %954 : vector<2x8xf32>
    %956 = math.tanh %955 : vector<2x8xf32>
    %957 = arith.mulf %952, %956 : vector<2x8xf32>
    %c0_328 = arith.constant 0 : index
    %c32_329 = arith.constant 32 : index
    %958 = vector.load %arg11[%c0_328, %c32_329] : memref<16x128xf32, #tpu.memory_space<vmem>>, vector<2x32xf32>
    %959 = arith.addf %958, %930 : vector<2x32xf32>
    %960 = vector.extract_strided_slice %959 {offsets = [0, 0], sizes = [2, 8], strides = [1, 1]} : vector<2x32xf32> to vector<2x8xf32>
    %961 = arith.negf %960 : vector<2x8xf32>
    %962 = math.exp %961 : vector<2x8xf32>
    %cst_330 = arith.constant 1.000000e+00 : f32
    %963 = vector.broadcast %cst_330 : f32 to vector<2x8xf32>
    %964 = arith.addf %963, %962 : vector<2x8xf32>
    %965 = arith.divf %963, %964 : vector<2x8xf32>
    %966 = vector.extract_strided_slice %959 {offsets = [0, 8], sizes = [2, 8], strides = [1, 1]} : vector<2x32xf32> to vector<2x8xf32>
    %967 = arith.negf %966 : vector<2x8xf32>
    %968 = math.exp %967 : vector<2x8xf32>
    %cst_331 = arith.constant 1.000000e+00 : f32
    %969 = vector.broadcast %cst_331 : f32 to vector<2x8xf32>
    %970 = arith.addf %969, %968 : vector<2x8xf32>
    %971 = arith.divf %969, %970 : vector<2x8xf32>
    %972 = vector.extract_strided_slice %959 {offsets = [0, 16], sizes = [2, 8], strides = [1, 1]} : vector<2x32xf32> to vector<2x8xf32>
    %973 = math.tanh %972 : vector<2x8xf32>
    %974 = vector.extract_strided_slice %959 {offsets = [0, 24], sizes = [2, 8], strides = [1, 1]} : vector<2x32xf32> to vector<2x8xf32>
    %975 = arith.negf %974 : vector<2x8xf32>
    %976 = math.exp %975 : vector<2x8xf32>
    %cst_332 = arith.constant 1.000000e+00 : f32
    %977 = vector.broadcast %cst_332 : f32 to vector<2x8xf32>
    %978 = arith.addf %977, %976 : vector<2x8xf32>
    %979 = arith.divf %977, %978 : vector<2x8xf32>
    %980 = arith.mulf %971, %922 : vector<2x8xf32>
    %981 = arith.mulf %965, %973 : vector<2x8xf32>
    %982 = arith.addf %980, %981 : vector<2x8xf32>
    %983 = math.tanh %982 : vector<2x8xf32>
    %984 = arith.mulf %979, %983 : vector<2x8xf32>
    %c14_333 = arith.constant 14 : index
    %c0_334 = arith.constant 0 : index
    %985 = vector.load %arg12[%c14_333, %c0_334] : memref<16x16xf32, #tpu.memory_space<vmem>>, vector<2x8xf32>
    tpu.vector_store %arg12[%c14_333, %c0_334], %957 {strides = array<i32>} : memref<16x16xf32, #tpu.memory_space<vmem>>, vector<2x8xf32>,
    %c0_335 = arith.constant 0 : index
    %c0_336 = arith.constant 0 : index
    %986 = vector.load %arg13[%c0_335, %c0_336] : memref<16x16xf32, #tpu.memory_space<vmem>>, vector<2x8xf32>
    tpu.vector_store %arg13[%c0_335, %c0_336], %984 {strides = array<i32>} : memref<16x16xf32, #tpu.memory_space<vmem>>, vector<2x8xf32>,
    %c0_337 = arith.constant 0 : index
    %c0_338 = arith.constant 0 : index
    %987 = vector.load %arg12[%c0_337, %c0_338] : memref<16x16xf32, #tpu.memory_space<vmem>>, vector<16x8xf32>
    %cst_339 = arith.constant 0.000000e+00 : f32
    %988 = vector.broadcast %cst_339 : f32 to vector<16x8xf32>
    %989 = arith.maximumf %987, %988 : vector<16x8xf32>
    %c0_340 = arith.constant 0 : index
    %c0_341 = arith.constant 0 : index
    %990 = vector.load %arg8[%c0_340, %c0_341] : memref<16x128xf32, #tpu.memory_space<vmem>>, vector<8x128xf32>
    %cst_342 = arith.constant dense<0.000000e+00> : vector<16x128xf32>
    %991 = tpu.matmul %989, %990, %cst_342 {dimension_numbers = #tpu.dot_dimension_numbers<[1], [0], [0], [1], [0, 0, 1, 1], [], []>} : vector<16x8xf32>, vector<8x128xf32>, vector<16x128xf32> -> vector<16x128xf32>
    %c0_343 = arith.constant 0 : index
    %c0_344 = arith.constant 0 : index
    %992 = vector.load %arg13[%c0_343, %c0_344] : memref<16x16xf32, #tpu.memory_space<vmem>>, vector<16x8xf32>
    %cst_345 = arith.constant 0.000000e+00 : f32
    %993 = vector.broadcast %cst_345 : f32 to vector<16x8xf32>
    %994 = arith.maximumf %992, %993 : vector<16x8xf32>
    %c8_346 = arith.constant 8 : index
    %c0_347 = arith.constant 0 : index
    %995 = vector.load %arg8[%c8_346, %c0_347] : memref<16x128xf32, #tpu.memory_space<vmem>>, vector<8x128xf32>
    %cst_348 = arith.constant dense<0.000000e+00> : vector<16x128xf32>
    %996 = tpu.matmul %994, %995, %cst_348 {dimension_numbers = #tpu.dot_dimension_numbers<[1], [0], [0], [1], [0, 0, 1, 1], [], []>} : vector<16x8xf32>, vector<8x128xf32>, vector<16x128xf32> -> vector<16x128xf32>
    %997 = arith.addf %991, %996 : vector<16x128xf32>
    %c0_349 = arith.constant 0 : index
    %c0_350 = arith.constant 0 : index
    %998 = vector.load %arg9[%c0_349, %c0_350] : memref<1x128xf32, #tpu.memory_space<vmem>>, vector<1x128xf32>
    %999 = vector.broadcast %998 : vector<1x128xf32> to vector<16x128xf32>
    %1000 = arith.addf %997, %999 : vector<16x128xf32>
    %c0_351 = arith.constant 0 : index
    %c0_352 = arith.constant 0 : index
    %c0_353 = arith.constant 0 : index
    %1001 = vector.load %arg10[%c0_351, %c0_352, %c0_353] : memref<1x16x128xf32, #tpu.memory_space<vmem>>, vector<1x16x128xf32>
    %1002 = vector.shape_cast %1001 : vector<1x16x128xf32> to vector<16x128xf32>
    %1003 = vector.shape_cast %1000 : vector<16x128xf32> to vector<1x16x128xf32>
    tpu.vector_store %arg10[%c0_351, %c0_352, %c0_353], %1003 {strides = array<i32>} : memref<1x16x128xf32, #tpu.memory_space<vmem>>, vector<1x16x128xf32>,
    return
  }
  func.func @transform_0(%arg0: i32) -> (i32, i32, i32) {
    %c0_i32 = arith.constant 0 : i32
    %c0_i32_0 = arith.constant 0 : i32
    %c0_i32_1 = arith.constant 0 : i32
    return %arg0, %c0_i32, %c0_i32_0 : i32, i32, i32
  }
  func.func @transform_1(%arg0: i32) -> (i32, i32) {
    %c0_i32 = arith.constant 0 : i32
    %c0_i32_0 = arith.constant 0 : i32
    %c0_i32_1 = arith.constant 0 : i32
    return %c0_i32, %c0_i32_0 : i32, i32
  }
  func.func @transform_2(%arg0: i32) -> (i32, i32) {
    %c0_i32 = arith.constant 0 : i32
    %c0_i32_0 = arith.constant 0 : i32
    %c0_i32_1 = arith.constant 0 : i32
    return %c0_i32, %c0_i32_0 : i32, i32
  }
  func.func @transform_3(%arg0: i32) -> (i32, i32) {
    %c0_i32 = arith.constant 0 : i32
    %c0_i32_0 = arith.constant 0 : i32
    %c0_i32_1 = arith.constant 0 : i32
    return %c0_i32, %c0_i32_0 : i32, i32
  }
  func.func @transform_4(%arg0: i32) -> (i32, i32) {
    %c0_i32 = arith.constant 0 : i32
    %c0_i32_0 = arith.constant 0 : i32
    %c0_i32_1 = arith.constant 0 : i32
    return %c0_i32, %c0_i32_0 : i32, i32
  }
  func.func @transform_5(%arg0: i32) -> (i32, i32) {
    %c0_i32 = arith.constant 0 : i32
    %c0_i32_0 = arith.constant 0 : i32
    %c0_i32_1 = arith.constant 0 : i32
    return %c0_i32, %c0_i32_0 : i32, i32
  }
  func.func @transform_6(%arg0: i32) -> (i32, i32) {
    %c0_i32 = arith.constant 0 : i32
    %c0_i32_0 = arith.constant 0 : i32
    %c0_i32_1 = arith.constant 0 : i32
    return %c0_i32, %c0_i32_0 : i32, i32
  }
  func.func @transform_7(%arg0: i32) -> (i32, i32) {
    %c0_i32 = arith.constant 0 : i32
    %c0_i32_0 = arith.constant 0 : i32
    %c0_i32_1 = arith.constant 0 : i32
    return %c0_i32, %c0_i32_0 : i32, i32
  }
  func.func @transform_8(%arg0: i32) -> (i32, i32) {
    %c0_i32 = arith.constant 0 : i32
    %c0_i32_0 = arith.constant 0 : i32
    %c0_i32_1 = arith.constant 0 : i32
    return %c0_i32, %c0_i32_0 : i32, i32
  }
  func.func @transform_9(%arg0: i32) -> (i32, i32, i32) {
    %c0_i32 = arith.constant 0 : i32
    %c0_i32_0 = arith.constant 0 : i32
    %c0_i32_1 = arith.constant 0 : i32
    return %arg0, %c0_i32, %c0_i32_0 : i32, i32, i32
  }
}

</mosaic_0001>

<llo_original>
// kernel: demapper_lstm_forward.1
$region0: #{demapper_lstm_forward.1}
  #allocation0 [shape = 'u32[]', space=smem, size = 0x4, offset = 0x4, fixed_abs, tag = 'smem constant byte address 0x4 - core index']
  #allocation1 [shape = 'u32[144,128]{1,0:T(1,128)}', space=vmem, size = 0x12000, scoped, tag = 'internal scratch']
  #allocation2 [shape = 'f32[16,128]{1,0:T(8,128)}', space=vmem, size = 0x2000, scoped, tag = 'scratch operand']
  #allocation3 [shape = 'f32[16,16]{1,0:T(8,128)}', space=vmem, size = 0x2000, scoped, tag = 'scratch operand']
  #allocation4 [shape = 'f32[16,16]{1,0:T(8,128)}', space=vmem, size = 0x2000, scoped, tag = 'scratch operand']
  %s0 = inlined_call_operand.vmem [shape: f32[1,16,32], index: 0, kind: input, shape index: {}]
  %s1 = inlined_call_operand.vmem [shape: f32[32,128], index: 1, kind: input, shape index: {}]
  %s2 = inlined_call_operand.vmem [shape: f32[16,128], index: 2, kind: input, shape index: {}]
  %s3 = inlined_call_operand.vmem [shape: f32[1,128], index: 3, kind: input, shape index: {}]
  %s4 = inlined_call_operand.vmem [shape: f32[32,64], index: 4, kind: input, shape index: {}]
  %s5 = inlined_call_operand.vmem [shape: f32[8,64], index: 5, kind: input, shape index: {}]
  %s6 = inlined_call_operand.vmem [shape: f32[1,64], index: 6, kind: input, shape index: {}]
  %s7 = inlined_call_operand.vmem [shape: f32[16,128], index: 7, kind: input, shape index: {}]
  %s8 = inlined_call_operand.vmem [shape: f32[1,128], index: 8, kind: input, shape index: {}]
  %s9 = inlined_call_operand.vmem [shape: f32[1,16,128], index: 9, kind: output, shape index: {}]
  %s10 = sld [smem:[#allocation0]]
  $region46: #{demapper_lstm_forward.1} parent=0
    _
  %s12 = ssub.s32 1, %s10
  %s13 = scalar_select 0, %s12, %s10
  // Predicated region
  $region2: #{demapper_lstm_forward.1} parent=0 // pred_check
    _
  $region3: #{demapper_lstm_forward.1} parent=0 // pred_check_branch
    %15 = sbr.rel (0) target = $region5
  $region4: #{demapper_lstm_forward.1} parent=0 // pred_region
    _
  $region5: #{demapper_lstm_forward.1} parent=0 // pred_fallthru
    _
  // Predicated region
  $region6: #{demapper_lstm_forward.1} parent=0 // pred_check
    _
  $region7: #{demapper_lstm_forward.1} parent=0 // pred_check_branch
    %17 = sbr.rel (0) target = $region9
  $region8: #{demapper_lstm_forward.1} parent=0 // pred_region
    _
  $region9: #{demapper_lstm_forward.1} parent=0 // pred_fallthru
    _
  // Predicated region
  $region10: #{demapper_lstm_forward.1} parent=0 // pred_check
    _
  $region11: #{demapper_lstm_forward.1} parent=0 // pred_check_branch
    %19 = sbr.rel (0) target = $region13
  $region12: #{demapper_lstm_forward.1} parent=0 // pred_region
    _
  $region13: #{demapper_lstm_forward.1} parent=0 // pred_fallthru
    _
  // Predicated region
  $region14: #{demapper_lstm_forward.1} parent=0 // pred_check
    _
  $region15: #{demapper_lstm_forward.1} parent=0 // pred_check_branch
    %21 = sbr.rel (0) target = $region17
  $region16: #{demapper_lstm_forward.1} parent=0 // pred_region
    _
  $region17: #{demapper_lstm_forward.1} parent=0 // pred_fallthru
    _
  // Predicated region
  $region18: #{demapper_lstm_forward.1} parent=0 // pred_check
    _
  $region19: #{demapper_lstm_forward.1} parent=0 // pred_check_branch
    %23 = sbr.rel (0) target = $region21
  $region20: #{demapper_lstm_forward.1} parent=0 // pred_region
    _
  $region21: #{demapper_lstm_forward.1} parent=0 // pred_fallthru
    _
  // Predicated region
  $region22: #{demapper_lstm_forward.1} parent=0 // pred_check
    _
  $region23: #{demapper_lstm_forward.1} parent=0 // pred_check_branch
    %25 = sbr.rel (0) target = $region25
  $region24: #{demapper_lstm_forward.1} parent=0 // pred_region
    _
  $region25: #{demapper_lstm_forward.1} parent=0 // pred_fallthru
    _
  // Predicated region
  $region26: #{demapper_lstm_forward.1} parent=0 // pred_check
    _
  $region27: #{demapper_lstm_forward.1} parent=0 // pred_check_branch
    %27 = sbr.rel (0) target = $region29
  $region28: #{demapper_lstm_forward.1} parent=0 // pred_region
    _
  $region29: #{demapper_lstm_forward.1} parent=0 // pred_fallthru
    _
  // Predicated region
  $region30: #{demapper_lstm_forward.1} parent=0 // pred_check
    _
  $region31: #{demapper_lstm_forward.1} parent=0 // pred_check_branch
    %29 = sbr.rel (0) target = $region33
  $region32: #{demapper_lstm_forward.1} parent=0 // pred_region
    _
  $region33: #{demapper_lstm_forward.1} parent=0 // pred_fallthru
    _
  // Predicated region
  $region34: #{demapper_lstm_forward.1} parent=0 // pred_check
    _
  $region35: #{demapper_lstm_forward.1} parent=0 // pred_check_branch
    %31 = sbr.rel (0) target = $region37
  $region36: #{demapper_lstm_forward.1} parent=0 // pred_region
    _
  $region37: #{demapper_lstm_forward.1} parent=0 // pred_fallthru
    _
  %v32 = vld [vmem:[%s0] sm:$0xff]
  %v33 = vld [vmem:[%s0 + $0x8] sm:$0xff]
  %v34 = vmax.f32 %v32, 0.0
  %v35 = vmax.f32 %v33, 0.0
  %v36 = vld [vmem:[%s1] sm:$0xff]
  %v37 = vld [vmem:[%s1 + $0x8] sm:$0xff]
  %v38 = vld [vmem:[%s1 + $0x10] sm:$0xff]
  %v39 = vld [vmem:[%s1 + $0x18] sm:$0xff]
  %v40 = vld [vmem:[%s3] sm:$0x1]
  %v42 = vlaneseq
  %v43 = vshrl.u32 %v42, 7
  %v44 = vsub.s32 0, %v43
  %v45 = vrot.slane %v40, %v44
  %vm47 = vcmask 261120
  %v49 = vsel %vm47, %v34, 0
  %v52 = vsel %vm47, %v35, 0
  %54 = vmatprep.subr.mxu0 0.0
  %55 = vmatpush1.msra.mxu0 %v36
  %56 = vmatprep.subr.mxu0 0.0
  %57 = vmatpush1.msra.mxu0 %v37
  %58 = vmatprep.subr.mxu0 0.0
  %59 = vmatpush1.msra.mxu0 %v38
  %60 = vmatprep.subr.mxu0 0.0
  %61 = vmatpush1.msra.mxu0 %v39
  %62 = vmatprep.subr.mxu0 0.0
  %63 = vmatpush1.msra.mxu0 0.0
  %64 = vmatprep.subr.mxu0 0.0
  %65 = vmatpush1.msra.mxu0 0.0
  %66 = vmatprep.subr.mxu0 0.0
  %67 = vmatpush1.msra.mxu0 0.0
  %68 = vmatprep.subr.mxu0 0.0
  %69 = vmatpush1.msra.mxu0 0.0
  %70 = vmatprep.subr.mxu0 0.0
  %71 = vmatpush1.msra.mxu0 0.0
  %72 = vmatprep.subr.mxu0 0.0
  %73 = vmatpush1.msra.mxu0 0.0
  %74 = vmatprep.subr.mxu0 0.0
  %75 = vmatpush1.msra.mxu0 0.0
  %76 = vmatprep.subr.mxu0 0.0
  %77 = vmatpush1.msra.mxu0 0.0
  %78 = vmatprep.subr.mxu0 0.0
  %79 = vmatpush1.msra.mxu0 0.0
  %80 = vmatprep.subr.mxu0 0.0
  %81 = vmatpush1.msra.mxu0 0.0
  %82 = vmatprep.subr.mxu0 0.0
  %83 = vmatpush1.msra.mxu0 0.0
  %84 = vmatprep.subr.mxu0 0.0
  %85 = vmatpush1.msra.mxu0 0.0
  %86 = vmatprep.subr.mxu0 0.0
  %87 = vmatpush1.msra.mxu0 0.0
  %88 = vmatprep.subr.mxu0 0.0
  %89 = vmatpush1.msra.mxu0 0.0
  %90 = vmatprep.subr.mxu0 0.0
  %91 = vmatpush1.msra.mxu0 0.0
  %92 = vmatprep.subr.mxu0 0.0
  %93 = vmatpush1.msra.mxu0 0.0
  %94 = vmatprep.subr.mxu0 0.0
  %95 = vmatpush1.msra.mxu0 0.0
  %96 = vmatprep.subr.mxu0 0.0
  %97 = vmatpush1.msra.mxu0 0.0
  %98 = vmatprep.subr.mxu0 0.0
  %99 = vmatpush1.msra.mxu0 0.0
  %100 = vmatprep.subr.mxu0 0.0
  %101 = vmatpush1.msra.mxu0 0.0
  %102 = vmatprep.subr.mxu0 0.0
  %103 = vmatpush1.msra.mxu0 0.0
  %104 = vmatprep.subr.mxu0 0.0
  %105 = vmatpush1.msra.mxu0 0.0
  %106 = vmatprep.subr.mxu0 0.0
  %107 = vmatpush1.msra.mxu0 0.0
  %108 = vmatprep.subr.mxu0 0.0
  %109 = vmatpush1.msra.mxu0 0.0
  %110 = vmatprep.subr.mxu0 0.0
  %111 = vmatpush1.msra.mxu0 0.0
  %112 = vmatprep.subr.mxu0 0.0
  %113 = vmatpush1.msra.mxu0 0.0
  %114 = vmatprep.subr.mxu0 0.0
  %115 = vmatpush1.msra.mxu0 0.0
  %116 = vmatprep.subr.mxu0 0.0
  %117 = vmatpush1.msra.mxu0 0.0
  %118 = vmatprep.mubr.f32.mxu0 0.0
  %119 = vmatmul.mubr.f32.gmra.mrb[0].mxu0 %v49
  %v120 = vpop.f32.mrb[0].mxu0
  %v121 = vadd.f32 %v45, %v120
  %v122 = vpop.f32.mrb[0].mxu0
  %123 = vmatprep.mubr.f32.mxu0 0.0
  %124 = vmatmul.mubr.f32.gmra.mrb[0].mxu0 %v52
  %v125 = vpop.f32.mrb[0].mxu0
  %v126 = vadd.f32 %v45, %v125
  %v127 = vpop.f32.mrb[0].mxu0
  %128 = vdwg.mxu0
  %129 = vst [vmem:[#allocation2] sm:$0xff] %v121
  %130 = vst [vmem:[#allocation2 + $0x8] sm:$0xff] %v126
  %v131 = vld [vmem:[%s2] sm:$0xff]
  %v132 = vld [vmem:[%s2 + $0x8] sm:$0xff]
  %vm133 = vcmask 130048
  %v135 = vsel %vm133, 0.0, 0
  %137 = vmatprep.subr.mxu0 0.0
  %138 = vmatpush1.msra.mxu0 %v131
  %139 = vmatprep.subr.mxu0 0.0
  %140 = vmatpush1.msra.mxu0 %v132
  %141 = vmatprep.subr.mxu0 0.0
  %142 = vmatpush1.msra.mxu0 0.0
  %143 = vmatprep.subr.mxu0 0.0
  %144 = vmatpush1.msra.mxu0 0.0
  %145 = vmatprep.subr.mxu0 0.0
  %146 = vmatpush1.msra.mxu0 0.0
  %147 = vmatprep.subr.mxu0 0.0
  %148 = vmatpush1.msra.mxu0 0.0
  %149 = vmatprep.subr.mxu0 0.0
  %150 = vmatpush1.msra.mxu0 0.0
  %151 = vmatprep.subr.mxu0 0.0
  %152 = vmatpush1.msra.mxu0 0.0
  %153 = vmatprep.subr.mxu0 0.0
  %154 = vmatpush1.msra.mxu0 0.0
  %155 = vmatprep.subr.mxu0 0.0
  %156 = vmatpush1.msra.mxu0 0.0
  %157 = vmatprep.subr.mxu0 0.0
  %158 = vmatpush1.msra.mxu0 0.0
  %159 = vmatprep.subr.mxu0 0.0
  %160 = vmatpush1.msra.mxu0 0.0
  %161 = vmatprep.subr.mxu0 0.0
  %162 = vmatpush1.msra.mxu0 0.0
  %163 = vmatprep.subr.mxu0 0.0
  %164 = vmatpush1.msra.mxu0 0.0
  %165 = vmatprep.subr.mxu0 0.0
  %166 = vmatpush1.msra.mxu0 0.0
  %167 = vmatprep.subr.mxu0 0.0
  %168 = vmatpush1.msra.mxu0 0.0
  %169 = vmatprep.subr.mxu0 0.0
  %170 = vmatpush1.msra.mxu0 0.0
  %171 = vmatprep.subr.mxu0 0.0
  %172 = vmatpush1.msra.mxu0 0.0
  %173 = vmatprep.subr.mxu0 0.0
  %174 = vmatpush1.msra.mxu0 0.0
  %175 = vmatprep.subr.mxu0 0.0
  %176 = vmatpush1.msra.mxu0 0.0
  %177 = vmatprep.subr.mxu0 0.0
  %178 = vmatpush1.msra.mxu0 0.0
  %179 = vmatprep.subr.mxu0 0.0
  %180 = vmatpush1.msra.mxu0 0.0
  %181 = vmatprep.subr.mxu0 0.0
  %182 = vmatpush1.msra.mxu0 0.0
  %183 = vmatprep.subr.mxu0 0.0
  %184 = vmatpush1.msra.mxu0 0.0
  %185 = vmatprep.subr.mxu0 0.0
  %186 = vmatpush1.msra.mxu0 0.0
  %187 = vmatprep.subr.mxu0 0.0
  %188 = vmatpush1.msra.mxu0 0.0
  %189 = vmatprep.subr.mxu0 0.0
  %190 = vmatpush1.msra.mxu0 0.0
  %191 = vmatprep.subr.mxu0 0.0
  %192 = vmatpush1.msra.mxu0 0.0
  %193 = vmatprep.subr.mxu0 0.0
  %194 = vmatpush1.msra.mxu0 0.0
  %195 = vmatprep.subr.mxu0 0.0
  %196 = vmatpush1.msra.mxu0 0.0
  %197 = vmatprep.subr.mxu0 0.0
  %198 = vmatpush1.msra.mxu0 0.0
  %199 = vmatprep.subr.mxu0 0.0
  %200 = vmatpush1.msra.mxu0 0.0
  %201 = vmatprep.mubr.f32.mxu0 0.0
  %202 = vmatmul.mubr.f32.gmra.mrb[0].mxu0 %v135
  %v203 = vpop.f32.mrb[0].mxu0
  %v204 = vadd.f32 0.0, %v203
  %v205 = vpop.f32.mrb[0].mxu0
  %206 = vdwg.mxu0
  %209 = vrot.lane.b32.xlu0 %v131, 64
  %v210 = vpop.permute.xlu0 %209
  %211 = vrot.lane.b32.xlu0 %v132, 64
  %v212 = vpop.permute.xlu0 %211
  %215 = vmatprep.subr.mxu0 0.0
  %216 = vmatpush1.msra.mxu0 %v210
  %217 = vmatprep.subr.mxu0 0.0
  %218 = vmatpush1.msra.mxu0 %v212
  %219 = vmatprep.subr.mxu0 0.0
  %220 = vmatpush1.msra.mxu0 0.0
  %221 = vmatprep.subr.mxu0 0.0
  %222 = vmatpush1.msra.mxu0 0.0
  %223 = vmatprep.subr.mxu0 0.0
  %224 = vmatpush1.msra.mxu0 0.0
  %225 = vmatprep.subr.mxu0 0.0
  %226 = vmatpush1.msra.mxu0 0.0
  %227 = vmatprep.subr.mxu0 0.0
  %228 = vmatpush1.msra.mxu0 0.0
  %229 = vmatprep.subr.mxu0 0.0
  %230 = vmatpush1.msra.mxu0 0.0
  %231 = vmatprep.subr.mxu0 0.0
  %232 = vmatpush1.msra.mxu0 0.0
  %233 = vmatprep.subr.mxu0 0.0
  %234 = vmatpush1.msra.mxu0 0.0
  %235 = vmatprep.subr.mxu0 0.0
  %236 = vmatpush1.msra.mxu0 0.0
  %237 = vmatprep.subr.mxu0 0.0
  %238 = vmatpush1.msra.mxu0 0.0
  %239 = vmatprep.subr.mxu0 0.0
  %240 = vmatpush1.msra.mxu0 0.0
  %241 = vmatprep.subr.mxu0 0.0
  %242 = vmatpush1.msra.mxu0 0.0
  %243 = vmatprep.subr.mxu0 0.0
  %244 = vmatpush1.msra.mxu0 0.0
  %245 = vmatprep.subr.mxu0 0.0
  %246 = vmatpush1.msra.mxu0 0.0
  %247 = vmatprep.subr.mxu0 0.0
  %248 = vmatpush1.msra.mxu0 0.0
  %249 = vmatprep.subr.mxu0 0.0
  %250 = vmatpush1.msra.mxu0 0.0
  %251 = vmatprep.subr.mxu0 0.0
  %252 = vmatpush1.msra.mxu0 0.0
  %253 = vmatprep.subr.mxu0 0.0
  %254 = vmatpush1.msra.mxu0 0.0
  %255 = vmatprep.subr.mxu0 0.0
  %256 = vmatpush1.msra.mxu0 0.0
  %257 = vmatprep.subr.mxu0 0.0
  %258 = vmatpush1.msra.mxu0 0.0
  %259 = vmatprep.subr.mxu0 0.0
  %260 = vmatpush1.msra.mxu0 0.0
  %261 = vmatprep.subr.mxu0 0.0
  %262 = vmatpush1.msra.mxu0 0.0
  %263 = vmatprep.subr.mxu0 0.0
  %264 = vmatpush1.msra.mxu0 0.0
  %265 = vmatprep.subr.mxu0 0.0
  %266 = vmatpush1.msra.mxu0 0.0
  %267 = vmatprep.subr.mxu0 0.0
  %268 = vmatpush1.msra.mxu0 0.0
  %269 = vmatprep.subr.mxu0 0.0
  %270 = vmatpush1.msra.mxu0 0.0
  %271 = vmatprep.subr.mxu0 0.0
  %272 = vmatpush1.msra.mxu0 0.0
  %273 = vmatprep.subr.mxu0 0.0
  %274 = vmatpush1.msra.mxu0 0.0
  %275 = vmatprep.subr.mxu0 0.0
  %276 = vmatpush1.msra.mxu0 0.0
  %277 = vmatprep.subr.mxu0 0.0
  %278 = vmatpush1.msra.mxu0 0.0
  %279 = vmatprep.mubr.f32.mxu0 0.0
  %280 = vmatmul.mubr.f32.gmra.mrb[0].mxu0 %v135
  %v281 = vpop.f32.mrb[0].mxu0
  %v282 = vadd.f32 0.0, %v281
  %v283 = vpop.f32.mrb[0].mxu0
  %284 = vdwg.mxu0
  %v285 = vld [vmem:[#allocation2] sm:$0x3]
  %v286 = vadd.f32 %v285, %v204
  %v287 = vxor.u32 %v286, 2147483648
  %v288 = vmul.f32 %v287, 1.442695
  %v289 = vpow.pop %v288
  %v290 = vadd.f32 %v289, 1.0
  %v291 = vrcp.pop %v290
  %v292 = vmul.f32 1.0, %v291
  %v293 = vtanh.pop %v286
  %v294 = vmul.f32 %v292, 0.0
  %296 = vrot.lane.b32.xlu0 %v293, 96
  %v297 = vpop.permute.xlu0 %296
  %v299 = vmul.f32 %v292, %v297
  %301 = vrot.lane.b32.xlu0 %v299, 16
  %v302 = vpop.permute.xlu0 %301
  %v304 = vadd.f32 %v294, %v302
  %v305 = vtanh.pop %v304
  %307 = vrot.lane.b32.xlu0 %v305, 32
  %v308 = vpop.permute.xlu0 %307
  %v310 = vmul.f32 %v292, %v308
  %v311 = vld [vmem:[#allocation2 + $0xe] sm:$0x3]
  %313 = vrot.lane.b32.xlu0 %v282, 64
  %v314 = vpop.permute.xlu0 %313
  %v316 = vadd.f32 %v311, %v314
  %v317 = vxor.u32 %v316, 2147483648
  %v318 = vmul.f32 %v317, 1.442695
  %v319 = vpow.pop %v318
  %v320 = vadd.f32 %v319, 1.0
  %v321 = vrcp.pop %v320
  %v322 = vmul.f32 1.0, %v321
  %v323 = vtanh.pop %v316
  %v324 = vmul.f32 %v322, 0.0
  %326 = vrot.lane.b32.xlu0 %v323, 96
  %v327 = vpop.permute.xlu0 %326
  %v329 = vmul.f32 %v322, %v327
  %331 = vrot.lane.b32.xlu0 %v329, 16
  %v332 = vpop.permute.xlu0 %331
  %v334 = vadd.f32 %v324, %v332
  %v335 = vtanh.pop %v334
  %337 = vrot.lane.b32.xlu0 %v335, 32
  %v338 = vpop.permute.xlu0 %337
  %v340 = vmul.f32 %v322, %v338
  %342 = vrot.lane.b32.xlu0 %v310, 80
  %v343 = vpop.permute.xlu0 %342
  %vm345 = vcmask 123904
  %346 = vst.msk [vmem:[#allocation3] sm:$0x3] %vm345, %v343
  %348 = vrot.lane.b32.xlu0 %v340, 16
  %v349 = vpop.permute.xlu0 %348
  %351 = vst.msk [vmem:[#allocation4 + $0xe] sm:$0x3] %vm345, %v349
  %v352 = vld [vmem:[%s2] sm:$0xff]
  %v353 = vld [vmem:[%s2 + $0x8] sm:$0xff]
  %v354 = vsel %vm133, %v343, 0
  %356 = vmatprep.subr.mxu0 0.0
  %357 = vmatpush1.msra.mxu0 %v352
  %358 = vmatprep.subr.mxu0 0.0
  %359 = vmatpush1.msra.mxu0 %v353
  %360 = vmatprep.subr.mxu0 0.0
  %361 = vmatpush1.msra.mxu0 0.0
  %362 = vmatprep.subr.mxu0 0.0
  %363 = vmatpush1.msra.mxu0 0.0
  %364 = vmatprep.subr.mxu0 0.0
  %365 = vmatpush1.msra.mxu0 0.0
  %366 = vmatprep.subr.mxu0 0.0
  %367 = vmatpush1.msra.mxu0 0.0
  %368 = vmatprep.subr.mxu0 0.0
  %369 = vmatpush1.msra.mxu0 0.0
  %370 = vmatprep.subr.mxu0 0.0
  %371 = vmatpush1.msra.mxu0 0.0
  %372 = vmatprep.subr.mxu0 0.0
  %373 = vmatpush1.msra.mxu0 0.0
  %374 = vmatprep.subr.mxu0 0.0
  %375 = vmatpush1.msra.mxu0 0.0
  %376 = vmatprep.subr.mxu0 0.0
  %377 = vmatpush1.msra.mxu0 0.0
  %378 = vmatprep.subr.mxu0 0.0
  %379 = vmatpush1.msra.mxu0 0.0
  %380 = vmatprep.subr.mxu0 0.0
  %381 = vmatpush1.msra.mxu0 0.0
  %382 = vmatprep.subr.mxu0 0.0
  %383 = vmatpush1.msra.mxu0 0.0
  %384 = vmatprep.subr.mxu0 0.0
  %385 = vmatpush1.msra.mxu0 0.0
  %386 = vmatprep.subr.mxu0 0.0
  %387 = vmatpush1.msra.mxu0 0.0
  %388 = vmatprep.subr.mxu0 0.0
  %389 = vmatpush1.msra.mxu0 0.0
  %390 = vmatprep.subr.mxu0 0.0
  %391 = vmatpush1.msra.mxu0 0.0
  %392 = vmatprep.subr.mxu0 0.0
  %393 = vmatpush1.msra.mxu0 0.0
  %394 = vmatprep.subr.mxu0 0.0
  %395 = vmatpush1.msra.mxu0 0.0
  %396 = vmatprep.subr.mxu0 0.0
  %397 = vmatpush1.msra.mxu0 0.0
  %398 = vmatprep.subr.mxu0 0.0
  %399 = vmatpush1.msra.mxu0 0.0
  %400 = vmatprep.subr.mxu0 0.0
  %401 = vmatpush1.msra.mxu0 0.0
  %402 = vmatprep.subr.mxu0 0.0
  %403 = vmatpush1.msra.mxu0 0.0
  %404 = vmatprep.subr.mxu0 0.0
  %405 = vmatpush1.msra.mxu0 0.0
  %406 = vmatprep.subr.mxu0 0.0
  %407 = vmatpush1.msra.mxu0 0.0
  %408 = vmatprep.subr.mxu0 0.0
  %409 = vmatpush1.msra.mxu0 0.0
  %410 = vmatprep.subr.mxu0 0.0
  %411 = vmatpush1.msra.mxu0 0.0
  %412 = vmatprep.subr.mxu0 0.0
  %413 = vmatpush1.msra.mxu0 0.0
  %414 = vmatprep.subr.mxu0 0.0
  %415 = vmatpush1.msra.mxu0 0.0
  %416 = vmatprep.subr.mxu0 0.0
  %417 = vmatpush1.msra.mxu0 0.0
  %418 = vmatprep.subr.mxu0 0.0
  %419 = vmatpush1.msra.mxu0 0.0
  %420 = vmatprep.mubr.f32.mxu0 0.0
  %421 = vmatmul.mubr.f32.gmra.mrb[0].mxu0 %v354
  %v422 = vpop.f32.mrb[0].mxu0
  %v423 = vadd.f32 0.0, %v422
  %v424 = vpop.f32.mrb[0].mxu0
  %425 = vdwg.mxu0
  %428 = vrot.lane.b32.xlu0 %v352, 64
  %v429 = vpop.permute.xlu0 %428
  %430 = vrot.lane.b32.xlu0 %v353, 64
  %v431 = vpop.permute.xlu0 %430
  %v434 = vsel %vm133, %v349, 0
  %436 = vmatprep.subr.mxu0 0.0
  %437 = vmatpush1.msra.mxu0 %v429
  %438 = vmatprep.subr.mxu0 0.0
  %439 = vmatpush1.msra.mxu0 %v431
  %440 = vmatprep.subr.mxu0 0.0
  %441 = vmatpush1.msra.mxu0 0.0
  %442 = vmatprep.subr.mxu0 0.0
  %443 = vmatpush1.msra.mxu0 0.0
  %444 = vmatprep.subr.mxu0 0.0
  %445 = vmatpush1.msra.mxu0 0.0
  %446 = vmatprep.subr.mxu0 0.0
  %447 = vmatpush1.msra.mxu0 0.0
  %448 = vmatprep.subr.mxu0 0.0
  %449 = vmatpush1.msra.mxu0 0.0
  %450 = vmatprep.subr.mxu0 0.0
  %451 = vmatpush1.msra.mxu0 0.0
  %452 = vmatprep.subr.mxu0 0.0
  %453 = vmatpush1.msra.mxu0 0.0
  %454 = vmatprep.subr.mxu0 0.0
  %455 = vmatpush1.msra.mxu0 0.0
  %456 = vmatprep.subr.mxu0 0.0
  %457 = vmatpush1.msra.mxu0 0.0
  %458 = vmatprep.subr.mxu0 0.0
  %459 = vmatpush1.msra.mxu0 0.0
  %460 = vmatprep.subr.mxu0 0.0
  %461 = vmatpush1.msra.mxu0 0.0
  %462 = vmatprep.subr.mxu0 0.0
  %463 = vmatpush1.msra.mxu0 0.0
  %464 = vmatprep.subr.mxu0 0.0
  %465 = vmatpush1.msra.mxu0 0.0
  %466 = vmatprep.subr.mxu0 0.0
  %467 = vmatpush1.msra.mxu0 0.0
  %468 = vmatprep.subr.mxu0 0.0
  %469 = vmatpush1.msra.mxu0 0.0
  %470 = vmatprep.subr.mxu0 0.0
  %471 = vmatpush1.msra.mxu0 0.0
  %472 = vmatprep.subr.mxu0 0.0
  %473 = vmatpush1.msra.mxu0 0.0
  %474 = vmatprep.subr.mxu0 0.0
  %475 = vmatpush1.msra.mxu0 0.0
  %476 = vmatprep.subr.mxu0 0.0
  %477 = vmatpush1.msra.mxu0 0.0
  %478 = vmatprep.subr.mxu0 0.0
  %479 = vmatpush1.msra.mxu0 0.0
  %480 = vmatprep.subr.mxu0 0.0
  %481 = vmatpush1.msra.mxu0 0.0
  %482 = vmatprep.subr.mxu0 0.0
  %483 = vmatpush1.msra.mxu0 0.0
  %484 = vmatprep.subr.mxu0 0.0
  %485 = vmatpush1.msra.mxu0 0.0
  %486 = vmatprep.subr.mxu0 0.0
  %487 = vmatpush1.msra.mxu0 0.0
  %488 = vmatprep.subr.mxu0 0.0
  %489 = vmatpush1.msra.mxu0 0.0
  %490 = vmatprep.subr.mxu0 0.0
  %491 = vmatpush1.msra.mxu0 0.0
  %492 = vmatprep.subr.mxu0 0.0
  %493 = vmatpush1.msra.mxu0 0.0
  %494 = vmatprep.subr.mxu0 0.0
  %495 = vmatpush1.msra.mxu0 0.0
  %496 = vmatprep.subr.mxu0 0.0
  %497 = vmatpush1.msra.mxu0 0.0
  %498 = vmatprep.subr.mxu0 0.0
  %499 = vmatpush1.msra.mxu0 0.0
  %500 = vmatprep.mubr.f32.mxu0 0.0
  %501 = vmatmul.mubr.f32.gmra.mrb[0].mxu0 %v434
  %v502 = vpop.f32.mrb[0].mxu0
  %v503 = vadd.f32 0.0, %v502
  %v504 = vpop.f32.mrb[0].mxu0
  %505 = vdwg.mxu0
  %v506 = vld [vmem:[#allocation2 + $0x2] sm:$0x3]
  %v507 = vadd.f32 %v506, %v423
  %v508 = vxor.u32 %v507, 2147483648
  %v509 = vmul.f32 %v508, 1.442695
  %v510 = vpow.pop %v509
  %v511 = vadd.f32 %v510, 1.0
  %v512 = vrcp.pop %v511
  %v513 = vmul.f32 1.0, %v512
  %v514 = vtanh.pop %v507
  %v515 = vmul.f32 %v513, %v304
  %517 = vrot.lane.b32.xlu0 %v514, 96
  %v518 = vpop.permute.xlu0 %517
  %v520 = vmul.f32 %v513, %v518
  %522 = vrot.lane.b32.xlu0 %v520, 16
  %v523 = vpop.permute.xlu0 %522
  %v525 = vadd.f32 %v515, %v523
  %v526 = vtanh.pop %v525
  %528 = vrot.lane.b32.xlu0 %v526, 32
  %v529 = vpop.permute.xlu0 %528
  %v531 = vmul.f32 %v513, %v529
  %v532 = vld [vmem:[#allocation2 + $0xc] sm:$0x3]
  %534 = vrot.lane.b32.xlu0 %v503, 64
  %v535 = vpop.permute.xlu0 %534
  %v537 = vadd.f32 %v532, %v535
  %v538 = vxor.u32 %v537, 2147483648
  %v539 = vmul.f32 %v538, 1.442695
  %v540 = vpow.pop %v539
  %v541 = vadd.f32 %v540, 1.0
  %v542 = vrcp.pop %v541
  %v543 = vmul.f32 1.0, %v542
  %v544 = vtanh.pop %v537
  %v545 = vmul.f32 %v543, %v334
  %547 = vrot.lane.b32.xlu0 %v544, 96
  %v548 = vpop.permute.xlu0 %547
  %v550 = vmul.f32 %v543, %v548
  %552 = vrot.lane.b32.xlu0 %v550, 16
  %v553 = vpop.permute.xlu0 %552
  %v555 = vadd.f32 %v545, %v553
  %v556 = vtanh.pop %v555
  %558 = vrot.lane.b32.xlu0 %v556, 32
  %v559 = vpop.permute.xlu0 %558
  %v561 = vmul.f32 %v543, %v559
  %563 = vrot.lane.b32.xlu0 %v531, 80
  %v564 = vpop.permute.xlu0 %563
  %566 = vst.msk [vmem:[#allocation3 + $0x2] sm:$0x3] %vm345, %v564
  %568 = vrot.lane.b32.xlu0 %v561, 16
  %v569 = vpop.permute.xlu0 %568
  %571 = vst.msk [vmem:[#allocation4 + $0xc] sm:$0x3] %vm345, %v569
  %v572 = vld [vmem:[%s2] sm:$0xff]
  %v573 = vld [vmem:[%s2 + $0x8] sm:$0xff]
  %v574 = vsel %vm133, %v564, 0
  %576 = vmatprep.subr.mxu0 0.0
  %577 = vmatpush1.msra.mxu0 %v572
  %578 = vmatprep.subr.mxu0 0.0
  %579 = vmatpush1.msra.mxu0 %v573
  %580 = vmatprep.subr.mxu0 0.0
  %581 = vmatpush1.msra.mxu0 0.0
  %582 = vmatprep.subr.mxu0 0.0
  %583 = vmatpush1.msra.mxu0 0.0
  %584 = vmatprep.subr.mxu0 0.0
  %585 = vmatpush1.msra.mxu0 0.0
  %586 = vmatprep.subr.mxu0 0.0
  %587 = vmatpush1.msra.mxu0 0.0
  %588 = vmatprep.subr.mxu0 0.0
  %589 = vmatpush1.msra.mxu0 0.0
  %590 = vmatprep.subr.mxu0 0.0
  %591 = vmatpush1.msra.mxu0 0.0
  %592 = vmatprep.subr.mxu0 0.0
  %593 = vmatpush1.msra.mxu0 0.0
  %594 = vmatprep.subr.mxu0 0.0
  %595 = vmatpush1.msra.mxu0 0.0
  %596 = vmatprep.subr.mxu0 0.0
  %597 = vmatpush1.msra.mxu0 0.0
  %598 = vmatprep.subr.mxu0 0.0
  %599 = vmatpush1.msra.mxu0 0.0
  %600 = vmatprep.subr.mxu0 0.0
  %601 = vmatpush1.msra.mxu0 0.0
  %602 = vmatprep.subr.mxu0 0.0
  %603 = vmatpush1.msra.mxu0 0.0
  %604 = vmatprep.subr.mxu0 0.0
  %605 = vmatpush1.msra.mxu0 0.0
  %606 = vmatprep.subr.mxu0 0.0
  %607 = vmatpush1.msra.mxu0 0.0
  %608 = vmatprep.subr.mxu0 0.0
  %609 = vmatpush1.msra.mxu0 0.0
  %610 = vmatprep.subr.mxu0 0.0
  %611 = vmatpush1.msra.mxu0 0.0
  %612 = vmatprep.subr.mxu0 0.0
  %613 = vmatpush1.msra.mxu0 0.0
  %614 = vmatprep.subr.mxu0 0.0
  %615 = vmatpush1.msra.mxu0 0.0
  %616 = vmatprep.subr.mxu0 0.0
  %617 = vmatpush1.msra.mxu0 0.0
  %618 = vmatprep.subr.mxu0 0.0
  %619 = vmatpush1.msra.mxu0 0.0
  %620 = vmatprep.subr.mxu0 0.0
  %621 = vmatpush1.msra.mxu0 0.0
  %622 = vmatprep.subr.mxu0 0.0
  %623 = vmatpush1.msra.mxu0 0.0
  %624 = vmatprep.subr.mxu0 0.0
  %625 = vmatpush1.msra.mxu0 0.0
  %626 = vmatprep.subr.mxu0 0.0
  %627 = vmatpush1.msra.mxu0 0.0
  %628 = vmatprep.subr.mxu0 0.0
  %629 = vmatpush1.msra.mxu0 0.0
  %630 = vmatprep.subr.mxu0 0.0
  %631 = vmatpush1.msra.mxu0 0.0
  %632 = vmatprep.subr.mxu0 0.0
  %633 = vmatpush1.msra.mxu0 0.0
  %634 = vmatprep.subr.mxu0 0.0
  %635 = vmatpush1.msra.mxu0 0.0
  %636 = vmatprep.subr.mxu0 0.0
  %637 = vmatpush1.msra.mxu0 0.0
  %638 = vmatprep.subr.mxu0 0.0
  %639 = vmatpush1.msra.mxu0 0.0
  %640 = vmatprep.mubr.f32.mxu0 0.0
  %641 = vmatmul.mubr.f32.gmra.mrb[0].mxu0 %v574
  %v642 = vpop.f32.mrb[0].mxu0
  %v643 = vadd.f32 0.0, %v642
  %v644 = vpop.f32.mrb[0].mxu0
  %645 = vdwg.mxu0
  %648 = vrot.lane.b32.xlu0 %v572, 64
  %v649 = vpop.permute.xlu0 %648
  %650 = vrot.lane.b32.xlu0 %v573, 64
  %v651 = vpop.permute.xlu0 %650
  %v654 = vsel %vm133, %v569, 0
  %656 = vmatprep.subr.mxu0 0.0
  %657 = vmatpush1.msra.mxu0 %v649
  %658 = vmatprep.subr.mxu0 0.0
  %659 = vmatpush1.msra.mxu0 %v651
  %660 = vmatprep.subr.mxu0 0.0
  %661 = vmatpush1.msra.mxu0 0.0
  %662 = vmatprep.subr.mxu0 0.0
  %663 = vmatpush1.msra.mxu0 0.0
  %664 = vmatprep.subr.mxu0 0.0
  %665 = vmatpush1.msra.mxu0 0.0
  %666 = vmatprep.subr.mxu0 0.0
  %667 = vmatpush1.msra.mxu0 0.0
  %668 = vmatprep.subr.mxu0 0.0
  %669 = vmatpush1.msra.mxu0 0.0
  %670 = vmatprep.subr.mxu0 0.0
  %671 = vmatpush1.msra.mxu0 0.0
  %672 = vmatprep.subr.mxu0 0.0
  %673 = vmatpush1.msra.mxu0 0.0
  %674 = vmatprep.subr.mxu0 0.0
  %675 = vmatpush1.msra.mxu0 0.0
  %676 = vmatprep.subr.mxu0 0.0
  %677 = vmatpush1.msra.mxu0 0.0
  %678 = vmatprep.subr.mxu0 0.0
  %679 = vmatpush1.msra.mxu0 0.0
  %680 = vmatprep.subr.mxu0 0.0
  %681 = vmatpush1.msra.mxu0 0.0
  %682 = vmatprep.subr.mxu0 0.0
  %683 = vmatpush1.msra.mxu0 0.0
  %684 = vmatprep.subr.mxu0 0.0
  %685 = vmatpush1.msra.mxu0 0.0
  %686 = vmatprep.subr.mxu0 0.0
  %687 = vmatpush1.msra.mxu0 0.0
  %688 = vmatprep.subr.mxu0 0.0
  %689 = vmatpush1.msra.mxu0 0.0
  %690 = vmatprep.subr.mxu0 0.0
  %691 = vmatpush1.msra.mxu0 0.0
  %692 = vmatprep.subr.mxu0 0.0
  %693 = vmatpush1.msra.mxu0 0.0
  %694 = vmatprep.subr.mxu0 0.0
  %695 = vmatpush1.msra.mxu0 0.0
  %696 = vmatprep.subr.mxu0 0.0
  %697 = vmatpush1.msra.mxu0 0.0
  %698 = vmatprep.subr.mxu0 0.0
  %699 = vmatpush1.msra.mxu0 0.0
  %700 = vmatprep.subr.mxu0 0.0
  %701 = vmatpush1.msra.mxu0 0.0
  %702 = vmatprep.subr.mxu0 0.0
  %703 = vmatpush1.msra.mxu0 0.0
  %704 = vmatprep.subr.mxu0 0.0
  %705 = vmatpush1.msra.mxu0 0.0
  %706 = vmatprep.subr.mxu0 0.0
  %707 = vmatpush1.msra.mxu0 0.0
  %708 = vmatprep.subr.mxu0 0.0
  %709 = vmatpush1.msra.mxu0 0.0
  %710 = vmatprep.subr.mxu0 0.0
  %711 = vmatpush1.msra.mxu0 0.0
  %712 = vmatprep.subr.mxu0 0.0
  %713 = vmatpush1.msra.mxu0 0.0
  %714 = vmatprep.subr.mxu0 0.0
  %715 = vmatpush1.msra.mxu0 0.0
  %716 = vmatprep.subr.mxu0 0.0
  %717 = vmatpush1.msra.mxu0 0.0
  %718 = vmatprep.subr.mxu0 0.0
  %719 = vmatpush1.msra.mxu0 0.0
  %720 = vmatprep.mubr.f32.mxu0 0.0
  %721 = vmatmul.mubr.f32.gmra.mrb[0].mxu0 %v654
  %v722 = vpop.f32.mrb[0].mxu0
  %v723 = vadd.f32 0.0, %v722
  %v724 = vpop.f32.mrb[0].mxu0
  %725 = vdwg.mxu0
  %v726 = vld [vmem:[#allocation2 + $0x4] sm:$0x3]
  %v727 = vadd.f32 %v726, %v643
  %v728 = vxor.u32 %v727, 2147483648
  %v729 = vmul.f32 %v728, 1.442695
  %v730 = vpow.pop %v729
  %v731 = vadd.f32 %v730, 1.0
  %v732 = vrcp.pop %v731
  %v733 = vmul.f32 1.0, %v732
  %v734 = vtanh.pop %v727
  %v735 = vmul.f32 %v733, %v525
  %737 = vrot.lane.b32.xlu0 %v734, 96
  %v738 = vpop.permute.xlu0 %737
  %v740 = vmul.f32 %v733, %v738
  %742 = vrot.lane.b32.xlu0 %v740, 16
  %v743 = vpop.permute.xlu0 %742
  %v745 = vadd.f32 %v735, %v743
  %v746 = vtanh.pop %v745
  %748 = vrot.lane.b32.xlu0 %v746, 32
  %v749 = vpop.permute.xlu0 %748
  %v751 = vmul.f32 %v733, %v749
  %v752 = vld [vmem:[#allocation2 + $0xa] sm:$0x3]
  %754 = vrot.lane.b32.xlu0 %v723, 64
  %v755 = vpop.permute.xlu0 %754
  %v757 = vadd.f32 %v752, %v755
  %v758 = vxor.u32 %v757, 2147483648
  %v759 = vmul.f32 %v758, 1.442695
  %v760 = vpow.pop %v759
  %v761 = vadd.f32 %v760, 1.0
  %v762 = vrcp.pop %v761
  %v763 = vmul.f32 1.0, %v762
  %v764 = vtanh.pop %v757
  %v765 = vmul.f32 %v763, %v555
  %767 = vrot.lane.b32.xlu0 %v764, 96
  %v768 = vpop.permute.xlu0 %767
  %v770 = vmul.f32 %v763, %v768
  %772 = vrot.lane.b32.xlu0 %v770, 16
  %v773 = vpop.permute.xlu0 %772
  %v775 = vadd.f32 %v765, %v773
  %v776 = vtanh.pop %v775
  %778 = vrot.lane.b32.xlu0 %v776, 32
  %v779 = vpop.permute.xlu0 %778
  %v781 = vmul.f32 %v763, %v779
  %783 = vrot.lane.b32.xlu0 %v751, 80
  %v784 = vpop.permute.xlu0 %783
  %786 = vst.msk [vmem:[#allocation3 + $0x4] sm:$0x3] %vm345, %v784
  %788 = vrot.lane.b32.xlu0 %v781, 16
  %v789 = vpop.permute.xlu0 %788
  %791 = vst.msk [vmem:[#allocation4 + $0xa] sm:$0x3] %vm345, %v789
  %v792 = vld [vmem:[%s2] sm:$0xff]
  %v793 = vld [vmem:[%s2 + $0x8] sm:$0xff]
  %v794 = vsel %vm133, %v784, 0
  %796 = vmatprep.subr.mxu0 0.0
  %797 = vmatpush1.msra.mxu0 %v792
  %798 = vmatprep.subr.mxu0 0.0
  %799 = vmatpush1.msra.mxu0 %v793
  %800 = vmatprep.subr.mxu0 0.0
  %801 = vmatpush1.msra.mxu0 0.0
  %802 = vmatprep.subr.mxu0 0.0
  %803 = vmatpush1.msra.mxu0 0.0
  %804 = vmatprep.subr.mxu0 0.0
  %805 = vmatpush1.msra.mxu0 0.0
  %806 = vmatprep.subr.mxu0 0.0
  %807 = vmatpush1.msra.mxu0 0.0
  %808 = vmatprep.subr.mxu0 0.0
  %809 = vmatpush1.msra.mxu0 0.0
  %810 = vmatprep.subr.mxu0 0.0
  %811 = vmatpush1.msra.mxu0 0.0
  %812 = vmatprep.subr.mxu0 0.0
  %813 = vmatpush1.msra.mxu0 0.0
  %814 = vmatprep.subr.mxu0 0.0
  %815 = vmatpush1.msra.mxu0 0.0
  %816 = vmatprep.subr.mxu0 0.0
  %817 = vmatpush1.msra.mxu0 0.0
  %818 = vmatprep.subr.mxu0 0.0
  %819 = vmatpush1.msra.mxu0 0.0
  %820 = vmatprep.subr.mxu0 0.0
  %821 = vmatpush1.msra.mxu0 0.0
  %822 = vmatprep.subr.mxu0 0.0
  %823 = vmatpush1.msra.mxu0 0.0
  %824 = vmatprep.subr.mxu0 0.0
  %825 = vmatpush1.msra.mxu0 0.0
  %826 = vmatprep.subr.mxu0 0.0
  %827 = vmatpush1.msra.mxu0 0.0
  %828 = vmatprep.subr.mxu0 0.0
  %829 = vmatpush1.msra.mxu0 0.0
  %830 = vmatprep.subr.mxu0 0.0
  %831 = vmatpush1.msra.mxu0 0.0
  %832 = vmatprep.subr.mxu0 0.0
  %833 = vmatpush1.msra.mxu0 0.0
  %834 = vmatprep.subr.mxu0 0.0
  %835 = vmatpush1.msra.mxu0 0.0
  %836 = vmatprep.subr.mxu0 0.0
  %837 = vmatpush1.msra.mxu0 0.0
  %838 = vmatprep.subr.mxu0 0.0
  %839 = vmatpush1.msra.mxu0 0.0
  %840 = vmatprep.subr.mxu0 0.0
  %841 = vmatpush1.msra.mxu0 0.0
  %842 = vmatprep.subr.mxu0 0.0
  %843 = vmatpush1.msra.mxu0 0.0
  %844 = vmatprep.subr.mxu0 0.0
  %845 = vmatpush1.msra.mxu0 0.0
  %846 = vmatprep.subr.mxu0 0.0
  %847 = vmatpush1.msra.mxu0 0.0
  %848 = vmatprep.subr.mxu0 0.0
  %849 = vmatpush1.msra.mxu0 0.0
  %850 = vmatprep.subr.mxu0 0.0
  %851 = vmatpush1.msra.mxu0 0.0
  %852 = vmatprep.subr.mxu0 0.0
  %853 = vmatpush1.msra.mxu0 0.0
  %854 = vmatprep.subr.mxu0 0.0
  %855 = vmatpush1.msra.mxu0 0.0
  %856 = vmatprep.subr.mxu0 0.0
  %857 = vmatpush1.msra.mxu0 0.0
  %858 = vmatprep.subr.mxu0 0.0
  %859 = vmatpush1.msra.mxu0 0.0
  %860 = vmatprep.mubr.f32.mxu0 0.0
  %861 = vmatmul.mubr.f32.gmra.mrb[0].mxu0 %v794
  %v862 = vpop.f32.mrb[0].mxu0
  %v863 = vadd.f32 0.0, %v862
  %v864 = vpop.f32.mrb[0].mxu0
  %865 = vdwg.mxu0
  %868 = vrot.lane.b32.xlu0 %v792, 64
  %v869 = vpop.permute.xlu0 %868
  %870 = vrot.lane.b32.xlu0 %v793, 64
  %v871 = vpop.permute.xlu0 %870
  %v874 = vsel %vm133, %v789, 0
  %876 = vmatprep.subr.mxu0 0.0
  %877 = vmatpush1.msra.mxu0 %v869
  %878 = vmatprep.subr.mxu0 0.0
  %879 = vmatpush1.msra.mxu0 %v871
  %880 = vmatprep.subr.mxu0 0.0
  %881 = vmatpush1.msra.mxu0 0.0
  %882 = vmatprep.subr.mxu0 0.0
  %883 = vmatpush1.msra.mxu0 0.0
  %884 = vmatprep.subr.mxu0 0.0
  %885 = vmatpush1.msra.mxu0 0.0
  %886 = vmatprep.subr.mxu0 0.0
  %887 = vmatpush1.msra.mxu0 0.0
  %888 = vmatprep.subr.mxu0 0.0
  %889 = vmatpush1.msra.mxu0 0.0
  %890 = vmatprep.subr.mxu0 0.0
  %891 = vmatpush1.msra.mxu0 0.0
  %892 = vmatprep.subr.mxu0 0.0
  %893 = vmatpush1.msra.mxu0 0.0
  %894 = vmatprep.subr.mxu0 0.0
  %895 = vmatpush1.msra.mxu0 0.0
  %896 = vmatprep.subr.mxu0 0.0
  %897 = vmatpush1.msra.mxu0 0.0
  %898 = vmatprep.subr.mxu0 0.0
  %899 = vmatpush1.msra.mxu0 0.0
  %900 = vmatprep.subr.mxu0 0.0
  %901 = vmatpush1.msra.mxu0 0.0
  %902 = vmatprep.subr.mxu0 0.0
  %903 = vmatpush1.msra.mxu0 0.0
  %904 = vmatprep.subr.mxu0 0.0
  %905 = vmatpush1.msra.mxu0 0.0
  %906 = vmatprep.subr.mxu0 0.0
  %907 = vmatpush1.msra.mxu0 0.0
  %908 = vmatprep.subr.mxu0 0.0
  %909 = vmatpush1.msra.mxu0 0.0
  %910 = vmatprep.subr.mxu0 0.0
  %911 = vmatpush1.msra.mxu0 0.0
  %912 = vmatprep.subr.mxu0 0.0
  %913 = vmatpush1.msra.mxu0 0.0
  %914 = vmatprep.subr.mxu0 0.0
  %915 = vmatpush1.msra.mxu0 0.0
  %916 = vmatprep.subr.mxu0 0.0
  %917 = vmatpush1.msra.mxu0 0.0
  %918 = vmatprep.subr.mxu0 0.0
  %919 = vmatpush1.msra.mxu0 0.0
  %920 = vmatprep.subr.mxu0 0.0
  %921 = vmatpush1.msra.mxu0 0.0
  %922 = vmatprep.subr.mxu0 0.0
  %923 = vmatpush1.msra.mxu0 0.0
  %924 = vmatprep.subr.mxu0 0.0
  %925 = vmatpush1.msra.mxu0 0.0
  %926 = vmatprep.subr.mxu0 0.0
  %927 = vmatpush1.msra.mxu0 0.0
  %928 = vmatprep.subr.mxu0 0.0
  %929 = vmatpush1.msra.mxu0 0.0
  %930 = vmatprep.subr.mxu0 0.0
  %931 = vmatpush1.msra.mxu0 0.0
  %932 = vmatprep.subr.mxu0 0.0
  %933 = vmatpush1.msra.mxu0 0.0
  %934 = vmatprep.subr.mxu0 0.0
  %935 = vmatpush1.msra.mxu0 0.0
  %936 = vmatprep.subr.mxu0 0.0
  %937 = vmatpush1.msra.mxu0 0.0
  %938 = vmatprep.subr.mxu0 0.0
  %939 = vmatpush1.msra.mxu0 0.0
  %940 = vmatprep.mubr.f32.mxu0 0.0
  %941 = vmatmul.mubr.f32.gmra.mrb[0].mxu0 %v874
  %v942 = vpop.f32.mrb[0].mxu0
  %v943 = vadd.f32 0.0, %v942
  %v944 = vpop.f32.mrb[0].mxu0
  %945 = vdwg.mxu0
  %v946 = vld [vmem:[#allocation2 + $0x6] sm:$0x3]
  %v947 = vadd.f32 %v946, %v863
  %v948 = vxor.u32 %v947, 2147483648
  %v949 = vmul.f32 %v948, 1.442695
  %v950 = vpow.pop %v949
  %v951 = vadd.f32 %v950, 1.0
  %v952 = vrcp.pop %v951
  %v953 = vmul.f32 1.0, %v952
  %v954 = vtanh.pop %v947
  %v955 = vmul.f32 %v953, %v745
  %957 = vrot.lane.b32.xlu0 %v954, 96
  %v958 = vpop.permute.xlu0 %957
  %v960 = vmul.f32 %v953, %v958
  %962 = vrot.lane.b32.xlu0 %v960, 16
  %v963 = vpop.permute.xlu0 %962
  %v965 = vadd.f32 %v955, %v963
  %v966 = vtanh.pop %v965
  %968 = vrot.lane.b32.xlu0 %v966, 32
  %v969 = vpop.permute.xlu0 %968
  %v971 = vmul.f32 %v953, %v969
  %v972 = vld [vmem:[#allocation2 + $0x8] sm:$0x3]
  %974 = vrot.lane.b32.xlu0 %v943, 64
  %v975 = vpop.permute.xlu0 %974
  %v977 = vadd.f32 %v972, %v975
  %v978 = vxor.u32 %v977, 2147483648
  %v979 = vmul.f32 %v978, 1.442695
  %v980 = vpow.pop %v979
  %v981 = vadd.f32 %v980, 1.0
  %v982 = vrcp.pop %v981
  %v983 = vmul.f32 1.0, %v982
  %v984 = vtanh.pop %v977
  %v985 = vmul.f32 %v983, %v775
  %987 = vrot.lane.b32.xlu0 %v984, 96
  %v988 = vpop.permute.xlu0 %987
  %v990 = vmul.f32 %v983, %v988
  %992 = vrot.lane.b32.xlu0 %v990, 16
  %v993 = vpop.permute.xlu0 %992
  %v995 = vadd.f32 %v985, %v993
  %v996 = vtanh.pop %v995
  %998 = vrot.lane.b32.xlu0 %v996, 32
  %v999 = vpop.permute.xlu0 %998
  %v1001 = vmul.f32 %v983, %v999
  %1003 = vrot.lane.b32.xlu0 %v971, 80
  %v1004 = vpop.permute.xlu0 %1003
  %1006 = vst.msk [vmem:[#allocation3 + $0x6] sm:$0x3] %vm345, %v1004
  %1008 = vrot.lane.b32.xlu0 %v1001, 16
  %v1009 = vpop.permute.xlu0 %1008
  %1011 = vst.msk [vmem:[#allocation4 + $0x8] sm:$0x3] %vm345, %v1009
  %v1012 = vld [vmem:[%s2] sm:$0xff]
  %v1013 = vld [vmem:[%s2 + $0x8] sm:$0xff]
  %v1014 = vsel %vm133, %v1004, 0
  %1016 = vmatprep.subr.mxu0 0.0
  %1017 = vmatpush1.msra.mxu0 %v1012
  %1018 = vmatprep.subr.mxu0 0.0
  %1019 = vmatpush1.msra.mxu0 %v1013
  %1020 = vmatprep.subr.mxu0 0.0
  %1021 = vmatpush1.msra.mxu0 0.0
  %1022 = vmatprep.subr.mxu0 0.0
  %1023 = vmatpush1.msra.mxu0 0.0
  %1024 = vmatprep.subr.mxu0 0.0
  %1025 = vmatpush1.msra.mxu0 0.0
  %1026 = vmatprep.subr.mxu0 0.0
  %1027 = vmatpush1.msra.mxu0 0.0
  %1028 = vmatprep.subr.mxu0 0.0
  %1029 = vmatpush1.msra.mxu0 0.0
  %1030 = vmatprep.subr.mxu0 0.0
  %1031 = vmatpush1.msra.mxu0 0.0
  %1032 = vmatprep.subr.mxu0 0.0
  %1033 = vmatpush1.msra.mxu0 0.0
  %1034 = vmatprep.subr.mxu0 0.0
  %1035 = vmatpush1.msra.mxu0 0.0
  %1036 = vmatprep.subr.mxu0 0.0
  %1037 = vmatpush1.msra.mxu0 0.0
  %1038 = vmatprep.subr.mxu0 0.0
  %1039 = vmatpush1.msra.mxu0 0.0
  %1040 = vmatprep.subr.mxu0 0.0
  %1041 = vmatpush1.msra.mxu0 0.0
  %1042 = vmatprep.subr.mxu0 0.0
  %1043 = vmatpush1.msra.mxu0 0.0
  %1044 = vmatprep.subr.mxu0 0.0
  %1045 = vmatpush1.msra.mxu0 0.0
  %1046 = vmatprep.subr.mxu0 0.0
  %1047 = vmatpush1.msra.mxu0 0.0
  %1048 = vmatprep.subr.mxu0 0.0
  %1049 = vmatpush1.msra.mxu0 0.0
  %1050 = vmatprep.subr.mxu0 0.0
  %1051 = vmatpush1.msra.mxu0 0.0
  %1052 = vmatprep.subr.mxu0 0.0
  %1053 = vmatpush1.msra.mxu0 0.0
  %1054 = vmatprep.subr.mxu0 0.0
  %1055 = vmatpush1.msra.mxu0 0.0
  %1056 = vmatprep.subr.mxu0 0.0
  %1057 = vmatpush1.msra.mxu0 0.0
  %1058 = vmatprep.subr.mxu0 0.0
  %1059 = vmatpush1.msra.mxu0 0.0
  %1060 = vmatprep.subr.mxu0 0.0
  %1061 = vmatpush1.msra.mxu0 0.0
  %1062 = vmatprep.subr.mxu0 0.0
  %1063 = vmatpush1.msra.mxu0 0.0
  %1064 = vmatprep.subr.mxu0 0.0
  %1065 = vmatpush1.msra.mxu0 0.0
  %1066 = vmatprep.subr.mxu0 0.0
  %1067 = vmatpush1.msra.mxu0 0.0
  %1068 = vmatprep.subr.mxu0 0.0
  %1069 = vmatpush1.msra.mxu0 0.0
  %1070 = vmatprep.subr.mxu0 0.0
  %1071 = vmatpush1.msra.mxu0 0.0
  %1072 = vmatprep.subr.mxu0 0.0
  %1073 = vmatpush1.msra.mxu0 0.0
  %1074 = vmatprep.subr.mxu0 0.0
  %1075 = vmatpush1.msra.mxu0 0.0
  %1076 = vmatprep.subr.mxu0 0.0
  %1077 = vmatpush1.msra.mxu0 0.0
  %1078 = vmatprep.subr.mxu0 0.0
  %1079 = vmatpush1.msra.mxu0 0.0
  %1080 = vmatprep.mubr.f32.mxu0 0.0
  %1081 = vmatmul.mubr.f32.gmra.mrb[0].mxu0 %v1014
  %v1082 = vpop.f32.mrb[0].mxu0
  %v1083 = vadd.f32 0.0, %v1082
  %v1084 = vpop.f32.mrb[0].mxu0
  %1085 = vdwg.mxu0
  %1088 = vrot.lane.b32.xlu0 %v1012, 64
  %v1089 = vpop.permute.xlu0 %1088
  %1090 = vrot.lane.b32.xlu0 %v1013, 64
  %v1091 = vpop.permute.xlu0 %1090
  %v1094 = vsel %vm133, %v1009, 0
  %1096 = vmatprep.subr.mxu0 0.0
  %1097 = vmatpush1.msra.mxu0 %v1089
  %1098 = vmatprep.subr.mxu0 0.0
  %1099 = vmatpush1.msra.mxu0 %v1091
  %1100 = vmatprep.subr.mxu0 0.0
  %1101 = vmatpush1.msra.mxu0 0.0
  %1102 = vmatprep.subr.mxu0 0.0
  %1103 = vmatpush1.msra.mxu0 0.0
  %1104 = vmatprep.subr.mxu0 0.0
  %1105 = vmatpush1.msra.mxu0 0.0
  %1106 = vmatprep.subr.mxu0 0.0
  %1107 = vmatpush1.msra.mxu0 0.0
  %1108 = vmatprep.subr.mxu0 0.0
  %1109 = vmatpush1.msra.mxu0 0.0
  %1110 = vmatprep.subr.mxu0 0.0
  %1111 = vmatpush1.msra.mxu0 0.0
  %1112 = vmatprep.subr.mxu0 0.0
  %1113 = vmatpush1.msra.mxu0 0.0
  %1114 = vmatprep.subr.mxu0 0.0
  %1115 = vmatpush1.msra.mxu0 0.0
  %1116 = vmatprep.subr.mxu0 0.0
  %1117 = vmatpush1.msra.mxu0 0.0
  %1118 = vmatprep.subr.mxu0 0.0
  %1119 = vmatpush1.msra.mxu0 0.0
  %1120 = vmatprep.subr.mxu0 0.0
  %1121 = vmatpush1.msra.mxu0 0.0
  %1122 = vmatprep.subr.mxu0 0.0
  %1123 = vmatpush1.msra.mxu0 0.0
  %1124 = vmatprep.subr.mxu0 0.0
  %1125 = vmatpush1.msra.mxu0 0.0
  %1126 = vmatprep.subr.mxu0 0.0
  %1127 = vmatpush1.msra.mxu0 0.0
  %1128 = vmatprep.subr.mxu0 0.0
  %1129 = vmatpush1.msra.mxu0 0.0
  %1130 = vmatprep.subr.mxu0 0.0
  %1131 = vmatpush1.msra.mxu0 0.0
  %1132 = vmatprep.subr.mxu0 0.0
  %1133 = vmatpush1.msra.mxu0 0.0
  %1134 = vmatprep.subr.mxu0 0.0
  %1135 = vmatpush1.msra.mxu0 0.0
  %1136 = vmatprep.subr.mxu0 0.0
  %1137 = vmatpush1.msra.mxu0 0.0
  %1138 = vmatprep.subr.mxu0 0.0
  %1139 = vmatpush1.msra.mxu0 0.0
  %1140 = vmatprep.subr.mxu0 0.0
  %1141 = vmatpush1.msra.mxu0 0.0
  %1142 = vmatprep.subr.mxu0 0.0
  %1143 = vmatpush1.msra.mxu0 0.0
  %1144 = vmatprep.subr.mxu0 0.0
  %1145 = vmatpush1.msra.mxu0 0.0
  %1146 = vmatprep.subr.mxu0 0.0
  %1147 = vmatpush1.msra.mxu0 0.0
  %1148 = vmatprep.subr.mxu0 0.0
  %1149 = vmatpush1.msra.mxu0 0.0
  %1150 = vmatprep.subr.mxu0 0.0
  %1151 = vmatpush1.msra.mxu0 0.0
  %1152 = vmatprep.subr.mxu0 0.0
  %1153 = vmatpush1.msra.mxu0 0.0
  %1154 = vmatprep.subr.mxu0 0.0
  %1155 = vmatpush1.msra.mxu0 0.0
  %1156 = vmatprep.subr.mxu0 0.0
  %1157 = vmatpush1.msra.mxu0 0.0
  %1158 = vmatprep.subr.mxu0 0.0
  %1159 = vmatpush1.msra.mxu0 0.0
  %1160 = vmatprep.mubr.f32.mxu0 0.0
  %1161 = vmatmul.mubr.f32.gmra.mrb[0].mxu0 %v1094
  %v1162 = vpop.f32.mrb[0].mxu0
  %v1163 = vadd.f32 0.0, %v1162
  %v1164 = vpop.f32.mrb[0].mxu0
  %1165 = vdwg.mxu0
  %v1166 = vld [vmem:[#allocation2 + $0x8] sm:$0x3]
  %v1167 = vadd.f32 %v1166, %v1083
  %v1168 = vxor.u32 %v1167, 2147483648
  %v1169 = vmul.f32 %v1168, 1.442695
  %v1170 = vpow.pop %v1169
  %v1171 = vadd.f32 %v1170, 1.0
  %v1172 = vrcp.pop %v1171
  %v1173 = vmul.f32 1.0, %v1172
  %v1174 = vtanh.pop %v1167
  %v1175 = vmul.f32 %v1173, %v965
  %1177 = vrot.lane.b32.xlu0 %v1174, 96
  %v1178 = vpop.permute.xlu0 %1177
  %v1180 = vmul.f32 %v1173, %v1178
  %1182 = vrot.lane.b32.xlu0 %v1180, 16
  %v1183 = vpop.permute.xlu0 %1182
  %v1185 = vadd.f32 %v1175, %v1183
  %v1186 = vtanh.pop %v1185
  %1188 = vrot.lane.b32.xlu0 %v1186, 32
  %v1189 = vpop.permute.xlu0 %1188
  %v1191 = vmul.f32 %v1173, %v1189
  %v1192 = vld [vmem:[#allocation2 + $0x6] sm:$0x3]
  %1194 = vrot.lane.b32.xlu0 %v1163, 64
  %v1195 = vpop.permute.xlu0 %1194
  %v1197 = vadd.f32 %v1192, %v1195
  %v1198 = vxor.u32 %v1197, 2147483648
  %v1199 = vmul.f32 %v1198, 1.442695
  %v1200 = vpow.pop %v1199
  %v1201 = vadd.f32 %v1200, 1.0
  %v1202 = vrcp.pop %v1201
  %v1203 = vmul.f32 1.0, %v1202
  %v1204 = vtanh.pop %v1197
  %v1205 = vmul.f32 %v1203, %v995
  %1207 = vrot.lane.b32.xlu0 %v1204, 96
  %v1208 = vpop.permute.xlu0 %1207
  %v1210 = vmul.f32 %v1203, %v1208
  %1212 = vrot.lane.b32.xlu0 %v1210, 16
  %v1213 = vpop.permute.xlu0 %1212
  %v1215 = vadd.f32 %v1205, %v1213
  %v1216 = vtanh.pop %v1215
  %1218 = vrot.lane.b32.xlu0 %v1216, 32
  %v1219 = vpop.permute.xlu0 %1218
  %v1221 = vmul.f32 %v1203, %v1219
  %1223 = vrot.lane.b32.xlu0 %v1191, 80
  %v1224 = vpop.permute.xlu0 %1223
  %1226 = vst.msk [vmem:[#allocation3 + $0x8] sm:$0x3] %vm345, %v1224
  %1228 = vrot.lane.b32.xlu0 %v1221, 16
  %v1229 = vpop.permute.xlu0 %1228
  %1231 = vst.msk [vmem:[#allocation4 + $0x6] sm:$0x3] %vm345, %v1229
  %v1232 = vld [vmem:[%s2] sm:$0xff]
  %v1233 = vld [vmem:[%s2 + $0x8] sm:$0xff]
  %v1234 = vsel %vm133, %v1224, 0
  %1236 = vmatprep.subr.mxu0 0.0
  %1237 = vmatpush1.msra.mxu0 %v1232
  %1238 = vmatprep.subr.mxu0 0.0
  %1239 = vmatpush1.msra.mxu0 %v1233
  %1240 = vmatprep.subr.mxu0 0.0
  %1241 = vmatpush1.msra.mxu0 0.0
  %1242 = vmatprep.subr.mxu0 0.0
  %1243 = vmatpush1.msra.mxu0 0.0
  %1244 = vmatprep.subr.mxu0 0.0
  %1245 = vmatpush1.msra.mxu0 0.0
  %1246 = vmatprep.subr.mxu0 0.0
  %1247 = vmatpush1.msra.mxu0 0.0
  %1248 = vmatprep.subr.mxu0 0.0
  %1249 = vmatpush1.msra.mxu0 0.0
  %1250 = vmatprep.subr.mxu0 0.0
  %1251 = vmatpush1.msra.mxu0 0.0
  %1252 = vmatprep.subr.mxu0 0.0
  %1253 = vmatpush1.msra.mxu0 0.0
  %1254 = vmatprep.subr.mxu0 0.0
  %1255 = vmatpush1.msra.mxu0 0.0
  %1256 = vmatprep.subr.mxu0 0.0
  %1257 = vmatpush1.msra.mxu0 0.0
  %1258 = vmatprep.subr.mxu0 0.0
  %1259 = vmatpush1.msra.mxu0 0.0
  %1260 = vmatprep.subr.mxu0 0.0
  %1261 = vmatpush1.msra.mxu0 0.0
  %1262 = vmatprep.subr.mxu0 0.0
  %1263 = vmatpush1.msra.mxu0 0.0
  %1264 = vmatprep.subr.mxu0 0.0
  %1265 = vmatpush1.msra.mxu0 0.0
  %1266 = vmatprep.subr.mxu0 0.0
  %1267 = vmatpush1.msra.mxu0 0.0
  %1268 = vmatprep.subr.mxu0 0.0
  %1269 = vmatpush1.msra.mxu0 0.0
  %1270 = vmatprep.subr.mxu0 0.0
  %1271 = vmatpush1.msra.mxu0 0.0
  %1272 = vmatprep.subr.mxu0 0.0
  %1273 = vmatpush1.msra.mxu0 0.0
  %1274 = vmatprep.subr.mxu0 0.0
  %1275 = vmatpush1.msra.mxu0 0.0
  %1276 = vmatprep.subr.mxu0 0.0
  %1277 = vmatpush1.msra.mxu0 0.0
  %1278 = vmatprep.subr.mxu0 0.0
  %1279 = vmatpush1.msra.mxu0 0.0
  %1280 = vmatprep.subr.mxu0 0.0
  %1281 = vmatpush1.msra.mxu0 0.0
  %1282 = vmatprep.subr.mxu0 0.0
  %1283 = vmatpush1.msra.mxu0 0.0
  %1284 = vmatprep.subr.mxu0 0.0
  %1285 = vmatpush1.msra.mxu0 0.0
  %1286 = vmatprep.subr.mxu0 0.0
  %1287 = vmatpush1.msra.mxu0 0.0
  %1288 = vmatprep.subr.mxu0 0.0
  %1289 = vmatpush1.msra.mxu0 0.0
  %1290 = vmatprep.subr.mxu0 0.0
  %1291 = vmatpush1.msra.mxu0 0.0
  %1292 = vmatprep.subr.mxu0 0.0
  %1293 = vmatpush1.msra.mxu0 0.0
  %1294 = vmatprep.subr.mxu0 0.0
  %1295 = vmatpush1.msra.mxu0 0.0
  %1296 = vmatprep.subr.mxu0 0.0
  %1297 = vmatpush1.msra.mxu0 0.0
  %1298 = vmatprep.subr.mxu0 0.0
  %1299 = vmatpush1.msra.mxu0 0.0
  %1300 = vmatprep.mubr.f32.mxu0 0.0
  %1301 = vmatmul.mubr.f32.gmra.mrb[0].mxu0 %v1234
  %v1302 = vpop.f32.mrb[0].mxu0
  %v1303 = vadd.f32 0.0, %v1302
  %v1304 = vpop.f32.mrb[0].mxu0
  %1305 = vdwg.mxu0
  %1308 = vrot.lane.b32.xlu0 %v1232, 64
  %v1309 = vpop.permute.xlu0 %1308
  %1310 = vrot.lane.b32.xlu0 %v1233, 64
  %v1311 = vpop.permute.xlu0 %1310
  %v1314 = vsel %vm133, %v1229, 0
  %1316 = vmatprep.subr.mxu0 0.0
  %1317 = vmatpush1.msra.mxu0 %v1309
  %1318 = vmatprep.subr.mxu0 0.0
  %1319 = vmatpush1.msra.mxu0 %v1311
  %1320 = vmatprep.subr.mxu0 0.0
  %1321 = vmatpush1.msra.mxu0 0.0
  %1322 = vmatprep.subr.mxu0 0.0
  %1323 = vmatpush1.msra.mxu0 0.0
  %1324 = vmatprep.subr.mxu0 0.0
  %1325 = vmatpush1.msra.mxu0 0.0
  %1326 = vmatprep.subr.mxu0 0.0
  %1327 = vmatpush1.msra.mxu0 0.0
  %1328 = vmatprep.subr.mxu0 0.0
  %1329 = vmatpush1.msra.mxu0 0.0
  %1330 = vmatprep.subr.mxu0 0.0
  %1331 = vmatpush1.msra.mxu0 0.0
  %1332 = vmatprep.subr.mxu0 0.0
  %1333 = vmatpush1.msra.mxu0 0.0
  %1334 = vmatprep.subr.mxu0 0.0
  %1335 = vmatpush1.msra.mxu0 0.0
  %1336 = vmatprep.subr.mxu0 0.0
  %1337 = vmatpush1.msra.mxu0 0.0
  %1338 = vmatprep.subr.mxu0 0.0
  %1339 = vmatpush1.msra.mxu0 0.0
  %1340 = vmatprep.subr.mxu0 0.0
  %1341 = vmatpush1.msra.mxu0 0.0
  %1342 = vmatprep.subr.mxu0 0.0
  %1343 = vmatpush1.msra.mxu0 0.0
  %1344 = vmatprep.subr.mxu0 0.0
  %1345 = vmatpush1.msra.mxu0 0.0
  %1346 = vmatprep.subr.mxu0 0.0
  %1347 = vmatpush1.msra.mxu0 0.0
  %1348 = vmatprep.subr.mxu0 0.0
  %1349 = vmatpush1.msra.mxu0 0.0
  %1350 = vmatprep.subr.mxu0 0.0
  %1351 = vmatpush1.msra.mxu0 0.0
  %1352 = vmatprep.subr.mxu0 0.0
  %1353 = vmatpush1.msra.mxu0 0.0
  %1354 = vmatprep.subr.mxu0 0.0
  %1355 = vmatpush1.msra.mxu0 0.0
  %1356 = vmatprep.subr.mxu0 0.0
  %1357 = vmatpush1.msra.mxu0 0.0
  %1358 = vmatprep.subr.mxu0 0.0
  %1359 = vmatpush1.msra.mxu0 0.0
  %1360 = vmatprep.subr.mxu0 0.0
  %1361 = vmatpush1.msra.mxu0 0.0
  %1362 = vmatprep.subr.mxu0 0.0
  %1363 = vmatpush1.msra.mxu0 0.0
  %1364 = vmatprep.subr.mxu0 0.0
  %1365 = vmatpush1.msra.mxu0 0.0
  %1366 = vmatprep.subr.mxu0 0.0
  %1367 = vmatpush1.msra.mxu0 0.0
  %1368 = vmatprep.subr.mxu0 0.0
  %1369 = vmatpush1.msra.mxu0 0.0
  %1370 = vmatprep.subr.mxu0 0.0
  %1371 = vmatpush1.msra.mxu0 0.0
  %1372 = vmatprep.subr.mxu0 0.0
  %1373 = vmatpush1.msra.mxu0 0.0
  %1374 = vmatprep.subr.mxu0 0.0
  %1375 = vmatpush1.msra.mxu0 0.0
  %1376 = vmatprep.subr.mxu0 0.0
  %1377 = vmatpush1.msra.mxu0 0.0
  %1378 = vmatprep.subr.mxu0 0.0
  %1379 = vmatpush1.msra.mxu0 0.0
  %1380 = vmatprep.mubr.f32.mxu0 0.0
  %1381 = vmatmul.mubr.f32.gmra.mrb[0].mxu0 %v1314
  %v1382 = vpop.f32.mrb[0].mxu0
  %v1383 = vadd.f32 0.0, %v1382
  %v1384 = vpop.f32.mrb[0].mxu0
  %1385 = vdwg.mxu0
  %v1386 = vld [vmem:[#allocation2 + $0xa] sm:$0x3]
  %v1387 = vadd.f32 %v1386, %v1303
  %v1388 = vxor.u32 %v1387, 2147483648
  %v1389 = vmul.f32 %v1388, 1.442695
  %v1390 = vpow.pop %v1389
  %v1391 = vadd.f32 %v1390, 1.0
  %v1392 = vrcp.pop %v1391
  %v1393 = vmul.f32 1.0, %v1392
  %v1394 = vtanh.pop %v1387
  %v1395 = vmul.f32 %v1393, %v1185
  %1397 = vrot.lane.b32.xlu0 %v1394, 96
  %v1398 = vpop.permute.xlu0 %1397
  %v1400 = vmul.f32 %v1393, %v1398
  %1402 = vrot.lane.b32.xlu0 %v1400, 16
  %v1403 = vpop.permute.xlu0 %1402
  %v1405 = vadd.f32 %v1395, %v1403
  %v1406 = vtanh.pop %v1405
  %1408 = vrot.lane.b32.xlu0 %v1406, 32
  %v1409 = vpop.permute.xlu0 %1408
  %v1411 = vmul.f32 %v1393, %v1409
  %v1412 = vld [vmem:[#allocation2 + $0x4] sm:$0x3]
  %1414 = vrot.lane.b32.xlu0 %v1383, 64
  %v1415 = vpop.permute.xlu0 %1414
  %v1417 = vadd.f32 %v1412, %v1415
  %v1418 = vxor.u32 %v1417, 2147483648
  %v1419 = vmul.f32 %v1418, 1.442695
  %v1420 = vpow.pop %v1419
  %v1421 = vadd.f32 %v1420, 1.0
  %v1422 = vrcp.pop %v1421
  %v1423 = vmul.f32 1.0, %v1422
  %v1424 = vtanh.pop %v1417
  %v1425 = vmul.f32 %v1423, %v1215
  %1427 = vrot.lane.b32.xlu0 %v1424, 96
  %v1428 = vpop.permute.xlu0 %1427
  %v1430 = vmul.f32 %v1423, %v1428
  %1432 = vrot.lane.b32.xlu0 %v1430, 16
  %v1433 = vpop.permute.xlu0 %1432
  %v1435 = vadd.f32 %v1425, %v1433
  %v1436 = vtanh.pop %v1435
  %1438 = vrot.lane.b32.xlu0 %v1436, 32
  %v1439 = vpop.permute.xlu0 %1438
  %v1441 = vmul.f32 %v1423, %v1439
  %1443 = vrot.lane.b32.xlu0 %v1411, 80
  %v1444 = vpop.permute.xlu0 %1443
  %1446 = vst.msk [vmem:[#allocation3 + $0xa] sm:$0x3] %vm345, %v1444
  %1448 = vrot.lane.b32.xlu0 %v1441, 16
  %v1449 = vpop.permute.xlu0 %1448
  %1451 = vst.msk [vmem:[#allocation4 + $0x4] sm:$0x3] %vm345, %v1449
  %v1452 = vld [vmem:[%s2] sm:$0xff]
  %v1453 = vld [vmem:[%s2 + $0x8] sm:$0xff]
  %v1454 = vsel %vm133, %v1444, 0
  %1456 = vmatprep.subr.mxu0 0.0
  %1457 = vmatpush1.msra.mxu0 %v1452
  %1458 = vmatprep.subr.mxu0 0.0
  %1459 = vmatpush1.msra.mxu0 %v1453
  %1460 = vmatprep.subr.mxu0 0.0
  %1461 = vmatpush1.msra.mxu0 0.0
  %1462 = vmatprep.subr.mxu0 0.0
  %1463 = vmatpush1.msra.mxu0 0.0
  %1464 = vmatprep.subr.mxu0 0.0
  %1465 = vmatpush1.msra.mxu0 0.0
  %1466 = vmatprep.subr.mxu0 0.0
  %1467 = vmatpush1.msra.mxu0 0.0
  %1468 = vmatprep.subr.mxu0 0.0
  %1469 = vmatpush1.msra.mxu0 0.0
  %1470 = vmatprep.subr.mxu0 0.0
  %1471 = vmatpush1.msra.mxu0 0.0
  %1472 = vmatprep.subr.mxu0 0.0
  %1473 = vmatpush1.msra.mxu0 0.0
  %1474 = vmatprep.subr.mxu0 0.0
  %1475 = vmatpush1.msra.mxu0 0.0
  %1476 = vmatprep.subr.mxu0 0.0
  %1477 = vmatpush1.msra.mxu0 0.0
  %1478 = vmatprep.subr.mxu0 0.0
  %1479 = vmatpush1.msra.mxu0 0.0
  %1480 = vmatprep.subr.mxu0 0.0
  %1481 = vmatpush1.msra.mxu0 0.0
  %1482 = vmatprep.subr.mxu0 0.0
  %1483 = vmatpush1.msra.mxu0 0.0
  %1484 = vmatprep.subr.mxu0 0.0
  %1485 = vmatpush1.msra.mxu0 0.0
  %1486 = vmatprep.subr.mxu0 0.0
  %1487 = vmatpush1.msra.mxu0 0.0
  %1488 = vmatprep.subr.mxu0 0.0
  %1489 = vmatpush1.msra.mxu0 0.0
  %1490 = vmatprep.subr.mxu0 0.0
  %1491 = vmatpush1.msra.mxu0 0.0
  %1492 = vmatprep.subr.mxu0 0.0
  %1493 = vmatpush1.msra.mxu0 0.0
  %1494 = vmatprep.subr.mxu0 0.0
  %1495 = vmatpush1.msra.mxu0 0.0
  %1496 = vmatprep.subr.mxu0 0.0
  %1497 = vmatpush1.msra.mxu0 0.0
  %1498 = vmatprep.subr.mxu0 0.0
  %1499 = vmatpush1.msra.mxu0 0.0
  %1500 = vmatprep.subr.mxu0 0.0
  %1501 = vmatpush1.msra.mxu0 0.0
  %1502 = vmatprep.subr.mxu0 0.0
  %1503 = vmatpush1.msra.mxu0 0.0
  %1504 = vmatprep.subr.mxu0 0.0
  %1505 = vmatpush1.msra.mxu0 0.0
  %1506 = vmatprep.subr.mxu0 0.0
  %1507 = vmatpush1.msra.mxu0 0.0
  %1508 = vmatprep.subr.mxu0 0.0
  %1509 = vmatpush1.msra.mxu0 0.0
  %1510 = vmatprep.subr.mxu0 0.0
  %1511 = vmatpush1.msra.mxu0 0.0
  %1512 = vmatprep.subr.mxu0 0.0
  %1513 = vmatpush1.msra.mxu0 0.0
  %1514 = vmatprep.subr.mxu0 0.0
  %1515 = vmatpush1.msra.mxu0 0.0
  %1516 = vmatprep.subr.mxu0 0.0
  %1517 = vmatpush1.msra.mxu0 0.0
  %1518 = vmatprep.subr.mxu0 0.0
  %1519 = vmatpush1.msra.mxu0 0.0
  %1520 = vmatprep.mubr.f32.mxu0 0.0
  %1521 = vmatmul.mubr.f32.gmra.mrb[0].mxu0 %v1454
  %v1522 = vpop.f32.mrb[0].mxu0
  %v1523 = vadd.f32 0.0, %v1522
  %v1524 = vpop.f32.mrb[0].mxu0
  %1525 = vdwg.mxu0
  %1528 = vrot.lane.b32.xlu0 %v1452, 64
  %v1529 = vpop.permute.xlu0 %1528
  %1530 = vrot.lane.b32.xlu0 %v1453, 64
  %v1531 = vpop.permute.xlu0 %1530
  %v1534 = vsel %vm133, %v1449, 0
  %1536 = vmatprep.subr.mxu0 0.0
  %1537 = vmatpush1.msra.mxu0 %v1529
  %1538 = vmatprep.subr.mxu0 0.0
  %1539 = vmatpush1.msra.mxu0 %v1531
  %1540 = vmatprep.subr.mxu0 0.0
  %1541 = vmatpush1.msra.mxu0 0.0
  %1542 = vmatprep.subr.mxu0 0.0
  %1543 = vmatpush1.msra.mxu0 0.0
  %1544 = vmatprep.subr.mxu0 0.0
  %1545 = vmatpush1.msra.mxu0 0.0
  %1546 = vmatprep.subr.mxu0 0.0
  %1547 = vmatpush1.msra.mxu0 0.0
  %1548 = vmatprep.subr.mxu0 0.0
  %1549 = vmatpush1.msra.mxu0 0.0
  %1550 = vmatprep.subr.mxu0 0.0
  %1551 = vmatpush1.msra.mxu0 0.0
  %1552 = vmatprep.subr.mxu0 0.0
  %1553 = vmatpush1.msra.mxu0 0.0
  %1554 = vmatprep.subr.mxu0 0.0
  %1555 = vmatpush1.msra.mxu0 0.0
  %1556 = vmatprep.subr.mxu0 0.0
  %1557 = vmatpush1.msra.mxu0 0.0
  %1558 = vmatprep.subr.mxu0 0.0
  %1559 = vmatpush1.msra.mxu0 0.0
  %1560 = vmatprep.subr.mxu0 0.0
  %1561 = vmatpush1.msra.mxu0 0.0
  %1562 = vmatprep.subr.mxu0 0.0
  %1563 = vmatpush1.msra.mxu0 0.0
  %1564 = vmatprep.subr.mxu0 0.0
  %1565 = vmatpush1.msra.mxu0 0.0
  %1566 = vmatprep.subr.mxu0 0.0
  %1567 = vmatpush1.msra.mxu0 0.0
  %1568 = vmatprep.subr.mxu0 0.0
  %1569 = vmatpush1.msra.mxu0 0.0
  %1570 = vmatprep.subr.mxu0 0.0
  %1571 = vmatpush1.msra.mxu0 0.0
  %1572 = vmatprep.subr.mxu0 0.0
  %1573 = vmatpush1.msra.mxu0 0.0
  %1574 = vmatprep.subr.mxu0 0.0
  %1575 = vmatpush1.msra.mxu0 0.0
  %1576 = vmatprep.subr.mxu0 0.0
  %1577 = vmatpush1.msra.mxu0 0.0
  %1578 = vmatprep.subr.mxu0 0.0
  %1579 = vmatpush1.msra.mxu0 0.0
  %1580 = vmatprep.subr.mxu0 0.0
  %1581 = vmatpush1.msra.mxu0 0.0
  %1582 = vmatprep.subr.mxu0 0.0
  %1583 = vmatpush1.msra.mxu0 0.0
  %1584 = vmatprep.subr.mxu0 0.0
  %1585 = vmatpush1.msra.mxu0 0.0
  %1586 = vmatprep.subr.mxu0 0.0
  %1587 = vmatpush1.msra.mxu0 0.0
  %1588 = vmatprep.subr.mxu0 0.0
  %1589 = vmatpush1.msra.mxu0 0.0
  %1590 = vmatprep.subr.mxu0 0.0
  %1591 = vmatpush1.msra.mxu0 0.0
  %1592 = vmatprep.subr.mxu0 0.0
  %1593 = vmatpush1.msra.mxu0 0.0
  %1594 = vmatprep.subr.mxu0 0.0
  %1595 = vmatpush1.msra.mxu0 0.0
  %1596 = vmatprep.subr.mxu0 0.0
  %1597 = vmatpush1.msra.mxu0 0.0
  %1598 = vmatprep.subr.mxu0 0.0
  %1599 = vmatpush1.msra.mxu0 0.0
  %1600 = vmatprep.mubr.f32.mxu0 0.0
  %1601 = vmatmul.mubr.f32.gmra.mrb[0].mxu0 %v1534
  %v1602 = vpop.f32.mrb[0].mxu0
  %v1603 = vadd.f32 0.0, %v1602
  %v1604 = vpop.f32.mrb[0].mxu0
  %1605 = vdwg.mxu0
  %v1606 = vld [vmem:[#allocation2 + $0xc] sm:$0x3]
  %v1607 = vadd.f32 %v1606, %v1523
  %v1608 = vxor.u32 %v1607, 2147483648
  %v1609 = vmul.f32 %v1608, 1.442695
  %v1610 = vpow.pop %v1609
  %v1611 = vadd.f32 %v1610, 1.0
  %v1612 = vrcp.pop %v1611
  %v1613 = vmul.f32 1.0, %v1612
  %v1614 = vtanh.pop %v1607
  %v1615 = vmul.f32 %v1613, %v1405
  %1617 = vrot.lane.b32.xlu0 %v1614, 96
  %v1618 = vpop.permute.xlu0 %1617
  %v1620 = vmul.f32 %v1613, %v1618
  %1622 = vrot.lane.b32.xlu0 %v1620, 16
  %v1623 = vpop.permute.xlu0 %1622
  %v1625 = vadd.f32 %v1615, %v1623
  %v1626 = vtanh.pop %v1625
  %1628 = vrot.lane.b32.xlu0 %v1626, 32
  %v1629 = vpop.permute.xlu0 %1628
  %v1631 = vmul.f32 %v1613, %v1629
  %v1632 = vld [vmem:[#allocation2 + $0x2] sm:$0x3]
  %1634 = vrot.lane.b32.xlu0 %v1603, 64
  %v1635 = vpop.permute.xlu0 %1634
  %v1637 = vadd.f32 %v1632, %v1635
  %v1638 = vxor.u32 %v1637, 2147483648
  %v1639 = vmul.f32 %v1638, 1.442695
  %v1640 = vpow.pop %v1639
  %v1641 = vadd.f32 %v1640, 1.0
  %v1642 = vrcp.pop %v1641
  %v1643 = vmul.f32 1.0, %v1642
  %v1644 = vtanh.pop %v1637
  %v1645 = vmul.f32 %v1643, %v1435
  %1647 = vrot.lane.b32.xlu0 %v1644, 96
  %v1648 = vpop.permute.xlu0 %1647
  %v1650 = vmul.f32 %v1643, %v1648
  %1652 = vrot.lane.b32.xlu0 %v1650, 16
  %v1653 = vpop.permute.xlu0 %1652
  %v1655 = vadd.f32 %v1645, %v1653
  %v1656 = vtanh.pop %v1655
  %1658 = vrot.lane.b32.xlu0 %v1656, 32
  %v1659 = vpop.permute.xlu0 %1658
  %v1661 = vmul.f32 %v1643, %v1659
  %1663 = vrot.lane.b32.xlu0 %v1631, 80
  %v1664 = vpop.permute.xlu0 %1663
  %1666 = vst.msk [vmem:[#allocation3 + $0xc] sm:$0x3] %vm345, %v1664
  %1668 = vrot.lane.b32.xlu0 %v1661, 16
  %v1669 = vpop.permute.xlu0 %1668
  %1671 = vst.msk [vmem:[#allocation4 + $0x2] sm:$0x3] %vm345, %v1669
  %v1672 = vld [vmem:[%s2] sm:$0xff]
  %v1673 = vld [vmem:[%s2 + $0x8] sm:$0xff]
  %v1674 = vsel %vm133, %v1664, 0
  %1676 = vmatprep.subr.mxu0 0.0
  %1677 = vmatpush1.msra.mxu0 %v1672
  %1678 = vmatprep.subr.mxu0 0.0
  %1679 = vmatpush1.msra.mxu0 %v1673
  %1680 = vmatprep.subr.mxu0 0.0
  %1681 = vmatpush1.msra.mxu0 0.0
  %1682 = vmatprep.subr.mxu0 0.0
  %1683 = vmatpush1.msra.mxu0 0.0
  %1684 = vmatprep.subr.mxu0 0.0
  %1685 = vmatpush1.msra.mxu0 0.0
  %1686 = vmatprep.subr.mxu0 0.0
  %1687 = vmatpush1.msra.mxu0 0.0
  %1688 = vmatprep.subr.mxu0 0.0
  %1689 = vmatpush1.msra.mxu0 0.0
  %1690 = vmatprep.subr.mxu0 0.0
  %1691 = vmatpush1.msra.mxu0 0.0
  %1692 = vmatprep.subr.mxu0 0.0
  %1693 = vmatpush1.msra.mxu0 0.0
  %1694 = vmatprep.subr.mxu0 0.0
  %1695 = vmatpush1.msra.mxu0 0.0
  %1696 = vmatprep.subr.mxu0 0.0
  %1697 = vmatpush1.msra.mxu0 0.0
  %1698 = vmatprep.subr.mxu0 0.0
  %1699 = vmatpush1.msra.mxu0 0.0
  %1700 = vmatprep.subr.mxu0 0.0
  %1701 = vmatpush1.msra.mxu0 0.0
  %1702 = vmatprep.subr.mxu0 0.0
  %1703 = vmatpush1.msra.mxu0 0.0
  %1704 = vmatprep.subr.mxu0 0.0
  %1705 = vmatpush1.msra.mxu0 0.0
  %1706 = vmatprep.subr.mxu0 0.0
  %1707 = vmatpush1.msra.mxu0 0.0
  %1708 = vmatprep.subr.mxu0 0.0
  %1709 = vmatpush1.msra.mxu0 0.0
  %1710 = vmatprep.subr.mxu0 0.0
  %1711 = vmatpush1.msra.mxu0 0.0
  %1712 = vmatprep.subr.mxu0 0.0
  %1713 = vmatpush1.msra.mxu0 0.0
  %1714 = vmatprep.subr.mxu0 0.0
  %1715 = vmatpush1.msra.mxu0 0.0
  %1716 = vmatprep.subr.mxu0 0.0
  %1717 = vmatpush1.msra.mxu0 0.0
  %1718 = vmatprep.subr.mxu0 0.0
  %1719 = vmatpush1.msra.mxu0 0.0
  %1720 = vmatprep.subr.mxu0 0.0
  %1721 = vmatpush1.msra.mxu0 0.0
  %1722 = vmatprep.subr.mxu0 0.0
  %1723 = vmatpush1.msra.mxu0 0.0
  %1724 = vmatprep.subr.mxu0 0.0
  %1725 = vmatpush1.msra.mxu0 0.0
  %1726 = vmatprep.subr.mxu0 0.0
  %1727 = vmatpush1.msra.mxu0 0.0
  %1728 = vmatprep.subr.mxu0 0.0
  %1729 = vmatpush1.msra.mxu0 0.0
  %1730 = vmatprep.subr.mxu0 0.0
  %1731 = vmatpush1.msra.mxu0 0.0
  %1732 = vmatprep.subr.mxu0 0.0
  %1733 = vmatpush1.msra.mxu0 0.0
  %1734 = vmatprep.subr.mxu0 0.0
  %1735 = vmatpush1.msra.mxu0 0.0
  %1736 = vmatprep.subr.mxu0 0.0
  %1737 = vmatpush1.msra.mxu0 0.0
  %1738 = vmatprep.subr.mxu0 0.0
  %1739 = vmatpush1.msra.mxu0 0.0
  %1740 = vmatprep.mubr.f32.mxu0 0.0
  %1741 = vmatmul.mubr.f32.gmra.mrb[0].mxu0 %v1674
  %v1742 = vpop.f32.mrb[0].mxu0
  %v1743 = vadd.f32 0.0, %v1742
  %v1744 = vpop.f32.mrb[0].mxu0
  %1745 = vdwg.mxu0
  %1748 = vrot.lane.b32.xlu0 %v1672, 64
  %v1749 = vpop.permute.xlu0 %1748
  %1750 = vrot.lane.b32.xlu0 %v1673, 64
  %v1751 = vpop.permute.xlu0 %1750
  %v1754 = vsel %vm133, %v1669, 0
  %1756 = vmatprep.subr.mxu0 0.0
  %1757 = vmatpush1.msra.mxu0 %v1749
  %1758 = vmatprep.subr.mxu0 0.0
  %1759 = vmatpush1.msra.mxu0 %v1751
  %1760 = vmatprep.subr.mxu0 0.0
  %1761 = vmatpush1.msra.mxu0 0.0
  %1762 = vmatprep.subr.mxu0 0.0
  %1763 = vmatpush1.msra.mxu0 0.0
  %1764 = vmatprep.subr.mxu0 0.0
  %1765 = vmatpush1.msra.mxu0 0.0
  %1766 = vmatprep.subr.mxu0 0.0
  %1767 = vmatpush1.msra.mxu0 0.0
  %1768 = vmatprep.subr.mxu0 0.0
  %1769 = vmatpush1.msra.mxu0 0.0
  %1770 = vmatprep.subr.mxu0 0.0
  %1771 = vmatpush1.msra.mxu0 0.0
  %1772 = vmatprep.subr.mxu0 0.0
  %1773 = vmatpush1.msra.mxu0 0.0
  %1774 = vmatprep.subr.mxu0 0.0
  %1775 = vmatpush1.msra.mxu0 0.0
  %1776 = vmatprep.subr.mxu0 0.0
  %1777 = vmatpush1.msra.mxu0 0.0
  %1778 = vmatprep.subr.mxu0 0.0
  %1779 = vmatpush1.msra.mxu0 0.0
  %1780 = vmatprep.subr.mxu0 0.0
  %1781 = vmatpush1.msra.mxu0 0.0
  %1782 = vmatprep.subr.mxu0 0.0
  %1783 = vmatpush1.msra.mxu0 0.0
  %1784 = vmatprep.subr.mxu0 0.0
  %1785 = vmatpush1.msra.mxu0 0.0
  %1786 = vmatprep.subr.mxu0 0.0
  %1787 = vmatpush1.msra.mxu0 0.0
  %1788 = vmatprep.subr.mxu0 0.0
  %1789 = vmatpush1.msra.mxu0 0.0
  %1790 = vmatprep.subr.mxu0 0.0
  %1791 = vmatpush1.msra.mxu0 0.0
  %1792 = vmatprep.subr.mxu0 0.0
  %1793 = vmatpush1.msra.mxu0 0.0
  %1794 = vmatprep.subr.mxu0 0.0
  %1795 = vmatpush1.msra.mxu0 0.0
  %1796 = vmatprep.subr.mxu0 0.0
  %1797 = vmatpush1.msra.mxu0 0.0
  %1798 = vmatprep.subr.mxu0 0.0
  %1799 = vmatpush1.msra.mxu0 0.0
  %1800 = vmatprep.subr.mxu0 0.0
  %1801 = vmatpush1.msra.mxu0 0.0
  %1802 = vmatprep.subr.mxu0 0.0
  %1803 = vmatpush1.msra.mxu0 0.0
  %1804 = vmatprep.subr.mxu0 0.0
  %1805 = vmatpush1.msra.mxu0 0.0
  %1806 = vmatprep.subr.mxu0 0.0
  %1807 = vmatpush1.msra.mxu0 0.0
  %1808 = vmatprep.subr.mxu0 0.0
  %1809 = vmatpush1.msra.mxu0 0.0
  %1810 = vmatprep.subr.mxu0 0.0
  %1811 = vmatpush1.msra.mxu0 0.0
  %1812 = vmatprep.subr.mxu0 0.0
  %1813 = vmatpush1.msra.mxu0 0.0
  %1814 = vmatprep.subr.mxu0 0.0
  %1815 = vmatpush1.msra.mxu0 0.0
  %1816 = vmatprep.subr.mxu0 0.0
  %1817 = vmatpush1.msra.mxu0 0.0
  %1818 = vmatprep.subr.mxu0 0.0
  %1819 = vmatpush1.msra.mxu0 0.0
  %1820 = vmatprep.mubr.f32.mxu0 0.0
  %1821 = vmatmul.mubr.f32.gmra.mrb[0].mxu0 %v1754
  %v1822 = vpop.f32.mrb[0].mxu0
  %v1823 = vadd.f32 0.0, %v1822
  %v1824 = vpop.f32.mrb[0].mxu0
  %1825 = vdwg.mxu0
  %v1826 = vld [vmem:[#allocation2 + $0xe] sm:$0x3]
  %v1827 = vadd.f32 %v1826, %v1743
  %v1828 = vxor.u32 %v1827, 2147483648
  %v1829 = vmul.f32 %v1828, 1.442695
  %v1830 = vpow.pop %v1829
  %v1831 = vadd.f32 %v1830, 1.0
  %v1832 = vrcp.pop %v1831
  %v1833 = vmul.f32 1.0, %v1832
  %v1834 = vtanh.pop %v1827
  %v1835 = vmul.f32 %v1833, %v1625
  %1837 = vrot.lane.b32.xlu0 %v1834, 96
  %v1838 = vpop.permute.xlu0 %1837
  %v1840 = vmul.f32 %v1833, %v1838
  %1842 = vrot.lane.b32.xlu0 %v1840, 16
  %v1843 = vpop.permute.xlu0 %1842
  %v1845 = vadd.f32 %v1835, %v1843
  %v1846 = vtanh.pop %v1845
  %1848 = vrot.lane.b32.xlu0 %v1846, 32
  %v1849 = vpop.permute.xlu0 %1848
  %v1851 = vmul.f32 %v1833, %v1849
  %v1852 = vld [vmem:[#allocation2] sm:$0x3]
  %1854 = vrot.lane.b32.xlu0 %v1823, 64
  %v1855 = vpop.permute.xlu0 %1854
  %v1857 = vadd.f32 %v1852, %v1855
  %v1858 = vxor.u32 %v1857, 2147483648
  %v1859 = vmul.f32 %v1858, 1.442695
  %v1860 = vpow.pop %v1859
  %v1861 = vadd.f32 %v1860, 1.0
  %v1862 = vrcp.pop %v1861
  %v1863 = vmul.f32 1.0, %v1862
  %v1864 = vtanh.pop %v1857
  %v1865 = vmul.f32 %v1863, %v1655
  %1867 = vrot.lane.b32.xlu0 %v1864, 96
  %v1868 = vpop.permute.xlu0 %1867
  %v1870 = vmul.f32 %v1863, %v1868
  %1872 = vrot.lane.b32.xlu0 %v1870, 16
  %v1873 = vpop.permute.xlu0 %1872
  %v1875 = vadd.f32 %v1865, %v1873
  %v1876 = vtanh.pop %v1875
  %1878 = vrot.lane.b32.xlu0 %v1876, 32
  %v1879 = vpop.permute.xlu0 %1878
  %v1881 = vmul.f32 %v1863, %v1879
  %1883 = vrot.lane.b32.xlu0 %v1851, 80
  %v1884 = vpop.permute.xlu0 %1883
  %1886 = vst.msk [vmem:[#allocation3 + $0xe] sm:$0x3] %vm345, %v1884
  %1888 = vrot.lane.b32.xlu0 %v1881, 16
  %v1889 = vpop.permute.xlu0 %1888
  %1891 = vst.msk [vmem:[#allocation4] sm:$0x3] %vm345, %v1889
  %v1892 = vld [vmem:[#allocation3] sm:$0xff]
  %v1893 = vld [vmem:[#allocation3 + $0x8] sm:$0xff]
  %v1894 = vmax.f32 %v1892, 0.0
  %v1895 = vmax.f32 %v1893, 0.0
  %v1896 = vld [vmem:[%s4] sm:$0xff]
  %v1897 = vld [vmem:[%s4 + $0x8] sm:$0xff]
  %v1898 = vld [vmem:[#allocation4] sm:$0xff]
  %v1899 = vld [vmem:[#allocation4 + $0x8] sm:$0xff]
  %v1900 = vmax.f32 %v1898, 0.0
  %v1901 = vmax.f32 %v1899, 0.0
  %v1902 = vld [vmem:[%s4 + $0x10] sm:$0xff]
  %v1903 = vld [vmem:[%s4 + $0x18] sm:$0xff]
  %v1905 = vsel %vm133, %v1900, 0
  %v1908 = vsel %vm133, %v1901, 0
  %1910 = vmatprep.subr.mxu0 0.0
  %1911 = vmatpush1.msra.mxu0 %v1902
  %1912 = vmatprep.subr.mxu0 0.0
  %1913 = vmatpush1.msra.mxu0 %v1903
  %1914 = vmatprep.subr.mxu0 0.0
  %1915 = vmatpush1.msra.mxu0 0.0
  %1916 = vmatprep.subr.mxu0 0.0
  %1917 = vmatpush1.msra.mxu0 0.0
  %1918 = vmatprep.subr.mxu0 0.0
  %1919 = vmatpush1.msra.mxu0 0.0
  %1920 = vmatprep.subr.mxu0 0.0
  %1921 = vmatpush1.msra.mxu0 0.0
  %1922 = vmatprep.subr.mxu0 0.0
  %1923 = vmatpush1.msra.mxu0 0.0
  %1924 = vmatprep.subr.mxu0 0.0
  %1925 = vmatpush1.msra.mxu0 0.0
  %1926 = vmatprep.subr.mxu0 0.0
  %1927 = vmatpush1.msra.mxu0 0.0
  %1928 = vmatprep.subr.mxu0 0.0
  %1929 = vmatpush1.msra.mxu0 0.0
  %1930 = vmatprep.subr.mxu0 0.0
  %1931 = vmatpush1.msra.mxu0 0.0
  %1932 = vmatprep.subr.mxu0 0.0
  %1933 = vmatpush1.msra.mxu0 0.0
  %1934 = vmatprep.subr.mxu0 0.0
  %1935 = vmatpush1.msra.mxu0 0.0
  %1936 = vmatprep.subr.mxu0 0.0
  %1937 = vmatpush1.msra.mxu0 0.0
  %1938 = vmatprep.subr.mxu0 0.0
  %1939 = vmatpush1.msra.mxu0 0.0
  %1940 = vmatprep.subr.mxu0 0.0
  %1941 = vmatpush1.msra.mxu0 0.0
  %1942 = vmatprep.subr.mxu0 0.0
  %1943 = vmatpush1.msra.mxu0 0.0
  %1944 = vmatprep.subr.mxu0 0.0
  %1945 = vmatpush1.msra.mxu0 0.0
  %1946 = vmatprep.subr.mxu0 0.0
  %1947 = vmatpush1.msra.mxu0 0.0
  %1948 = vmatprep.subr.mxu0 0.0
  %1949 = vmatpush1.msra.mxu0 0.0
  %1950 = vmatprep.subr.mxu0 0.0
  %1951 = vmatpush1.msra.mxu0 0.0
  %1952 = vmatprep.subr.mxu0 0.0
  %1953 = vmatpush1.msra.mxu0 0.0
  %1954 = vmatprep.subr.mxu0 0.0
  %1955 = vmatpush1.msra.mxu0 0.0
  %1956 = vmatprep.subr.mxu0 0.0
  %1957 = vmatpush1.msra.mxu0 0.0
  %1958 = vmatprep.subr.mxu0 0.0
  %1959 = vmatpush1.msra.mxu0 0.0
  %1960 = vmatprep.subr.mxu0 0.0
  %1961 = vmatpush1.msra.mxu0 0.0
  %1962 = vmatprep.subr.mxu0 0.0
  %1963 = vmatpush1.msra.mxu0 0.0
  %1964 = vmatprep.subr.mxu0 0.0
  %1965 = vmatpush1.msra.mxu0 0.0
  %1966 = vmatprep.subr.mxu0 0.0
  %1967 = vmatpush1.msra.mxu0 0.0
  %1968 = vmatprep.subr.mxu0 0.0
  %1969 = vmatpush1.msra.mxu0 0.0
  %1970 = vmatprep.subr.mxu0 0.0
  %1971 = vmatpush1.msra.mxu0 0.0
  %1972 = vmatprep.subr.mxu0 0.0
  %1973 = vmatpush1.msra.mxu0 0.0
  %1974 = vmatprep.mubr.f32.mxu0 0.0
  %1975 = vmatmul.mubr.f32.gmra.mrb[0].mxu0 %v1905
  %v1976 = vpop.f32.mrb[0].mxu0
  %v1977 = vadd.f32 0.0, %v1976
  %v1978 = vpop.f32.mrb[0].mxu0
  %1979 = vmatprep.mubr.f32.mxu0 0.0
  %1980 = vmatmul.mubr.f32.gmra.mrb[0].mxu0 %v1908
  %v1981 = vpop.f32.mrb[0].mxu0
  %v1982 = vadd.f32 0.0, %v1981
  %v1983 = vpop.f32.mrb[0].mxu0
  %1984 = vdwg.mxu0
  %v1986 = vsel %vm133, %v1894, 0
  %v1989 = vsel %vm133, %v1895, 0
  %1991 = vmatprep.subr.mxu0 0.0
  %1992 = vmatpush1.msra.mxu0 %v1896
  %1993 = vmatprep.subr.mxu0 0.0
  %1994 = vmatpush1.msra.mxu0 %v1897
  %1995 = vmatprep.subr.mxu0 0.0
  %1996 = vmatpush1.msra.mxu0 0.0
  %1997 = vmatprep.subr.mxu0 0.0
  %1998 = vmatpush1.msra.mxu0 0.0
  %1999 = vmatprep.subr.mxu0 0.0
  %2000 = vmatpush1.msra.mxu0 0.0
  %2001 = vmatprep.subr.mxu0 0.0
  %2002 = vmatpush1.msra.mxu0 0.0
  %2003 = vmatprep.subr.mxu0 0.0
  %2004 = vmatpush1.msra.mxu0 0.0
  %2005 = vmatprep.subr.mxu0 0.0
  %2006 = vmatpush1.msra.mxu0 0.0
  %2007 = vmatprep.subr.mxu0 0.0
  %2008 = vmatpush1.msra.mxu0 0.0
  %2009 = vmatprep.subr.mxu0 0.0
  %2010 = vmatpush1.msra.mxu0 0.0
  %2011 = vmatprep.subr.mxu0 0.0
  %2012 = vmatpush1.msra.mxu0 0.0
  %2013 = vmatprep.subr.mxu0 0.0
  %2014 = vmatpush1.msra.mxu0 0.0
  %2015 = vmatprep.subr.mxu0 0.0
  %2016 = vmatpush1.msra.mxu0 0.0
  %2017 = vmatprep.subr.mxu0 0.0
  %2018 = vmatpush1.msra.mxu0 0.0
  %2019 = vmatprep.subr.mxu0 0.0
  %2020 = vmatpush1.msra.mxu0 0.0
  %2021 = vmatprep.subr.mxu0 0.0
  %2022 = vmatpush1.msra.mxu0 0.0
  %2023 = vmatprep.subr.mxu0 0.0
  %2024 = vmatpush1.msra.mxu0 0.0
  %2025 = vmatprep.subr.mxu0 0.0
  %2026 = vmatpush1.msra.mxu0 0.0
  %2027 = vmatprep.subr.mxu0 0.0
  %2028 = vmatpush1.msra.mxu0 0.0
  %2029 = vmatprep.subr.mxu0 0.0
  %2030 = vmatpush1.msra.mxu0 0.0
  %2031 = vmatprep.subr.mxu0 0.0
  %2032 = vmatpush1.msra.mxu0 0.0
  %2033 = vmatprep.subr.mxu0 0.0
  %2034 = vmatpush1.msra.mxu0 0.0
  %2035 = vmatprep.subr.mxu0 0.0
  %2036 = vmatpush1.msra.mxu0 0.0
  %2037 = vmatprep.subr.mxu0 0.0
  %2038 = vmatpush1.msra.mxu0 0.0
  %2039 = vmatprep.subr.mxu0 0.0
  %2040 = vmatpush1.msra.mxu0 0.0
  %2041 = vmatprep.subr.mxu0 0.0
  %2042 = vmatpush1.msra.mxu0 0.0
  %2043 = vmatprep.subr.mxu0 0.0
  %2044 = vmatpush1.msra.mxu0 0.0
  %2045 = vmatprep.subr.mxu0 0.0
  %2046 = vmatpush1.msra.mxu0 0.0
  %2047 = vmatprep.subr.mxu0 0.0
  %2048 = vmatpush1.msra.mxu0 0.0
  %2049 = vmatprep.subr.mxu0 0.0
  %2050 = vmatpush1.msra.mxu0 0.0
  %2051 = vmatprep.subr.mxu0 0.0
  %2052 = vmatpush1.msra.mxu0 0.0
  %2053 = vmatprep.subr.mxu0 0.0
  %2054 = vmatpush1.msra.mxu0 0.0
  %2055 = vmatprep.mubr.f32.mxu0 0.0
  %2056 = vmatmul.mubr.f32.gmra.mrb[0].mxu0 %v1986
  %v2057 = vpop.f32.mrb[0].mxu0
  %v2058 = vadd.f32 %v1977, %v2057
  %v2059 = vpop.f32.mrb[0].mxu0
  %2060 = vmatprep.mubr.f32.mxu0 0.0
  %2061 = vmatmul.mubr.f32.gmra.mrb[0].mxu0 %v1989
  %v2062 = vpop.f32.mrb[0].mxu0
  %v2063 = vadd.f32 %v1982, %v2062
  %v2064 = vpop.f32.mrb[0].mxu0
  %2065 = vdwg.mxu0
  %v2066 = vld [vmem:[%s6] sm:$0x1]
  %v2068 = vlaneseq
  %v2069 = vshrl.u32 %v2068, 7
  %v2070 = vsub.s32 0, %v2069
  %v2071 = vrot.slane %v2066, %v2070
  %v2073 = vadd.f32 %v2058, %v2071
  %v2074 = vadd.f32 %v2063, %v2071
  %vm2075 = vcmask 523264
  %2076 = vst.msk [vmem:[#allocation2] sm:$0xff] %vm2075, %v2073
  %2077 = vst.msk [vmem:[#allocation2 + $0x8] sm:$0xff] %vm2075, %v2074
  %v2078 = vld [vmem:[%s5] sm:$0xff]
  %vm2079 = vcmask 64512
  %v2080 = vsel %vm2079, 0.0, 0
  %2082 = vmatprep.subr.mxu0 0.0
  %2083 = vmatpush1.msra.mxu0 %v2078
  %2084 = vmatprep.subr.mxu0 0.0
  %2085 = vmatpush1.msra.mxu0 0.0
  %2086 = vmatprep.subr.mxu0 0.0
  %2087 = vmatpush1.msra.mxu0 0.0
  %2088 = vmatprep.subr.mxu0 0.0
  %2089 = vmatpush1.msra.mxu0 0.0
  %2090 = vmatprep.subr.mxu0 0.0
  %2091 = vmatpush1.msra.mxu0 0.0
  %2092 = vmatprep.subr.mxu0 0.0
  %2093 = vmatpush1.msra.mxu0 0.0
  %2094 = vmatprep.subr.mxu0 0.0
  %2095 = vmatpush1.msra.mxu0 0.0
  %2096 = vmatprep.subr.mxu0 0.0
  %2097 = vmatpush1.msra.mxu0 0.0
  %2098 = vmatprep.subr.mxu0 0.0
  %2099 = vmatpush1.msra.mxu0 0.0
  %2100 = vmatprep.subr.mxu0 0.0
  %2101 = vmatpush1.msra.mxu0 0.0
  %2102 = vmatprep.subr.mxu0 0.0
  %2103 = vmatpush1.msra.mxu0 0.0
  %2104 = vmatprep.subr.mxu0 0.0
  %2105 = vmatpush1.msra.mxu0 0.0
  %2106 = vmatprep.subr.mxu0 0.0
  %2107 = vmatpush1.msra.mxu0 0.0
  %2108 = vmatprep.subr.mxu0 0.0
  %2109 = vmatpush1.msra.mxu0 0.0
  %2110 = vmatprep.subr.mxu0 0.0
  %2111 = vmatpush1.msra.mxu0 0.0
  %2112 = vmatprep.subr.mxu0 0.0
  %2113 = vmatpush1.msra.mxu0 0.0
  %2114 = vmatprep.subr.mxu0 0.0
  %2115 = vmatpush1.msra.mxu0 0.0
  %2116 = vmatprep.subr.mxu0 0.0
  %2117 = vmatpush1.msra.mxu0 0.0
  %2118 = vmatprep.subr.mxu0 0.0
  %2119 = vmatpush1.msra.mxu0 0.0
  %2120 = vmatprep.subr.mxu0 0.0
  %2121 = vmatpush1.msra.mxu0 0.0
  %2122 = vmatprep.subr.mxu0 0.0
  %2123 = vmatpush1.msra.mxu0 0.0
  %2124 = vmatprep.subr.mxu0 0.0
  %2125 = vmatpush1.msra.mxu0 0.0
  %2126 = vmatprep.subr.mxu0 0.0
  %2127 = vmatpush1.msra.mxu0 0.0
  %2128 = vmatprep.subr.mxu0 0.0
  %2129 = vmatpush1.msra.mxu0 0.0
  %2130 = vmatprep.subr.mxu0 0.0
  %2131 = vmatpush1.msra.mxu0 0.0
  %2132 = vmatprep.subr.mxu0 0.0
  %2133 = vmatpush1.msra.mxu0 0.0
  %2134 = vmatprep.subr.mxu0 0.0
  %2135 = vmatpush1.msra.mxu0 0.0
  %2136 = vmatprep.subr.mxu0 0.0
  %2137 = vmatpush1.msra.mxu0 0.0
  %2138 = vmatprep.subr.mxu0 0.0
  %2139 = vmatpush1.msra.mxu0 0.0
  %2140 = vmatprep.subr.mxu0 0.0
  %2141 = vmatpush1.msra.mxu0 0.0
  %2142 = vmatprep.subr.mxu0 0.0
  %2143 = vmatpush1.msra.mxu0 0.0
  %2144 = vmatprep.subr.mxu0 0.0
  %2145 = vmatpush1.msra.mxu0 0.0
  %2146 = vmatprep.mubr.f32.mxu0 0.0
  %2147 = vmatmul.mubr.f32.gmra.mrb[0].mxu0 %v2080
  %v2148 = vpop.f32.mrb[0].mxu0
  %v2149 = vadd.f32 0.0, %v2148
  %v2150 = vpop.f32.mrb[0].mxu0
  %2151 = vdwg.mxu0
  %2153 = vrot.lane.b32.xlu0 %v2078, 96
  %v2154 = vpop.permute.xlu0 %2153
  %2156 = vmatprep.subr.mxu0 0.0
  %2157 = vmatpush1.msra.mxu0 %v2154
  %2158 = vmatprep.subr.mxu0 0.0
  %2159 = vmatpush1.msra.mxu0 0.0
  %2160 = vmatprep.subr.mxu0 0.0
  %2161 = vmatpush1.msra.mxu0 0.0
  %2162 = vmatprep.subr.mxu0 0.0
  %2163 = vmatpush1.msra.mxu0 0.0
  %2164 = vmatprep.subr.mxu0 0.0
  %2165 = vmatpush1.msra.mxu0 0.0
  %2166 = vmatprep.subr.mxu0 0.0
  %2167 = vmatpush1.msra.mxu0 0.0
  %2168 = vmatprep.subr.mxu0 0.0
  %2169 = vmatpush1.msra.mxu0 0.0
  %2170 = vmatprep.subr.mxu0 0.0
  %2171 = vmatpush1.msra.mxu0 0.0
  %2172 = vmatprep.subr.mxu0 0.0
  %2173 = vmatpush1.msra.mxu0 0.0
  %2174 = vmatprep.subr.mxu0 0.0
  %2175 = vmatpush1.msra.mxu0 0.0
  %2176 = vmatprep.subr.mxu0 0.0
  %2177 = vmatpush1.msra.mxu0 0.0
  %2178 = vmatprep.subr.mxu0 0.0
  %2179 = vmatpush1.msra.mxu0 0.0
  %2180 = vmatprep.subr.mxu0 0.0
  %2181 = vmatpush1.msra.mxu0 0.0
  %2182 = vmatprep.subr.mxu0 0.0
  %2183 = vmatpush1.msra.mxu0 0.0
  %2184 = vmatprep.subr.mxu0 0.0
  %2185 = vmatpush1.msra.mxu0 0.0
  %2186 = vmatprep.subr.mxu0 0.0
  %2187 = vmatpush1.msra.mxu0 0.0
  %2188 = vmatprep.subr.mxu0 0.0
  %2189 = vmatpush1.msra.mxu0 0.0
  %2190 = vmatprep.subr.mxu0 0.0
  %2191 = vmatpush1.msra.mxu0 0.0
  %2192 = vmatprep.subr.mxu0 0.0
  %2193 = vmatpush1.msra.mxu0 0.0
  %2194 = vmatprep.subr.mxu0 0.0
  %2195 = vmatpush1.msra.mxu0 0.0
  %2196 = vmatprep.subr.mxu0 0.0
  %2197 = vmatpush1.msra.mxu0 0.0
  %2198 = vmatprep.subr.mxu0 0.0
  %2199 = vmatpush1.msra.mxu0 0.0
  %2200 = vmatprep.subr.mxu0 0.0
  %2201 = vmatpush1.msra.mxu0 0.0
  %2202 = vmatprep.subr.mxu0 0.0
  %2203 = vmatpush1.msra.mxu0 0.0
  %2204 = vmatprep.subr.mxu0 0.0
  %2205 = vmatpush1.msra.mxu0 0.0
  %2206 = vmatprep.subr.mxu0 0.0
  %2207 = vmatpush1.msra.mxu0 0.0
  %2208 = vmatprep.subr.mxu0 0.0
  %2209 = vmatpush1.msra.mxu0 0.0
  %2210 = vmatprep.subr.mxu0 0.0
  %2211 = vmatpush1.msra.mxu0 0.0
  %2212 = vmatprep.subr.mxu0 0.0
  %2213 = vmatpush1.msra.mxu0 0.0
  %2214 = vmatprep.subr.mxu0 0.0
  %2215 = vmatpush1.msra.mxu0 0.0
  %2216 = vmatprep.subr.mxu0 0.0
  %2217 = vmatpush1.msra.mxu0 0.0
  %2218 = vmatprep.subr.mxu0 0.0
  %2219 = vmatpush1.msra.mxu0 0.0
  %2220 = vmatprep.mubr.f32.mxu0 0.0
  %2221 = vmatmul.mubr.f32.gmra.mrb[0].mxu0 %v2080
  %v2222 = vpop.f32.mrb[0].mxu0
  %v2223 = vadd.f32 0.0, %v2222
  %v2224 = vpop.f32.mrb[0].mxu0
  %2225 = vdwg.mxu0
  %v2226 = vld [vmem:[#allocation2] sm:$0x3]
  %v2227 = vadd.f32 %v2226, %v2149
  %v2228 = vxor.u32 %v2227, 2147483648
  %v2229 = vmul.f32 %v2228, 1.442695
  %v2230 = vpow.pop %v2229
  %v2231 = vadd.f32 %v2230, 1.0
  %v2232 = vrcp.pop %v2231
  %v2233 = vmul.f32 1.0, %v2232
  %v2234 = vtanh.pop %v2227
  %v2235 = vmul.f32 %v2233, 0.0
  %2237 = vrot.lane.b32.xlu0 %v2234, 112
  %v2238 = vpop.permute.xlu0 %2237
  %v2240 = vmul.f32 %v2233, %v2238
  %2242 = vrot.lane.b32.xlu0 %v2240, 8
  %v2243 = vpop.permute.xlu0 %2242
  %v2245 = vadd.f32 %v2235, %v2243
  %v2246 = vtanh.pop %v2245
  %2248 = vrot.lane.b32.xlu0 %v2246, 16
  %v2249 = vpop.permute.xlu0 %2248
  %v2251 = vmul.f32 %v2233, %v2249
  %v2252 = vld [vmem:[#allocation2 + $0xe] sm:$0x3]
  %2254 = vrot.lane.b32.xlu0 %v2223, 32
  %v2255 = vpop.permute.xlu0 %2254
  %v2257 = vadd.f32 %v2252, %v2255
  %v2258 = vxor.u32 %v2257, 2147483648
  %v2259 = vmul.f32 %v2258, 1.442695
  %v2260 = vpow.pop %v2259
  %v2261 = vadd.f32 %v2260, 1.0
  %v2262 = vrcp.pop %v2261
  %v2263 = vmul.f32 1.0, %v2262
  %v2264 = vtanh.pop %v2257
  %v2265 = vmul.f32 %v2263, 0.0
  %2267 = vrot.lane.b32.xlu0 %v2264, 112
  %v2268 = vpop.permute.xlu0 %2267
  %v2270 = vmul.f32 %v2263, %v2268
  %2272 = vrot.lane.b32.xlu0 %v2270, 8
  %v2273 = vpop.permute.xlu0 %2272
  %v2275 = vadd.f32 %v2265, %v2273
  %v2276 = vtanh.pop %v2275
  %2278 = vrot.lane.b32.xlu0 %v2276, 16
  %v2279 = vpop.permute.xlu0 %2278
  %v2281 = vmul.f32 %v2263, %v2279
  %2283 = vrot.lane.b32.xlu0 %v2251, 104
  %v2284 = vpop.permute.xlu0 %2283
  %vm2286 = vcmask 58368
  %2287 = vst.msk [vmem:[#allocation3] sm:$0x3] %vm2286, %v2284
  %2289 = vrot.lane.b32.xlu0 %v2281, 72
  %v2290 = vpop.permute.xlu0 %2289
  %2292 = vst.msk [vmem:[#allocation4 + $0xe] sm:$0x3] %vm2286, %v2290
  %v2293 = vld [vmem:[%s5] sm:$0xff]
  %v2294 = vsel %vm2079, %v2284, 0
  %2296 = vmatprep.subr.mxu0 0.0
  %2297 = vmatpush1.msra.mxu0 %v2293
  %2298 = vmatprep.subr.mxu0 0.0
  %2299 = vmatpush1.msra.mxu0 0.0
  %2300 = vmatprep.subr.mxu0 0.0
  %2301 = vmatpush1.msra.mxu0 0.0
  %2302 = vmatprep.subr.mxu0 0.0
  %2303 = vmatpush1.msra.mxu0 0.0
  %2304 = vmatprep.subr.mxu0 0.0
  %2305 = vmatpush1.msra.mxu0 0.0
  %2306 = vmatprep.subr.mxu0 0.0
  %2307 = vmatpush1.msra.mxu0 0.0
  %2308 = vmatprep.subr.mxu0 0.0
  %2309 = vmatpush1.msra.mxu0 0.0
  %2310 = vmatprep.subr.mxu0 0.0
  %2311 = vmatpush1.msra.mxu0 0.0
  %2312 = vmatprep.subr.mxu0 0.0
  %2313 = vmatpush1.msra.mxu0 0.0
  %2314 = vmatprep.subr.mxu0 0.0
  %2315 = vmatpush1.msra.mxu0 0.0
  %2316 = vmatprep.subr.mxu0 0.0
  %2317 = vmatpush1.msra.mxu0 0.0
  %2318 = vmatprep.subr.mxu0 0.0
  %2319 = vmatpush1.msra.mxu0 0.0
  %2320 = vmatprep.subr.mxu0 0.0
  %2321 = vmatpush1.msra.mxu0 0.0
  %2322 = vmatprep.subr.mxu0 0.0
  %2323 = vmatpush1.msra.mxu0 0.0
  %2324 = vmatprep.subr.mxu0 0.0
  %2325 = vmatpush1.msra.mxu0 0.0
  %2326 = vmatprep.subr.mxu0 0.0
  %2327 = vmatpush1.msra.mxu0 0.0
  %2328 = vmatprep.subr.mxu0 0.0
  %2329 = vmatpush1.msra.mxu0 0.0
  %2330 = vmatprep.subr.mxu0 0.0
  %2331 = vmatpush1.msra.mxu0 0.0
  %2332 = vmatprep.subr.mxu0 0.0
  %2333 = vmatpush1.msra.mxu0 0.0
  %2334 = vmatprep.subr.mxu0 0.0
  %2335 = vmatpush1.msra.mxu0 0.0
  %2336 = vmatprep.subr.mxu0 0.0
  %2337 = vmatpush1.msra.mxu0 0.0
  %2338 = vmatprep.subr.mxu0 0.0
  %2339 = vmatpush1.msra.mxu0 0.0
  %2340 = vmatprep.subr.mxu0 0.0
  %2341 = vmatpush1.msra.mxu0 0.0
  %2342 = vmatprep.subr.mxu0 0.0
  %2343 = vmatpush1.msra.mxu0 0.0
  %2344 = vmatprep.subr.mxu0 0.0
  %2345 = vmatpush1.msra.mxu0 0.0
  %2346 = vmatprep.subr.mxu0 0.0
  %2347 = vmatpush1.msra.mxu0 0.0
  %2348 = vmatprep.subr.mxu0 0.0
  %2349 = vmatpush1.msra.mxu0 0.0
  %2350 = vmatprep.subr.mxu0 0.0
  %2351 = vmatpush1.msra.mxu0 0.0
  %2352 = vmatprep.subr.mxu0 0.0
  %2353 = vmatpush1.msra.mxu0 0.0
  %2354 = vmatprep.subr.mxu0 0.0
  %2355 = vmatpush1.msra.mxu0 0.0
  %2356 = vmatprep.subr.mxu0 0.0
  %2357 = vmatpush1.msra.mxu0 0.0
  %2358 = vmatprep.subr.mxu0 0.0
  %2359 = vmatpush1.msra.mxu0 0.0
  %2360 = vmatprep.mubr.f32.mxu0 0.0
  %2361 = vmatmul.mubr.f32.gmra.mrb[0].mxu0 %v2294
  %v2362 = vpop.f32.mrb[0].mxu0
  %v2363 = vadd.f32 0.0, %v2362
  %v2364 = vpop.f32.mrb[0].mxu0
  %2365 = vdwg.mxu0
  %2367 = vrot.lane.b32.xlu0 %v2293, 96
  %v2368 = vpop.permute.xlu0 %2367
  %v2370 = vsel %vm2079, %v2290, 0
  %2372 = vmatprep.subr.mxu0 0.0
  %2373 = vmatpush1.msra.mxu0 %v2368
  %2374 = vmatprep.subr.mxu0 0.0
  %2375 = vmatpush1.msra.mxu0 0.0
  %2376 = vmatprep.subr.mxu0 0.0
  %2377 = vmatpush1.msra.mxu0 0.0
  %2378 = vmatprep.subr.mxu0 0.0
  %2379 = vmatpush1.msra.mxu0 0.0
  %2380 = vmatprep.subr.mxu0 0.0
  %2381 = vmatpush1.msra.mxu0 0.0
  %2382 = vmatprep.subr.mxu0 0.0
  %2383 = vmatpush1.msra.mxu0 0.0
  %2384 = vmatprep.subr.mxu0 0.0
  %2385 = vmatpush1.msra.mxu0 0.0
  %2386 = vmatprep.subr.mxu0 0.0
  %2387 = vmatpush1.msra.mxu0 0.0
  %2388 = vmatprep.subr.mxu0 0.0
  %2389 = vmatpush1.msra.mxu0 0.0
  %2390 = vmatprep.subr.mxu0 0.0
  %2391 = vmatpush1.msra.mxu0 0.0
  %2392 = vmatprep.subr.mxu0 0.0
  %2393 = vmatpush1.msra.mxu0 0.0
  %2394 = vmatprep.subr.mxu0 0.0
  %2395 = vmatpush1.msra.mxu0 0.0
  %2396 = vmatprep.subr.mxu0 0.0
  %2397 = vmatpush1.msra.mxu0 0.0
  %2398 = vmatprep.subr.mxu0 0.0
  %2399 = vmatpush1.msra.mxu0 0.0
  %2400 = vmatprep.subr.mxu0 0.0
  %2401 = vmatpush1.msra.mxu0 0.0
  %2402 = vmatprep.subr.mxu0 0.0
  %2403 = vmatpush1.msra.mxu0 0.0
  %2404 = vmatprep.subr.mxu0 0.0
  %2405 = vmatpush1.msra.mxu0 0.0
  %2406 = vmatprep.subr.mxu0 0.0
  %2407 = vmatpush1.msra.mxu0 0.0
  %2408 = vmatprep.subr.mxu0 0.0
  %2409 = vmatpush1.msra.mxu0 0.0
  %2410 = vmatprep.subr.mxu0 0.0
  %2411 = vmatpush1.msra.mxu0 0.0
  %2412 = vmatprep.subr.mxu0 0.0
  %2413 = vmatpush1.msra.mxu0 0.0
  %2414 = vmatprep.subr.mxu0 0.0
  %2415 = vmatpush1.msra.mxu0 0.0
  %2416 = vmatprep.subr.mxu0 0.0
  %2417 = vmatpush1.msra.mxu0 0.0
  %2418 = vmatprep.subr.mxu0 0.0
  %2419 = vmatpush1.msra.mxu0 0.0
  %2420 = vmatprep.subr.mxu0 0.0
  %2421 = vmatpush1.msra.mxu0 0.0
  %2422 = vmatprep.subr.mxu0 0.0
  %2423 = vmatpush1.msra.mxu0 0.0
  %2424 = vmatprep.subr.mxu0 0.0
  %2425 = vmatpush1.msra.mxu0 0.0
  %2426 = vmatprep.subr.mxu0 0.0
  %2427 = vmatpush1.msra.mxu0 0.0
  %2428 = vmatprep.subr.mxu0 0.0
  %2429 = vmatpush1.msra.mxu0 0.0
  %2430 = vmatprep.subr.mxu0 0.0
  %2431 = vmatpush1.msra.mxu0 0.0
  %2432 = vmatprep.subr.mxu0 0.0
  %2433 = vmatpush1.msra.mxu0 0.0
  %2434 = vmatprep.subr.mxu0 0.0
  %2435 = vmatpush1.msra.mxu0 0.0
  %2436 = vmatprep.mubr.f32.mxu0 0.0
  %2437 = vmatmul.mubr.f32.gmra.mrb[0].mxu0 %v2370
  %v2438 = vpop.f32.mrb[0].mxu0
  %v2439 = vadd.f32 0.0, %v2438
  %v2440 = vpop.f32.mrb[0].mxu0
  %2441 = vdwg.mxu0
  %v2442 = vld [vmem:[#allocation2 + $0x2] sm:$0x3]
  %v2443 = vadd.f32 %v2442, %v2363
  %v2444 = vxor.u32 %v2443, 2147483648
  %v2445 = vmul.f32 %v2444, 1.442695
  %v2446 = vpow.pop %v2445
  %v2447 = vadd.f32 %v2446, 1.0
  %v2448 = vrcp.pop %v2447
  %v2449 = vmul.f32 1.0, %v2448
  %v2450 = vtanh.pop %v2443
  %v2451 = vmul.f32 %v2449, %v2245
  %2453 = vrot.lane.b32.xlu0 %v2450, 112
  %v2454 = vpop.permute.xlu0 %2453
  %v2456 = vmul.f32 %v2449, %v2454
  %2458 = vrot.lane.b32.xlu0 %v2456, 8
  %v2459 = vpop.permute.xlu0 %2458
  %v2461 = vadd.f32 %v2451, %v2459
  %v2462 = vtanh.pop %v2461
  %2464 = vrot.lane.b32.xlu0 %v2462, 16
  %v2465 = vpop.permute.xlu0 %2464
  %v2467 = vmul.f32 %v2449, %v2465
  %v2468 = vld [vmem:[#allocation2 + $0xc] sm:$0x3]
  %2470 = vrot.lane.b32.xlu0 %v2439, 32
  %v2471 = vpop.permute.xlu0 %2470
  %v2473 = vadd.f32 %v2468, %v2471
  %v2474 = vxor.u32 %v2473, 2147483648
  %v2475 = vmul.f32 %v2474, 1.442695
  %v2476 = vpow.pop %v2475
  %v2477 = vadd.f32 %v2476, 1.0
  %v2478 = vrcp.pop %v2477
  %v2479 = vmul.f32 1.0, %v2478
  %v2480 = vtanh.pop %v2473
  %v2481 = vmul.f32 %v2479, %v2275
  %2483 = vrot.lane.b32.xlu0 %v2480, 112
  %v2484 = vpop.permute.xlu0 %2483
  %v2486 = vmul.f32 %v2479, %v2484
  %2488 = vrot.lane.b32.xlu0 %v2486, 8
  %v2489 = vpop.permute.xlu0 %2488
  %v2491 = vadd.f32 %v2481, %v2489
  %v2492 = vtanh.pop %v2491
  %2494 = vrot.lane.b32.xlu0 %v2492, 16
  %v2495 = vpop.permute.xlu0 %2494
  %v2497 = vmul.f32 %v2479, %v2495
  %2499 = vrot.lane.b32.xlu0 %v2467, 104
  %v2500 = vpop.permute.xlu0 %2499
  %2502 = vst.msk [vmem:[#allocation3 + $0x2] sm:$0x3] %vm2286, %v2500
  %2504 = vrot.lane.b32.xlu0 %v2497, 72
  %v2505 = vpop.permute.xlu0 %2504
  %2507 = vst.msk [vmem:[#allocation4 + $0xc] sm:$0x3] %vm2286, %v2505
  %v2508 = vld [vmem:[%s5] sm:$0xff]
  %v2509 = vsel %vm2079, %v2500, 0
  %2511 = vmatprep.subr.mxu0 0.0
  %2512 = vmatpush1.msra.mxu0 %v2508
  %2513 = vmatprep.subr.mxu0 0.0
  %2514 = vmatpush1.msra.mxu0 0.0
  %2515 = vmatprep.subr.mxu0 0.0
  %2516 = vmatpush1.msra.mxu0 0.0
  %2517 = vmatprep.subr.mxu0 0.0
  %2518 = vmatpush1.msra.mxu0 0.0
  %2519 = vmatprep.subr.mxu0 0.0
  %2520 = vmatpush1.msra.mxu0 0.0
  %2521 = vmatprep.subr.mxu0 0.0
  %2522 = vmatpush1.msra.mxu0 0.0
  %2523 = vmatprep.subr.mxu0 0.0
  %2524 = vmatpush1.msra.mxu0 0.0
  %2525 = vmatprep.subr.mxu0 0.0
  %2526 = vmatpush1.msra.mxu0 0.0
  %2527 = vmatprep.subr.mxu0 0.0
  %2528 = vmatpush1.msra.mxu0 0.0
  %2529 = vmatprep.subr.mxu0 0.0
  %2530 = vmatpush1.msra.mxu0 0.0
  %2531 = vmatprep.subr.mxu0 0.0
  %2532 = vmatpush1.msra.mxu0 0.0
  %2533 = vmatprep.subr.mxu0 0.0
  %2534 = vmatpush1.msra.mxu0 0.0
  %2535 = vmatprep.subr.mxu0 0.0
  %2536 = vmatpush1.msra.mxu0 0.0
  %2537 = vmatprep.subr.mxu0 0.0
  %2538 = vmatpush1.msra.mxu0 0.0
  %2539 = vmatprep.subr.mxu0 0.0
  %2540 = vmatpush1.msra.mxu0 0.0
  %2541 = vmatprep.subr.mxu0 0.0
  %2542 = vmatpush1.msra.mxu0 0.0
  %2543 = vmatprep.subr.mxu0 0.0
  %2544 = vmatpush1.msra.mxu0 0.0
  %2545 = vmatprep.subr.mxu0 0.0
  %2546 = vmatpush1.msra.mxu0 0.0
  %2547 = vmatprep.subr.mxu0 0.0
  %2548 = vmatpush1.msra.mxu0 0.0
  %2549 = vmatprep.subr.mxu0 0.0
  %2550 = vmatpush1.msra.mxu0 0.0
  %2551 = vmatprep.subr.mxu0 0.0
  %2552 = vmatpush1.msra.mxu0 0.0
  %2553 = vmatprep.subr.mxu0 0.0
  %2554 = vmatpush1.msra.mxu0 0.0
  %2555 = vmatprep.subr.mxu0 0.0
  %2556 = vmatpush1.msra.mxu0 0.0
  %2557 = vmatprep.subr.mxu0 0.0
  %2558 = vmatpush1.msra.mxu0 0.0
  %2559 = vmatprep.subr.mxu0 0.0
  %2560 = vmatpush1.msra.mxu0 0.0
  %2561 = vmatprep.subr.mxu0 0.0
  %2562 = vmatpush1.msra.mxu0 0.0
  %2563 = vmatprep.subr.mxu0 0.0
  %2564 = vmatpush1.msra.mxu0 0.0
  %2565 = vmatprep.subr.mxu0 0.0
  %2566 = vmatpush1.msra.mxu0 0.0
  %2567 = vmatprep.subr.mxu0 0.0
  %2568 = vmatpush1.msra.mxu0 0.0
  %2569 = vmatprep.subr.mxu0 0.0
  %2570 = vmatpush1.msra.mxu0 0.0
  %2571 = vmatprep.subr.mxu0 0.0
  %2572 = vmatpush1.msra.mxu0 0.0
  %2573 = vmatprep.subr.mxu0 0.0
  %2574 = vmatpush1.msra.mxu0 0.0
  %2575 = vmatprep.mubr.f32.mxu0 0.0
  %2576 = vmatmul.mubr.f32.gmra.mrb[0].mxu0 %v2509
  %v2577 = vpop.f32.mrb[0].mxu0
  %v2578 = vadd.f32 0.0, %v2577
  %v2579 = vpop.f32.mrb[0].mxu0
  %2580 = vdwg.mxu0
  %2582 = vrot.lane.b32.xlu0 %v2508, 96
  %v2583 = vpop.permute.xlu0 %2582
  %v2585 = vsel %vm2079, %v2505, 0
  %2587 = vmatprep.subr.mxu0 0.0
  %2588 = vmatpush1.msra.mxu0 %v2583
  %2589 = vmatprep.subr.mxu0 0.0
  %2590 = vmatpush1.msra.mxu0 0.0
  %2591 = vmatprep.subr.mxu0 0.0
  %2592 = vmatpush1.msra.mxu0 0.0
  %2593 = vmatprep.subr.mxu0 0.0
  %2594 = vmatpush1.msra.mxu0 0.0
  %2595 = vmatprep.subr.mxu0 0.0
  %2596 = vmatpush1.msra.mxu0 0.0
  %2597 = vmatprep.subr.mxu0 0.0
  %2598 = vmatpush1.msra.mxu0 0.0
  %2599 = vmatprep.subr.mxu0 0.0
  %2600 = vmatpush1.msra.mxu0 0.0
  %2601 = vmatprep.subr.mxu0 0.0
  %2602 = vmatpush1.msra.mxu0 0.0
  %2603 = vmatprep.subr.mxu0 0.0
  %2604 = vmatpush1.msra.mxu0 0.0
  %2605 = vmatprep.subr.mxu0 0.0
  %2606 = vmatpush1.msra.mxu0 0.0
  %2607 = vmatprep.subr.mxu0 0.0
  %2608 = vmatpush1.msra.mxu0 0.0
  %2609 = vmatprep.subr.mxu0 0.0
  %2610 = vmatpush1.msra.mxu0 0.0
  %2611 = vmatprep.subr.mxu0 0.0
  %2612 = vmatpush1.msra.mxu0 0.0
  %2613 = vmatprep.subr.mxu0 0.0
  %2614 = vmatpush1.msra.mxu0 0.0
  %2615 = vmatprep.subr.mxu0 0.0
  %2616 = vmatpush1.msra.mxu0 0.0
  %2617 = vmatprep.subr.mxu0 0.0
  %2618 = vmatpush1.msra.mxu0 0.0
  %2619 = vmatprep.subr.mxu0 0.0
  %2620 = vmatpush1.msra.mxu0 0.0
  %2621 = vmatprep.subr.mxu0 0.0
  %2622 = vmatpush1.msra.mxu0 0.0
  %2623 = vmatprep.subr.mxu0 0.0
  %2624 = vmatpush1.msra.mxu0 0.0
  %2625 = vmatprep.subr.mxu0 0.0
  %2626 = vmatpush1.msra.mxu0 0.0
  %2627 = vmatprep.subr.mxu0 0.0
  %2628 = vmatpush1.msra.mxu0 0.0
  %2629 = vmatprep.subr.mxu0 0.0
  %2630 = vmatpush1.msra.mxu0 0.0
  %2631 = vmatprep.subr.mxu0 0.0
  %2632 = vmatpush1.msra.mxu0 0.0
  %2633 = vmatprep.subr.mxu0 0.0
  %2634 = vmatpush1.msra.mxu0 0.0
  %2635 = vmatprep.subr.mxu0 0.0
  %2636 = vmatpush1.msra.mxu0 0.0
  %2637 = vmatprep.subr.mxu0 0.0
  %2638 = vmatpush1.msra.mxu0 0.0
  %2639 = vmatprep.subr.mxu0 0.0
  %2640 = vmatpush1.msra.mxu0 0.0
  %2641 = vmatprep.subr.mxu0 0.0
  %2642 = vmatpush1.msra.mxu0 0.0
  %2643 = vmatprep.subr.mxu0 0.0
  %2644 = vmatpush1.msra.mxu0 0.0
  %2645 = vmatprep.subr.mxu0 0.0
  %2646 = vmatpush1.msra.mxu0 0.0
  %2647 = vmatprep.subr.mxu0 0.0
  %2648 = vmatpush1.msra.mxu0 0.0
  %2649 = vmatprep.subr.mxu0 0.0
  %2650 = vmatpush1.msra.mxu0 0.0
  %2651 = vmatprep.mubr.f32.mxu0 0.0
  %2652 = vmatmul.mubr.f32.gmra.mrb[0].mxu0 %v2585
  %v2653 = vpop.f32.mrb[0].mxu0
  %v2654 = vadd.f32 0.0, %v2653
  %v2655 = vpop.f32.mrb[0].mxu0
  %2656 = vdwg.mxu0
  %v2657 = vld [vmem:[#allocation2 + $0x4] sm:$0x3]
  %v2658 = vadd.f32 %v2657, %v2578
  %v2659 = vxor.u32 %v2658, 2147483648
  %v2660 = vmul.f32 %v2659, 1.442695
  %v2661 = vpow.pop %v2660
  %v2662 = vadd.f32 %v2661, 1.0
  %v2663 = vrcp.pop %v2662
  %v2664 = vmul.f32 1.0, %v2663
  %v2665 = vtanh.pop %v2658
  %v2666 = vmul.f32 %v2664, %v2461
  %2668 = vrot.lane.b32.xlu0 %v2665, 112
  %v2669 = vpop.permute.xlu0 %2668
  %v2671 = vmul.f32 %v2664, %v2669
  %2673 = vrot.lane.b32.xlu0 %v2671, 8
  %v2674 = vpop.permute.xlu0 %2673
  %v2676 = vadd.f32 %v2666, %v2674
  %v2677 = vtanh.pop %v2676
  %2679 = vrot.lane.b32.xlu0 %v2677, 16
  %v2680 = vpop.permute.xlu0 %2679
  %v2682 = vmul.f32 %v2664, %v2680
  %v2683 = vld [vmem:[#allocation2 + $0xa] sm:$0x3]
  %2685 = vrot.lane.b32.xlu0 %v2654, 32
  %v2686 = vpop.permute.xlu0 %2685
  %v2688 = vadd.f32 %v2683, %v2686
  %v2689 = vxor.u32 %v2688, 2147483648
  %v2690 = vmul.f32 %v2689, 1.442695
  %v2691 = vpow.pop %v2690
  %v2692 = vadd.f32 %v2691, 1.0
  %v2693 = vrcp.pop %v2692
  %v2694 = vmul.f32 1.0, %v2693
  %v2695 = vtanh.pop %v2688
  %v2696 = vmul.f32 %v2694, %v2491
  %2698 = vrot.lane.b32.xlu0 %v2695, 112
  %v2699 = vpop.permute.xlu0 %2698
  %v2701 = vmul.f32 %v2694, %v2699
  %2703 = vrot.lane.b32.xlu0 %v2701, 8
  %v2704 = vpop.permute.xlu0 %2703
  %v2706 = vadd.f32 %v2696, %v2704
  %v2707 = vtanh.pop %v2706
  %2709 = vrot.lane.b32.xlu0 %v2707, 16
  %v2710 = vpop.permute.xlu0 %2709
  %v2712 = vmul.f32 %v2694, %v2710
  %2714 = vrot.lane.b32.xlu0 %v2682, 104
  %v2715 = vpop.permute.xlu0 %2714
  %2717 = vst.msk [vmem:[#allocation3 + $0x4] sm:$0x3] %vm2286, %v2715
  %2719 = vrot.lane.b32.xlu0 %v2712, 72
  %v2720 = vpop.permute.xlu0 %2719
  %2722 = vst.msk [vmem:[#allocation4 + $0xa] sm:$0x3] %vm2286, %v2720
  %v2723 = vld [vmem:[%s5] sm:$0xff]
  %v2724 = vsel %vm2079, %v2715, 0
  %2726 = vmatprep.subr.mxu0 0.0
  %2727 = vmatpush1.msra.mxu0 %v2723
  %2728 = vmatprep.subr.mxu0 0.0
  %2729 = vmatpush1.msra.mxu0 0.0
  %2730 = vmatprep.subr.mxu0 0.0
  %2731 = vmatpush1.msra.mxu0 0.0
  %2732 = vmatprep.subr.mxu0 0.0
  %2733 = vmatpush1.msra.mxu0 0.0
  %2734 = vmatprep.subr.mxu0 0.0
  %2735 = vmatpush1.msra.mxu0 0.0
  %2736 = vmatprep.subr.mxu0 0.0
  %2737 = vmatpush1.msra.mxu0 0.0
  %2738 = vmatprep.subr.mxu0 0.0
  %2739 = vmatpush1.msra.mxu0 0.0
  %2740 = vmatprep.subr.mxu0 0.0
  %2741 = vmatpush1.msra.mxu0 0.0
  %2742 = vmatprep.subr.mxu0 0.0
  %2743 = vmatpush1.msra.mxu0 0.0
  %2744 = vmatprep.subr.mxu0 0.0
  %2745 = vmatpush1.msra.mxu0 0.0
  %2746 = vmatprep.subr.mxu0 0.0
  %2747 = vmatpush1.msra.mxu0 0.0
  %2748 = vmatprep.subr.mxu0 0.0
  %2749 = vmatpush1.msra.mxu0 0.0
  %2750 = vmatprep.subr.mxu0 0.0
  %2751 = vmatpush1.msra.mxu0 0.0
  %2752 = vmatprep.subr.mxu0 0.0
  %2753 = vmatpush1.msra.mxu0 0.0
  %2754 = vmatprep.subr.mxu0 0.0
  %2755 = vmatpush1.msra.mxu0 0.0
  %2756 = vmatprep.subr.mxu0 0.0
  %2757 = vmatpush1.msra.mxu0 0.0
  %2758 = vmatprep.subr.mxu0 0.0
  %2759 = vmatpush1.msra.mxu0 0.0
  %2760 = vmatprep.subr.mxu0 0.0
  %2761 = vmatpush1.msra.mxu0 0.0
  %2762 = vmatprep.subr.mxu0 0.0
  %2763 = vmatpush1.msra.mxu0 0.0
  %2764 = vmatprep.subr.mxu0 0.0
  %2765 = vmatpush1.msra.mxu0 0.0
  %2766 = vmatprep.subr.mxu0 0.0
  %2767 = vmatpush1.msra.mxu0 0.0
  %2768 = vmatprep.subr.mxu0 0.0
  %2769 = vmatpush1.msra.mxu0 0.0
  %2770 = vmatprep.subr.mxu0 0.0
  %2771 = vmatpush1.msra.mxu0 0.0
  %2772 = vmatprep.subr.mxu0 0.0
  %2773 = vmatpush1.msra.mxu0 0.0
  %2774 = vmatprep.subr.mxu0 0.0
  %2775 = vmatpush1.msra.mxu0 0.0
  %2776 = vmatprep.subr.mxu0 0.0
  %2777 = vmatpush1.msra.mxu0 0.0
  %2778 = vmatprep.subr.mxu0 0.0
  %2779 = vmatpush1.msra.mxu0 0.0
  %2780 = vmatprep.subr.mxu0 0.0
  %2781 = vmatpush1.msra.mxu0 0.0
  %2782 = vmatprep.subr.mxu0 0.0
  %2783 = vmatpush1.msra.mxu0 0.0
  %2784 = vmatprep.subr.mxu0 0.0
  %2785 = vmatpush1.msra.mxu0 0.0
  %2786 = vmatprep.subr.mxu0 0.0
  %2787 = vmatpush1.msra.mxu0 0.0
  %2788 = vmatprep.subr.mxu0 0.0
  %2789 = vmatpush1.msra.mxu0 0.0
  %2790 = vmatprep.mubr.f32.mxu0 0.0
  %2791 = vmatmul.mubr.f32.gmra.mrb[0].mxu0 %v2724
  %v2792 = vpop.f32.mrb[0].mxu0
  %v2793 = vadd.f32 0.0, %v2792
  %v2794 = vpop.f32.mrb[0].mxu0
  %2795 = vdwg.mxu0
  %2797 = vrot.lane.b32.xlu0 %v2723, 96
  %v2798 = vpop.permute.xlu0 %2797
  %v2800 = vsel %vm2079, %v2720, 0
  %2802 = vmatprep.subr.mxu0 0.0
  %2803 = vmatpush1.msra.mxu0 %v2798
  %2804 = vmatprep.subr.mxu0 0.0
  %2805 = vmatpush1.msra.mxu0 0.0
  %2806 = vmatprep.subr.mxu0 0.0
  %2807 = vmatpush1.msra.mxu0 0.0
  %2808 = vmatprep.subr.mxu0 0.0
  %2809 = vmatpush1.msra.mxu0 0.0
  %2810 = vmatprep.subr.mxu0 0.0
  %2811 = vmatpush1.msra.mxu0 0.0
  %2812 = vmatprep.subr.mxu0 0.0
  %2813 = vmatpush1.msra.mxu0 0.0
  %2814 = vmatprep.subr.mxu0 0.0
  %2815 = vmatpush1.msra.mxu0 0.0
  %2816 = vmatprep.subr.mxu0 0.0
  %2817 = vmatpush1.msra.mxu0 0.0
  %2818 = vmatprep.subr.mxu0 0.0
  %2819 = vmatpush1.msra.mxu0 0.0
  %2820 = vmatprep.subr.mxu0 0.0
  %2821 = vmatpush1.msra.mxu0 0.0
  %2822 = vmatprep.subr.mxu0 0.0
  %2823 = vmatpush1.msra.mxu0 0.0
  %2824 = vmatprep.subr.mxu0 0.0
  %2825 = vmatpush1.msra.mxu0 0.0
  %2826 = vmatprep.subr.mxu0 0.0
  %2827 = vmatpush1.msra.mxu0 0.0
  %2828 = vmatprep.subr.mxu0 0.0
  %2829 = vmatpush1.msra.mxu0 0.0
  %2830 = vmatprep.subr.mxu0 0.0
  %2831 = vmatpush1.msra.mxu0 0.0
  %2832 = vmatprep.subr.mxu0 0.0
  %2833 = vmatpush1.msra.mxu0 0.0
  %2834 = vmatprep.subr.mxu0 0.0
  %2835 = vmatpush1.msra.mxu0 0.0
  %2836 = vmatprep.subr.mxu0 0.0
  %2837 = vmatpush1.msra.mxu0 0.0
  %2838 = vmatprep.subr.mxu0 0.0
  %2839 = vmatpush1.msra.mxu0 0.0
  %2840 = vmatprep.subr.mxu0 0.0
  %2841 = vmatpush1.msra.mxu0 0.0
  %2842 = vmatprep.subr.mxu0 0.0
  %2843 = vmatpush1.msra.mxu0 0.0
  %2844 = vmatprep.subr.mxu0 0.0
  %2845 = vmatpush1.msra.mxu0 0.0
  %2846 = vmatprep.subr.mxu0 0.0
  %2847 = vmatpush1.msra.mxu0 0.0
  %2848 = vmatprep.subr.mxu0 0.0
  %2849 = vmatpush1.msra.mxu0 0.0
  %2850 = vmatprep.subr.mxu0 0.0
  %2851 = vmatpush1.msra.mxu0 0.0
  %2852 = vmatprep.subr.mxu0 0.0
  %2853 = vmatpush1.msra.mxu0 0.0
  %2854 = vmatprep.subr.mxu0 0.0
  %2855 = vmatpush1.msra.mxu0 0.0
  %2856 = vmatprep.subr.mxu0 0.0
  %2857 = vmatpush1.msra.mxu0 0.0
  %2858 = vmatprep.subr.mxu0 0.0
  %2859 = vmatpush1.msra.mxu0 0.0
  %2860 = vmatprep.subr.mxu0 0.0
  %2861 = vmatpush1.msra.mxu0 0.0
  %2862 = vmatprep.subr.mxu0 0.0
  %2863 = vmatpush1.msra.mxu0 0.0
  %2864 = vmatprep.subr.mxu0 0.0
  %2865 = vmatpush1.msra.mxu0 0.0
  %2866 = vmatprep.mubr.f32.mxu0 0.0
  %2867 = vmatmul.mubr.f32.gmra.mrb[0].mxu0 %v2800
  %v2868 = vpop.f32.mrb[0].mxu0
  %v2869 = vadd.f32 0.0, %v2868
  %v2870 = vpop.f32.mrb[0].mxu0
  %2871 = vdwg.mxu0
  %v2872 = vld [vmem:[#allocation2 + $0x6] sm:$0x3]
  %v2873 = vadd.f32 %v2872, %v2793
  %v2874 = vxor.u32 %v2873, 2147483648
  %v2875 = vmul.f32 %v2874, 1.442695
  %v2876 = vpow.pop %v2875
  %v2877 = vadd.f32 %v2876, 1.0
  %v2878 = vrcp.pop %v2877
  %v2879 = vmul.f32 1.0, %v2878
  %v2880 = vtanh.pop %v2873
  %v2881 = vmul.f32 %v2879, %v2676
  %2883 = vrot.lane.b32.xlu0 %v2880, 112
  %v2884 = vpop.permute.xlu0 %2883
  %v2886 = vmul.f32 %v2879, %v2884
  %2888 = vrot.lane.b32.xlu0 %v2886, 8
  %v2889 = vpop.permute.xlu0 %2888
  %v2891 = vadd.f32 %v2881, %v2889
  %v2892 = vtanh.pop %v2891
  %2894 = vrot.lane.b32.xlu0 %v2892, 16
  %v2895 = vpop.permute.xlu0 %2894
  %v2897 = vmul.f32 %v2879, %v2895
  %v2898 = vld [vmem:[#allocation2 + $0x8] sm:$0x3]
  %2900 = vrot.lane.b32.xlu0 %v2869, 32
  %v2901 = vpop.permute.xlu0 %2900
  %v2903 = vadd.f32 %v2898, %v2901
  %v2904 = vxor.u32 %v2903, 2147483648
  %v2905 = vmul.f32 %v2904, 1.442695
  %v2906 = vpow.pop %v2905
  %v2907 = vadd.f32 %v2906, 1.0
  %v2908 = vrcp.pop %v2907
  %v2909 = vmul.f32 1.0, %v2908
  %v2910 = vtanh.pop %v2903
  %v2911 = vmul.f32 %v2909, %v2706
  %2913 = vrot.lane.b32.xlu0 %v2910, 112
  %v2914 = vpop.permute.xlu0 %2913
  %v2916 = vmul.f32 %v2909, %v2914
  %2918 = vrot.lane.b32.xlu0 %v2916, 8
  %v2919 = vpop.permute.xlu0 %2918
  %v2921 = vadd.f32 %v2911, %v2919
  %v2922 = vtanh.pop %v2921
  %2924 = vrot.lane.b32.xlu0 %v2922, 16
  %v2925 = vpop.permute.xlu0 %2924
  %v2927 = vmul.f32 %v2909, %v2925
  %2929 = vrot.lane.b32.xlu0 %v2897, 104
  %v2930 = vpop.permute.xlu0 %2929
  %2932 = vst.msk [vmem:[#allocation3 + $0x6] sm:$0x3] %vm2286, %v2930
  %2934 = vrot.lane.b32.xlu0 %v2927, 72
  %v2935 = vpop.permute.xlu0 %2934
  %2937 = vst.msk [vmem:[#allocation4 + $0x8] sm:$0x3] %vm2286, %v2935
  %v2938 = vld [vmem:[%s5] sm:$0xff]
  %v2939 = vsel %vm2079, %v2930, 0
  %2941 = vmatprep.subr.mxu0 0.0
  %2942 = vmatpush1.msra.mxu0 %v2938
  %2943 = vmatprep.subr.mxu0 0.0
  %2944 = vmatpush1.msra.mxu0 0.0
  %2945 = vmatprep.subr.mxu0 0.0
  %2946 = vmatpush1.msra.mxu0 0.0
  %2947 = vmatprep.subr.mxu0 0.0
  %2948 = vmatpush1.msra.mxu0 0.0
  %2949 = vmatprep.subr.mxu0 0.0
  %2950 = vmatpush1.msra.mxu0 0.0
  %2951 = vmatprep.subr.mxu0 0.0
  %2952 = vmatpush1.msra.mxu0 0.0
  %2953 = vmatprep.subr.mxu0 0.0
  %2954 = vmatpush1.msra.mxu0 0.0
  %2955 = vmatprep.subr.mxu0 0.0
  %2956 = vmatpush1.msra.mxu0 0.0
  %2957 = vmatprep.subr.mxu0 0.0
  %2958 = vmatpush1.msra.mxu0 0.0
  %2959 = vmatprep.subr.mxu0 0.0
  %2960 = vmatpush1.msra.mxu0 0.0
  %2961 = vmatprep.subr.mxu0 0.0
  %2962 = vmatpush1.msra.mxu0 0.0
  %2963 = vmatprep.subr.mxu0 0.0
  %2964 = vmatpush1.msra.mxu0 0.0
  %2965 = vmatprep.subr.mxu0 0.0
  %2966 = vmatpush1.msra.mxu0 0.0
  %2967 = vmatprep.subr.mxu0 0.0
  %2968 = vmatpush1.msra.mxu0 0.0
  %2969 = vmatprep.subr.mxu0 0.0
  %2970 = vmatpush1.msra.mxu0 0.0
  %2971 = vmatprep.subr.mxu0 0.0
  %2972 = vmatpush1.msra.mxu0 0.0
  %2973 = vmatprep.subr.mxu0 0.0
  %2974 = vmatpush1.msra.mxu0 0.0
  %2975 = vmatprep.subr.mxu0 0.0
  %2976 = vmatpush1.msra.mxu0 0.0
  %2977 = vmatprep.subr.mxu0 0.0
  %2978 = vmatpush1.msra.mxu0 0.0
  %2979 = vmatprep.subr.mxu0 0.0
  %2980 = vmatpush1.msra.mxu0 0.0
  %2981 = vmatprep.subr.mxu0 0.0
  %2982 = vmatpush1.msra.mxu0 0.0
  %2983 = vmatprep.subr.mxu0 0.0
  %2984 = vmatpush1.msra.mxu0 0.0
  %2985 = vmatprep.subr.mxu0 0.0
  %2986 = vmatpush1.msra.mxu0 0.0
  %2987 = vmatprep.subr.mxu0 0.0
  %2988 = vmatpush1.msra.mxu0 0.0
  %2989 = vmatprep.subr.mxu0 0.0
  %2990 = vmatpush1.msra.mxu0 0.0
  %2991 = vmatprep.subr.mxu0 0.0
  %2992 = vmatpush1.msra.mxu0 0.0
  %2993 = vmatprep.subr.mxu0 0.0
  %2994 = vmatpush1.msra.mxu0 0.0
  %2995 = vmatprep.subr.mxu0 0.0
  %2996 = vmatpush1.msra.mxu0 0.0
  %2997 = vmatprep.subr.mxu0 0.0
  %2998 = vmatpush1.msra.mxu0 0.0
  %2999 = vmatprep.subr.mxu0 0.0
  %3000 = vmatpush1.msra.mxu0 0.0
  %3001 = vmatprep.subr.mxu0 0.0
  %3002 = vmatpush1.msra.mxu0 0.0
  %3003 = vmatprep.subr.mxu0 0.0
  %3004 = vmatpush1.msra.mxu0 0.0
  %3005 = vmatprep.mubr.f32.mxu0 0.0
  %3006 = vmatmul.mubr.f32.gmra.mrb[0].mxu0 %v2939
  %v3007 = vpop.f32.mrb[0].mxu0
  %v3008 = vadd.f32 0.0, %v3007
  %v3009 = vpop.f32.mrb[0].mxu0
  %3010 = vdwg.mxu0
  %3012 = vrot.lane.b32.xlu0 %v2938, 96
  %v3013 = vpop.permute.xlu0 %3012
  %v3015 = vsel %vm2079, %v2935, 0
  %3017 = vmatprep.subr.mxu0 0.0
  %3018 = vmatpush1.msra.mxu0 %v3013
  %3019 = vmatprep.subr.mxu0 0.0
  %3020 = vmatpush1.msra.mxu0 0.0
  %3021 = vmatprep.subr.mxu0 0.0
  %3022 = vmatpush1.msra.mxu0 0.0
  %3023 = vmatprep.subr.mxu0 0.0
  %3024 = vmatpush1.msra.mxu0 0.0
  %3025 = vmatprep.subr.mxu0 0.0
  %3026 = vmatpush1.msra.mxu0 0.0
  %3027 = vmatprep.subr.mxu0 0.0
  %3028 = vmatpush1.msra.mxu0 0.0
  %3029 = vmatprep.subr.mxu0 0.0
  %3030 = vmatpush1.msra.mxu0 0.0
  %3031 = vmatprep.subr.mxu0 0.0
  %3032 = vmatpush1.msra.mxu0 0.0
  %3033 = vmatprep.subr.mxu0 0.0
  %3034 = vmatpush1.msra.mxu0 0.0
  %3035 = vmatprep.subr.mxu0 0.0
  %3036 = vmatpush1.msra.mxu0 0.0
  %3037 = vmatprep.subr.mxu0 0.0
  %3038 = vmatpush1.msra.mxu0 0.0
  %3039 = vmatprep.subr.mxu0 0.0
  %3040 = vmatpush1.msra.mxu0 0.0
  %3041 = vmatprep.subr.mxu0 0.0
  %3042 = vmatpush1.msra.mxu0 0.0
  %3043 = vmatprep.subr.mxu0 0.0
  %3044 = vmatpush1.msra.mxu0 0.0
  %3045 = vmatprep.subr.mxu0 0.0
  %3046 = vmatpush1.msra.mxu0 0.0
  %3047 = vmatprep.subr.mxu0 0.0
  %3048 = vmatpush1.msra.mxu0 0.0
  %3049 = vmatprep.subr.mxu0 0.0
  %3050 = vmatpush1.msra.mxu0 0.0
  %3051 = vmatprep.subr.mxu0 0.0
  %3052 = vmatpush1.msra.mxu0 0.0
  %3053 = vmatprep.subr.mxu0 0.0
  %3054 = vmatpush1.msra.mxu0 0.0
  %3055 = vmatprep.subr.mxu0 0.0
  %3056 = vmatpush1.msra.mxu0 0.0
  %3057 = vmatprep.subr.mxu0 0.0
  %3058 = vmatpush1.msra.mxu0 0.0
  %3059 = vmatprep.subr.mxu0 0.0
  %3060 = vmatpush1.msra.mxu0 0.0
  %3061 = vmatprep.subr.mxu0 0.0
  %3062 = vmatpush1.msra.mxu0 0.0
  %3063 = vmatprep.subr.mxu0 0.0
  %3064 = vmatpush1.msra.mxu0 0.0
  %3065 = vmatprep.subr.mxu0 0.0
  %3066 = vmatpush1.msra.mxu0 0.0
  %3067 = vmatprep.subr.mxu0 0.0
  %3068 = vmatpush1.msra.mxu0 0.0
  %3069 = vmatprep.subr.mxu0 0.0
  %3070 = vmatpush1.msra.mxu0 0.0
  %3071 = vmatprep.subr.mxu0 0.0
  %3072 = vmatpush1.msra.mxu0 0.0
  %3073 = vmatprep.subr.mxu0 0.0
  %3074 = vmatpush1.msra.mxu0 0.0
  %3075 = vmatprep.subr.mxu0 0.0
  %3076 = vmatpush1.msra.mxu0 0.0
  %3077 = vmatprep.subr.mxu0 0.0
  %3078 = vmatpush1.msra.mxu0 0.0
  %3079 = vmatprep.subr.mxu0 0.0
  %3080 = vmatpush1.msra.mxu0 0.0
  %3081 = vmatprep.mubr.f32.mxu0 0.0
  %3082 = vmatmul.mubr.f32.gmra.mrb[0].mxu0 %v3015
  %v3083 = vpop.f32.mrb[0].mxu0
  %v3084 = vadd.f32 0.0, %v3083
  %v3085 = vpop.f32.mrb[0].mxu0
  %3086 = vdwg.mxu0
  %v3087 = vld [vmem:[#allocation2 + $0x8] sm:$0x3]
  %v3088 = vadd.f32 %v3087, %v3008
  %v3089 = vxor.u32 %v3088, 2147483648
  %v3090 = vmul.f32 %v3089, 1.442695
  %v3091 = vpow.pop %v3090
  %v3092 = vadd.f32 %v3091, 1.0
  %v3093 = vrcp.pop %v3092
  %v3094 = vmul.f32 1.0, %v3093
  %v3095 = vtanh.pop %v3088
  %v3096 = vmul.f32 %v3094, %v2891
  %3098 = vrot.lane.b32.xlu0 %v3095, 112
  %v3099 = vpop.permute.xlu0 %3098
  %v3101 = vmul.f32 %v3094, %v3099
  %3103 = vrot.lane.b32.xlu0 %v3101, 8
  %v3104 = vpop.permute.xlu0 %3103
  %v3106 = vadd.f32 %v3096, %v3104
  %v3107 = vtanh.pop %v3106
  %3109 = vrot.lane.b32.xlu0 %v3107, 16
  %v3110 = vpop.permute.xlu0 %3109
  %v3112 = vmul.f32 %v3094, %v3110
  %v3113 = vld [vmem:[#allocation2 + $0x6] sm:$0x3]
  %3115 = vrot.lane.b32.xlu0 %v3084, 32
  %v3116 = vpop.permute.xlu0 %3115
  %v3118 = vadd.f32 %v3113, %v3116
  %v3119 = vxor.u32 %v3118, 2147483648
  %v3120 = vmul.f32 %v3119, 1.442695
  %v3121 = vpow.pop %v3120
  %v3122 = vadd.f32 %v3121, 1.0
  %v3123 = vrcp.pop %v3122
  %v3124 = vmul.f32 1.0, %v3123
  %v3125 = vtanh.pop %v3118
  %v3126 = vmul.f32 %v3124, %v2921
  %3128 = vrot.lane.b32.xlu0 %v3125, 112
  %v3129 = vpop.permute.xlu0 %3128
  %v3131 = vmul.f32 %v3124, %v3129
  %3133 = vrot.lane.b32.xlu0 %v3131, 8
  %v3134 = vpop.permute.xlu0 %3133
  %v3136 = vadd.f32 %v3126, %v3134
  %v3137 = vtanh.pop %v3136
  %3139 = vrot.lane.b32.xlu0 %v3137, 16
  %v3140 = vpop.permute.xlu0 %3139
  %v3142 = vmul.f32 %v3124, %v3140
  %3144 = vrot.lane.b32.xlu0 %v3112, 104
  %v3145 = vpop.permute.xlu0 %3144
  %3147 = vst.msk [vmem:[#allocation3 + $0x8] sm:$0x3] %vm2286, %v3145
  %3149 = vrot.lane.b32.xlu0 %v3142, 72
  %v3150 = vpop.permute.xlu0 %3149
  %3152 = vst.msk [vmem:[#allocation4 + $0x6] sm:$0x3] %vm2286, %v3150
  %v3153 = vld [vmem:[%s5] sm:$0xff]
  %v3154 = vsel %vm2079, %v3145, 0
  %3156 = vmatprep.subr.mxu0 0.0
  %3157 = vmatpush1.msra.mxu0 %v3153
  %3158 = vmatprep.subr.mxu0 0.0
  %3159 = vmatpush1.msra.mxu0 0.0
  %3160 = vmatprep.subr.mxu0 0.0
  %3161 = vmatpush1.msra.mxu0 0.0
  %3162 = vmatprep.subr.mxu0 0.0
  %3163 = vmatpush1.msra.mxu0 0.0
  %3164 = vmatprep.subr.mxu0 0.0
  %3165 = vmatpush1.msra.mxu0 0.0
  %3166 = vmatprep.subr.mxu0 0.0
  %3167 = vmatpush1.msra.mxu0 0.0
  %3168 = vmatprep.subr.mxu0 0.0
  %3169 = vmatpush1.msra.mxu0 0.0
  %3170 = vmatprep.subr.mxu0 0.0
  %3171 = vmatpush1.msra.mxu0 0.0
  %3172 = vmatprep.subr.mxu0 0.0
  %3173 = vmatpush1.msra.mxu0 0.0
  %3174 = vmatprep.subr.mxu0 0.0
  %3175 = vmatpush1.msra.mxu0 0.0
  %3176 = vmatprep.subr.mxu0 0.0
  %3177 = vmatpush1.msra.mxu0 0.0
  %3178 = vmatprep.subr.mxu0 0.0
  %3179 = vmatpush1.msra.mxu0 0.0
  %3180 = vmatprep.subr.mxu0 0.0
  %3181 = vmatpush1.msra.mxu0 0.0
  %3182 = vmatprep.subr.mxu0 0.0
  %3183 = vmatpush1.msra.mxu0 0.0
  %3184 = vmatprep.subr.mxu0 0.0
  %3185 = vmatpush1.msra.mxu0 0.0
  %3186 = vmatprep.subr.mxu0 0.0
  %3187 = vmatpush1.msra.mxu0 0.0
  %3188 = vmatprep.subr.mxu0 0.0
  %3189 = vmatpush1.msra.mxu0 0.0
  %3190 = vmatprep.subr.mxu0 0.0
  %3191 = vmatpush1.msra.mxu0 0.0
  %3192 = vmatprep.subr.mxu0 0.0
  %3193 = vmatpush1.msra.mxu0 0.0
  %3194 = vmatprep.subr.mxu0 0.0
  %3195 = vmatpush1.msra.mxu0 0.0
  %3196 = vmatprep.subr.mxu0 0.0
  %3197 = vmatpush1.msra.mxu0 0.0
  %3198 = vmatprep.subr.mxu0 0.0
  %3199 = vmatpush1.msra.mxu0 0.0
  %3200 = vmatprep.subr.mxu0 0.0
  %3201 = vmatpush1.msra.mxu0 0.0
  %3202 = vmatprep.subr.mxu0 0.0
  %3203 = vmatpush1.msra.mxu0 0.0
  %3204 = vmatprep.subr.mxu0 0.0
  %3205 = vmatpush1.msra.mxu0 0.0
  %3206 = vmatprep.subr.mxu0 0.0
  %3207 = vmatpush1.msra.mxu0 0.0
  %3208 = vmatprep.subr.mxu0 0.0
  %3209 = vmatpush1.msra.mxu0 0.0
  %3210 = vmatprep.subr.mxu0 0.0
  %3211 = vmatpush1.msra.mxu0 0.0
  %3212 = vmatprep.subr.mxu0 0.0
  %3213 = vmatpush1.msra.mxu0 0.0
  %3214 = vmatprep.subr.mxu0 0.0
  %3215 = vmatpush1.msra.mxu0 0.0
  %3216 = vmatprep.subr.mxu0 0.0
  %3217 = vmatpush1.msra.mxu0 0.0
  %3218 = vmatprep.subr.mxu0 0.0
  %3219 = vmatpush1.msra.mxu0 0.0
  %3220 = vmatprep.mubr.f32.mxu0 0.0
  %3221 = vmatmul.mubr.f32.gmra.mrb[0].mxu0 %v3154
  %v3222 = vpop.f32.mrb[0].mxu0
  %v3223 = vadd.f32 0.0, %v3222
  %v3224 = vpop.f32.mrb[0].mxu0
  %3225 = vdwg.mxu0
  %3227 = vrot.lane.b32.xlu0 %v3153, 96
  %v3228 = vpop.permute.xlu0 %3227
  %v3230 = vsel %vm2079, %v3150, 0
  %3232 = vmatprep.subr.mxu0 0.0
  %3233 = vmatpush1.msra.mxu0 %v3228
  %3234 = vmatprep.subr.mxu0 0.0
  %3235 = vmatpush1.msra.mxu0 0.0
  %3236 = vmatprep.subr.mxu0 0.0
  %3237 = vmatpush1.msra.mxu0 0.0
  %3238 = vmatprep.subr.mxu0 0.0
  %3239 = vmatpush1.msra.mxu0 0.0
  %3240 = vmatprep.subr.mxu0 0.0
  %3241 = vmatpush1.msra.mxu0 0.0
  %3242 = vmatprep.subr.mxu0 0.0
  %3243 = vmatpush1.msra.mxu0 0.0
  %3244 = vmatprep.subr.mxu0 0.0
  %3245 = vmatpush1.msra.mxu0 0.0
  %3246 = vmatprep.subr.mxu0 0.0
  %3247 = vmatpush1.msra.mxu0 0.0
  %3248 = vmatprep.subr.mxu0 0.0
  %3249 = vmatpush1.msra.mxu0 0.0
  %3250 = vmatprep.subr.mxu0 0.0
  %3251 = vmatpush1.msra.mxu0 0.0
  %3252 = vmatprep.subr.mxu0 0.0
  %3253 = vmatpush1.msra.mxu0 0.0
  %3254 = vmatprep.subr.mxu0 0.0
  %3255 = vmatpush1.msra.mxu0 0.0
  %3256 = vmatprep.subr.mxu0 0.0
  %3257 = vmatpush1.msra.mxu0 0.0
  %3258 = vmatprep.subr.mxu0 0.0
  %3259 = vmatpush1.msra.mxu0 0.0
  %3260 = vmatprep.subr.mxu0 0.0
  %3261 = vmatpush1.msra.mxu0 0.0
  %3262 = vmatprep.subr.mxu0 0.0
  %3263 = vmatpush1.msra.mxu0 0.0
  %3264 = vmatprep.subr.mxu0 0.0
  %3265 = vmatpush1.msra.mxu0 0.0
  %3266 = vmatprep.subr.mxu0 0.0
  %3267 = vmatpush1.msra.mxu0 0.0
  %3268 = vmatprep.subr.mxu0 0.0
  %3269 = vmatpush1.msra.mxu0 0.0
  %3270 = vmatprep.subr.mxu0 0.0
  %3271 = vmatpush1.msra.mxu0 0.0
  %3272 = vmatprep.subr.mxu0 0.0
  %3273 = vmatpush1.msra.mxu0 0.0
  %3274 = vmatprep.subr.mxu0 0.0
  %3275 = vmatpush1.msra.mxu0 0.0
  %3276 = vmatprep.subr.mxu0 0.0
  %3277 = vmatpush1.msra.mxu0 0.0
  %3278 = vmatprep.subr.mxu0 0.0
  %3279 = vmatpush1.msra.mxu0 0.0
  %3280 = vmatprep.subr.mxu0 0.0
  %3281 = vmatpush1.msra.mxu0 0.0
  %3282 = vmatprep.subr.mxu0 0.0
  %3283 = vmatpush1.msra.mxu0 0.0
  %3284 = vmatprep.subr.mxu0 0.0
  %3285 = vmatpush1.msra.mxu0 0.0
  %3286 = vmatprep.subr.mxu0 0.0
  %3287 = vmatpush1.msra.mxu0 0.0
  %3288 = vmatprep.subr.mxu0 0.0
  %3289 = vmatpush1.msra.mxu0 0.0
  %3290 = vmatprep.subr.mxu0 0.0
  %3291 = vmatpush1.msra.mxu0 0.0
  %3292 = vmatprep.subr.mxu0 0.0
  %3293 = vmatpush1.msra.mxu0 0.0
  %3294 = vmatprep.subr.mxu0 0.0
  %3295 = vmatpush1.msra.mxu0 0.0
  %3296 = vmatprep.mubr.f32.mxu0 0.0
  %3297 = vmatmul.mubr.f32.gmra.mrb[0].mxu0 %v3230
  %v3298 = vpop.f32.mrb[0].mxu0
  %v3299 = vadd.f32 0.0, %v3298
  %v3300 = vpop.f32.mrb[0].mxu0
  %3301 = vdwg.mxu0
  %v3302 = vld [vmem:[#allocation2 + $0xa] sm:$0x3]
  %v3303 = vadd.f32 %v3302, %v3223
  %v3304 = vxor.u32 %v3303, 2147483648
  %v3305 = vmul.f32 %v3304, 1.442695
  %v3306 = vpow.pop %v3305
  %v3307 = vadd.f32 %v3306, 1.0
  %v3308 = vrcp.pop %v3307
  %v3309 = vmul.f32 1.0, %v3308
  %v3310 = vtanh.pop %v3303
  %v3311 = vmul.f32 %v3309, %v3106
  %3313 = vrot.lane.b32.xlu0 %v3310, 112
  %v3314 = vpop.permute.xlu0 %3313
  %v3316 = vmul.f32 %v3309, %v3314
  %3318 = vrot.lane.b32.xlu0 %v3316, 8
  %v3319 = vpop.permute.xlu0 %3318
  %v3321 = vadd.f32 %v3311, %v3319
  %v3322 = vtanh.pop %v3321
  %3324 = vrot.lane.b32.xlu0 %v3322, 16
  %v3325 = vpop.permute.xlu0 %3324
  %v3327 = vmul.f32 %v3309, %v3325
  %v3328 = vld [vmem:[#allocation2 + $0x4] sm:$0x3]
  %3330 = vrot.lane.b32.xlu0 %v3299, 32
  %v3331 = vpop.permute.xlu0 %3330
  %v3333 = vadd.f32 %v3328, %v3331
  %v3334 = vxor.u32 %v3333, 2147483648
  %v3335 = vmul.f32 %v3334, 1.442695
  %v3336 = vpow.pop %v3335
  %v3337 = vadd.f32 %v3336, 1.0
  %v3338 = vrcp.pop %v3337
  %v3339 = vmul.f32 1.0, %v3338
  %v3340 = vtanh.pop %v3333
  %v3341 = vmul.f32 %v3339, %v3136
  %3343 = vrot.lane.b32.xlu0 %v3340, 112
  %v3344 = vpop.permute.xlu0 %3343
  %v3346 = vmul.f32 %v3339, %v3344
  %3348 = vrot.lane.b32.xlu0 %v3346, 8
  %v3349 = vpop.permute.xlu0 %3348
  %v3351 = vadd.f32 %v3341, %v3349
  %v3352 = vtanh.pop %v3351
  %3354 = vrot.lane.b32.xlu0 %v3352, 16
  %v3355 = vpop.permute.xlu0 %3354
  %v3357 = vmul.f32 %v3339, %v3355
  %3359 = vrot.lane.b32.xlu0 %v3327, 104
  %v3360 = vpop.permute.xlu0 %3359
  %3362 = vst.msk [vmem:[#allocation3 + $0xa] sm:$0x3] %vm2286, %v3360
  %3364 = vrot.lane.b32.xlu0 %v3357, 72
  %v3365 = vpop.permute.xlu0 %3364
  %3367 = vst.msk [vmem:[#allocation4 + $0x4] sm:$0x3] %vm2286, %v3365
  %v3368 = vld [vmem:[%s5] sm:$0xff]
  %v3369 = vsel %vm2079, %v3360, 0
  %3371 = vmatprep.subr.mxu0 0.0
  %3372 = vmatpush1.msra.mxu0 %v3368
  %3373 = vmatprep.subr.mxu0 0.0
  %3374 = vmatpush1.msra.mxu0 0.0
  %3375 = vmatprep.subr.mxu0 0.0
  %3376 = vmatpush1.msra.mxu0 0.0
  %3377 = vmatprep.subr.mxu0 0.0
  %3378 = vmatpush1.msra.mxu0 0.0
  %3379 = vmatprep.subr.mxu0 0.0
  %3380 = vmatpush1.msra.mxu0 0.0
  %3381 = vmatprep.subr.mxu0 0.0
  %3382 = vmatpush1.msra.mxu0 0.0
  %3383 = vmatprep.subr.mxu0 0.0
  %3384 = vmatpush1.msra.mxu0 0.0
  %3385 = vmatprep.subr.mxu0 0.0
  %3386 = vmatpush1.msra.mxu0 0.0
  %3387 = vmatprep.subr.mxu0 0.0
  %3388 = vmatpush1.msra.mxu0 0.0
  %3389 = vmatprep.subr.mxu0 0.0
  %3390 = vmatpush1.msra.mxu0 0.0
  %3391 = vmatprep.subr.mxu0 0.0
  %3392 = vmatpush1.msra.mxu0 0.0
  %3393 = vmatprep.subr.mxu0 0.0
  %3394 = vmatpush1.msra.mxu0 0.0
  %3395 = vmatprep.subr.mxu0 0.0
  %3396 = vmatpush1.msra.mxu0 0.0
  %3397 = vmatprep.subr.mxu0 0.0
  %3398 = vmatpush1.msra.mxu0 0.0
  %3399 = vmatprep.subr.mxu0 0.0
  %3400 = vmatpush1.msra.mxu0 0.0
  %3401 = vmatprep.subr.mxu0 0.0
  %3402 = vmatpush1.msra.mxu0 0.0
  %3403 = vmatprep.subr.mxu0 0.0
  %3404 = vmatpush1.msra.mxu0 0.0
  %3405 = vmatprep.subr.mxu0 0.0
  %3406 = vmatpush1.msra.mxu0 0.0
  %3407 = vmatprep.subr.mxu0 0.0
  %3408 = vmatpush1.msra.mxu0 0.0
  %3409 = vmatprep.subr.mxu0 0.0
  %3410 = vmatpush1.msra.mxu0 0.0
  %3411 = vmatprep.subr.mxu0 0.0
  %3412 = vmatpush1.msra.mxu0 0.0
  %3413 = vmatprep.subr.mxu0 0.0
  %3414 = vmatpush1.msra.mxu0 0.0
  %3415 = vmatprep.subr.mxu0 0.0
  %3416 = vmatpush1.msra.mxu0 0.0
  %3417 = vmatprep.subr.mxu0 0.0
  %3418 = vmatpush1.msra.mxu0 0.0
  %3419 = vmatprep.subr.mxu0 0.0
  %3420 = vmatpush1.msra.mxu0 0.0
  %3421 = vmatprep.subr.mxu0 0.0
  %3422 = vmatpush1.msra.mxu0 0.0
  %3423 = vmatprep.subr.mxu0 0.0
  %3424 = vmatpush1.msra.mxu0 0.0
  %3425 = vmatprep.subr.mxu0 0.0
  %3426 = vmatpush1.msra.mxu0 0.0
  %3427 = vmatprep.subr.mxu0 0.0
  %3428 = vmatpush1.msra.mxu0 0.0
  %3429 = vmatprep.subr.mxu0 0.0
  %3430 = vmatpush1.msra.mxu0 0.0
  %3431 = vmatprep.subr.mxu0 0.0
  %3432 = vmatpush1.msra.mxu0 0.0
  %3433 = vmatprep.subr.mxu0 0.0
  %3434 = vmatpush1.msra.mxu0 0.0
  %3435 = vmatprep.mubr.f32.mxu0 0.0
  %3436 = vmatmul.mubr.f32.gmra.mrb[0].mxu0 %v3369
  %v3437 = vpop.f32.mrb[0].mxu0
  %v3438 = vadd.f32 0.0, %v3437
  %v3439 = vpop.f32.mrb[0].mxu0
  %3440 = vdwg.mxu0
  %3442 = vrot.lane.b32.xlu0 %v3368, 96
  %v3443 = vpop.permute.xlu0 %3442
  %v3445 = vsel %vm2079, %v3365, 0
  %3447 = vmatprep.subr.mxu0 0.0
  %3448 = vmatpush1.msra.mxu0 %v3443
  %3449 = vmatprep.subr.mxu0 0.0
  %3450 = vmatpush1.msra.mxu0 0.0
  %3451 = vmatprep.subr.mxu0 0.0
  %3452 = vmatpush1.msra.mxu0 0.0
  %3453 = vmatprep.subr.mxu0 0.0
  %3454 = vmatpush1.msra.mxu0 0.0
  %3455 = vmatprep.subr.mxu0 0.0
  %3456 = vmatpush1.msra.mxu0 0.0
  %3457 = vmatprep.subr.mxu0 0.0
  %3458 = vmatpush1.msra.mxu0 0.0
  %3459 = vmatprep.subr.mxu0 0.0
  %3460 = vmatpush1.msra.mxu0 0.0
  %3461 = vmatprep.subr.mxu0 0.0
  %3462 = vmatpush1.msra.mxu0 0.0
  %3463 = vmatprep.subr.mxu0 0.0
  %3464 = vmatpush1.msra.mxu0 0.0
  %3465 = vmatprep.subr.mxu0 0.0
  %3466 = vmatpush1.msra.mxu0 0.0
  %3467 = vmatprep.subr.mxu0 0.0
  %3468 = vmatpush1.msra.mxu0 0.0
  %3469 = vmatprep.subr.mxu0 0.0
  %3470 = vmatpush1.msra.mxu0 0.0
  %3471 = vmatprep.subr.mxu0 0.0
  %3472 = vmatpush1.msra.mxu0 0.0
  %3473 = vmatprep.subr.mxu0 0.0
  %3474 = vmatpush1.msra.mxu0 0.0
  %3475 = vmatprep.subr.mxu0 0.0
  %3476 = vmatpush1.msra.mxu0 0.0
  %3477 = vmatprep.subr.mxu0 0.0
  %3478 = vmatpush1.msra.mxu0 0.0
  %3479 = vmatprep.subr.mxu0 0.0
  %3480 = vmatpush1.msra.mxu0 0.0
  %3481 = vmatprep.subr.mxu0 0.0
  %3482 = vmatpush1.msra.mxu0 0.0
  %3483 = vmatprep.subr.mxu0 0.0
  %3484 = vmatpush1.msra.mxu0 0.0
  %3485 = vmatprep.subr.mxu0 0.0
  %3486 = vmatpush1.msra.mxu0 0.0
  %3487 = vmatprep.subr.mxu0 0.0
  %3488 = vmatpush1.msra.mxu0 0.0
  %3489 = vmatprep.subr.mxu0 0.0
  %3490 = vmatpush1.msra.mxu0 0.0
  %3491 = vmatprep.subr.mxu0 0.0
  %3492 = vmatpush1.msra.mxu0 0.0
  %3493 = vmatprep.subr.mxu0 0.0
  %3494 = vmatpush1.msra.mxu0 0.0
  %3495 = vmatprep.subr.mxu0 0.0
  %3496 = vmatpush1.msra.mxu0 0.0
  %3497 = vmatprep.subr.mxu0 0.0
  %3498 = vmatpush1.msra.mxu0 0.0
  %3499 = vmatprep.subr.mxu0 0.0
  %3500 = vmatpush1.msra.mxu0 0.0
  %3501 = vmatprep.subr.mxu0 0.0
  %3502 = vmatpush1.msra.mxu0 0.0
  %3503 = vmatprep.subr.mxu0 0.0
  %3504 = vmatpush1.msra.mxu0 0.0
  %3505 = vmatprep.subr.mxu0 0.0
  %3506 = vmatpush1.msra.mxu0 0.0
  %3507 = vmatprep.subr.mxu0 0.0
  %3508 = vmatpush1.msra.mxu0 0.0
  %3509 = vmatprep.subr.mxu0 0.0
  %3510 = vmatpush1.msra.mxu0 0.0
  %3511 = vmatprep.mubr.f32.mxu0 0.0
  %3512 = vmatmul.mubr.f32.gmra.mrb[0].mxu0 %v3445
  %v3513 = vpop.f32.mrb[0].mxu0
  %v3514 = vadd.f32 0.0, %v3513
  %v3515 = vpop.f32.mrb[0].mxu0
  %3516 = vdwg.mxu0
  %v3517 = vld [vmem:[#allocation2 + $0xc] sm:$0x3]
  %v3518 = vadd.f32 %v3517, %v3438
  %v3519 = vxor.u32 %v3518, 2147483648
  %v3520 = vmul.f32 %v3519, 1.442695
  %v3521 = vpow.pop %v3520
  %v3522 = vadd.f32 %v3521, 1.0
  %v3523 = vrcp.pop %v3522
  %v3524 = vmul.f32 1.0, %v3523
  %v3525 = vtanh.pop %v3518
  %v3526 = vmul.f32 %v3524, %v3321
  %3528 = vrot.lane.b32.xlu0 %v3525, 112
  %v3529 = vpop.permute.xlu0 %3528
  %v3531 = vmul.f32 %v3524, %v3529
  %3533 = vrot.lane.b32.xlu0 %v3531, 8
  %v3534 = vpop.permute.xlu0 %3533
  %v3536 = vadd.f32 %v3526, %v3534
  %v3537 = vtanh.pop %v3536
  %3539 = vrot.lane.b32.xlu0 %v3537, 16
  %v3540 = vpop.permute.xlu0 %3539
  %v3542 = vmul.f32 %v3524, %v3540
  %v3543 = vld [vmem:[#allocation2 + $0x2] sm:$0x3]
  %3545 = vrot.lane.b32.xlu0 %v3514, 32
  %v3546 = vpop.permute.xlu0 %3545
  %v3548 = vadd.f32 %v3543, %v3546
  %v3549 = vxor.u32 %v3548, 2147483648
  %v3550 = vmul.f32 %v3549, 1.442695
  %v3551 = vpow.pop %v3550
  %v3552 = vadd.f32 %v3551, 1.0
  %v3553 = vrcp.pop %v3552
  %v3554 = vmul.f32 1.0, %v3553
  %v3555 = vtanh.pop %v3548
  %v3556 = vmul.f32 %v3554, %v3351
  %3558 = vrot.lane.b32.xlu0 %v3555, 112
  %v3559 = vpop.permute.xlu0 %3558
  %v3561 = vmul.f32 %v3554, %v3559
  %3563 = vrot.lane.b32.xlu0 %v3561, 8
  %v3564 = vpop.permute.xlu0 %3563
  %v3566 = vadd.f32 %v3556, %v3564
  %v3567 = vtanh.pop %v3566
  %3569 = vrot.lane.b32.xlu0 %v3567, 16
  %v3570 = vpop.permute.xlu0 %3569
  %v3572 = vmul.f32 %v3554, %v3570
  %3574 = vrot.lane.b32.xlu0 %v3542, 104
  %v3575 = vpop.permute.xlu0 %3574
  %3577 = vst.msk [vmem:[#allocation3 + $0xc] sm:$0x3] %vm2286, %v3575
  %3579 = vrot.lane.b32.xlu0 %v3572, 72
  %v3580 = vpop.permute.xlu0 %3579
  %3582 = vst.msk [vmem:[#allocation4 + $0x2] sm:$0x3] %vm2286, %v3580
  %v3583 = vld [vmem:[%s5] sm:$0xff]
  %v3584 = vsel %vm2079, %v3575, 0
  %3586 = vmatprep.subr.mxu0 0.0
  %3587 = vmatpush1.msra.mxu0 %v3583
  %3588 = vmatprep.subr.mxu0 0.0
  %3589 = vmatpush1.msra.mxu0 0.0
  %3590 = vmatprep.subr.mxu0 0.0
  %3591 = vmatpush1.msra.mxu0 0.0
  %3592 = vmatprep.subr.mxu0 0.0
  %3593 = vmatpush1.msra.mxu0 0.0
  %3594 = vmatprep.subr.mxu0 0.0
  %3595 = vmatpush1.msra.mxu0 0.0
  %3596 = vmatprep.subr.mxu0 0.0
  %3597 = vmatpush1.msra.mxu0 0.0
  %3598 = vmatprep.subr.mxu0 0.0
  %3599 = vmatpush1.msra.mxu0 0.0
  %3600 = vmatprep.subr.mxu0 0.0
  %3601 = vmatpush1.msra.mxu0 0.0
  %3602 = vmatprep.subr.mxu0 0.0
  %3603 = vmatpush1.msra.mxu0 0.0
  %3604 = vmatprep.subr.mxu0 0.0
  %3605 = vmatpush1.msra.mxu0 0.0
  %3606 = vmatprep.subr.mxu0 0.0
  %3607 = vmatpush1.msra.mxu0 0.0
  %3608 = vmatprep.subr.mxu0 0.0
  %3609 = vmatpush1.msra.mxu0 0.0
  %3610 = vmatprep.subr.mxu0 0.0
  %3611 = vmatpush1.msra.mxu0 0.0
  %3612 = vmatprep.subr.mxu0 0.0
  %3613 = vmatpush1.msra.mxu0 0.0
  %3614 = vmatprep.subr.mxu0 0.0
  %3615 = vmatpush1.msra.mxu0 0.0
  %3616 = vmatprep.subr.mxu0 0.0
  %3617 = vmatpush1.msra.mxu0 0.0
  %3618 = vmatprep.subr.mxu0 0.0
  %3619 = vmatpush1.msra.mxu0 0.0
  %3620 = vmatprep.subr.mxu0 0.0
  %3621 = vmatpush1.msra.mxu0 0.0
  %3622 = vmatprep.subr.mxu0 0.0
  %3623 = vmatpush1.msra.mxu0 0.0
  %3624 = vmatprep.subr.mxu0 0.0
  %3625 = vmatpush1.msra.mxu0 0.0
  %3626 = vmatprep.subr.mxu0 0.0
  %3627 = vmatpush1.msra.mxu0 0.0
  %3628 = vmatprep.subr.mxu0 0.0
  %3629 = vmatpush1.msra.mxu0 0.0
  %3630 = vmatprep.subr.mxu0 0.0
  %3631 = vmatpush1.msra.mxu0 0.0
  %3632 = vmatprep.subr.mxu0 0.0
  %3633 = vmatpush1.msra.mxu0 0.0
  %3634 = vmatprep.subr.mxu0 0.0
  %3635 = vmatpush1.msra.mxu0 0.0
  %3636 = vmatprep.subr.mxu0 0.0
  %3637 = vmatpush1.msra.mxu0 0.0
  %3638 = vmatprep.subr.mxu0 0.0
  %3639 = vmatpush1.msra.mxu0 0.0
  %3640 = vmatprep.subr.mxu0 0.0
  %3641 = vmatpush1.msra.mxu0 0.0
  %3642 = vmatprep.subr.mxu0 0.0
  %3643 = vmatpush1.msra.mxu0 0.0
  %3644 = vmatprep.subr.mxu0 0.0
  %3645 = vmatpush1.msra.mxu0 0.0
  %3646 = vmatprep.subr.mxu0 0.0
  %3647 = vmatpush1.msra.mxu0 0.0
  %3648 = vmatprep.subr.mxu0 0.0
  %3649 = vmatpush1.msra.mxu0 0.0
  %3650 = vmatprep.mubr.f32.mxu0 0.0
  %3651 = vmatmul.mubr.f32.gmra.mrb[0].mxu0 %v3584
  %v3652 = vpop.f32.mrb[0].mxu0
  %v3653 = vadd.f32 0.0, %v3652
  %v3654 = vpop.f32.mrb[0].mxu0
  %3655 = vdwg.mxu0
  %3657 = vrot.lane.b32.xlu0 %v3583, 96
  %v3658 = vpop.permute.xlu0 %3657
  %v3660 = vsel %vm2079, %v3580, 0
  %3662 = vmatprep.subr.mxu0 0.0
  %3663 = vmatpush1.msra.mxu0 %v3658
  %3664 = vmatprep.subr.mxu0 0.0
  %3665 = vmatpush1.msra.mxu0 0.0
  %3666 = vmatprep.subr.mxu0 0.0
  %3667 = vmatpush1.msra.mxu0 0.0
  %3668 = vmatprep.subr.mxu0 0.0
  %3669 = vmatpush1.msra.mxu0 0.0
  %3670 = vmatprep.subr.mxu0 0.0
  %3671 = vmatpush1.msra.mxu0 0.0
  %3672 = vmatprep.subr.mxu0 0.0
  %3673 = vmatpush1.msra.mxu0 0.0
  %3674 = vmatprep.subr.mxu0 0.0
  %3675 = vmatpush1.msra.mxu0 0.0
  %3676 = vmatprep.subr.mxu0 0.0
  %3677 = vmatpush1.msra.mxu0 0.0
  %3678 = vmatprep.subr.mxu0 0.0
  %3679 = vmatpush1.msra.mxu0 0.0
  %3680 = vmatprep.subr.mxu0 0.0
  %3681 = vmatpush1.msra.mxu0 0.0
  %3682 = vmatprep.subr.mxu0 0.0
  %3683 = vmatpush1.msra.mxu0 0.0
  %3684 = vmatprep.subr.mxu0 0.0
  %3685 = vmatpush1.msra.mxu0 0.0
  %3686 = vmatprep.subr.mxu0 0.0
  %3687 = vmatpush1.msra.mxu0 0.0
  %3688 = vmatprep.subr.mxu0 0.0
  %3689 = vmatpush1.msra.mxu0 0.0
  %3690 = vmatprep.subr.mxu0 0.0
  %3691 = vmatpush1.msra.mxu0 0.0
  %3692 = vmatprep.subr.mxu0 0.0
  %3693 = vmatpush1.msra.mxu0 0.0
  %3694 = vmatprep.subr.mxu0 0.0
  %3695 = vmatpush1.msra.mxu0 0.0
  %3696 = vmatprep.subr.mxu0 0.0
  %3697 = vmatpush1.msra.mxu0 0.0
  %3698 = vmatprep.subr.mxu0 0.0
  %3699 = vmatpush1.msra.mxu0 0.0
  %3700 = vmatprep.subr.mxu0 0.0
  %3701 = vmatpush1.msra.mxu0 0.0
  %3702 = vmatprep.subr.mxu0 0.0
  %3703 = vmatpush1.msra.mxu0 0.0
  %3704 = vmatprep.subr.mxu0 0.0
  %3705 = vmatpush1.msra.mxu0 0.0
  %3706 = vmatprep.subr.mxu0 0.0
  %3707 = vmatpush1.msra.mxu0 0.0
  %3708 = vmatprep.subr.mxu0 0.0
  %3709 = vmatpush1.msra.mxu0 0.0
  %3710 = vmatprep.subr.mxu0 0.0
  %3711 = vmatpush1.msra.mxu0 0.0
  %3712 = vmatprep.subr.mxu0 0.0
  %3713 = vmatpush1.msra.mxu0 0.0
  %3714 = vmatprep.subr.mxu0 0.0
  %3715 = vmatpush1.msra.mxu0 0.0
  %3716 = vmatprep.subr.mxu0 0.0
  %3717 = vmatpush1.msra.mxu0 0.0
  %3718 = vmatprep.subr.mxu0 0.0
  %3719 = vmatpush1.msra.mxu0 0.0
  %3720 = vmatprep.subr.mxu0 0.0
  %3721 = vmatpush1.msra.mxu0 0.0
  %3722 = vmatprep.subr.mxu0 0.0
  %3723 = vmatpush1.msra.mxu0 0.0
  %3724 = vmatprep.subr.mxu0 0.0
  %3725 = vmatpush1.msra.mxu0 0.0
  %3726 = vmatprep.mubr.f32.mxu0 0.0
  %3727 = vmatmul.mubr.f32.gmra.mrb[0].mxu0 %v3660
  %v3728 = vpop.f32.mrb[0].mxu0
  %v3729 = vadd.f32 0.0, %v3728
  %v3730 = vpop.f32.mrb[0].mxu0
  %3731 = vdwg.mxu0
  %v3732 = vld [vmem:[#allocation2 + $0xe] sm:$0x3]
  %v3733 = vadd.f32 %v3732, %v3653
  %v3734 = vxor.u32 %v3733, 2147483648
  %v3735 = vmul.f32 %v3734, 1.442695
  %v3736 = vpow.pop %v3735
  %v3737 = vadd.f32 %v3736, 1.0
  %v3738 = vrcp.pop %v3737
  %v3739 = vmul.f32 1.0, %v3738
  %v3740 = vtanh.pop %v3733
  %v3741 = vmul.f32 %v3739, %v3536
  %3743 = vrot.lane.b32.xlu0 %v3740, 112
  %v3744 = vpop.permute.xlu0 %3743
  %v3746 = vmul.f32 %v3739, %v3744
  %3748 = vrot.lane.b32.xlu0 %v3746, 8
  %v3749 = vpop.permute.xlu0 %3748
  %v3751 = vadd.f32 %v3741, %v3749
  %v3752 = vtanh.pop %v3751
  %3754 = vrot.lane.b32.xlu0 %v3752, 16
  %v3755 = vpop.permute.xlu0 %3754
  %v3757 = vmul.f32 %v3739, %v3755
  %v3758 = vld [vmem:[#allocation2] sm:$0x3]
  %3760 = vrot.lane.b32.xlu0 %v3729, 32
  %v3761 = vpop.permute.xlu0 %3760
  %v3763 = vadd.f32 %v3758, %v3761
  %v3764 = vxor.u32 %v3763, 2147483648
  %v3765 = vmul.f32 %v3764, 1.442695
  %v3766 = vpow.pop %v3765
  %v3767 = vadd.f32 %v3766, 1.0
  %v3768 = vrcp.pop %v3767
  %v3769 = vmul.f32 1.0, %v3768
  %v3770 = vtanh.pop %v3763
  %v3771 = vmul.f32 %v3769, %v3566
  %3773 = vrot.lane.b32.xlu0 %v3770, 112
  %v3774 = vpop.permute.xlu0 %3773
  %v3776 = vmul.f32 %v3769, %v3774
  %3778 = vrot.lane.b32.xlu0 %v3776, 8
  %v3779 = vpop.permute.xlu0 %3778
  %v3781 = vadd.f32 %v3771, %v3779
  %v3782 = vtanh.pop %v3781
  %3784 = vrot.lane.b32.xlu0 %v3782, 16
  %v3785 = vpop.permute.xlu0 %3784
  %v3787 = vmul.f32 %v3769, %v3785
  %3789 = vrot.lane.b32.xlu0 %v3757, 104
  %v3790 = vpop.permute.xlu0 %3789
  %3792 = vst.msk [vmem:[#allocation3 + $0xe] sm:$0x3] %vm2286, %v3790
  %3794 = vrot.lane.b32.xlu0 %v3787, 72
  %v3795 = vpop.permute.xlu0 %3794
  %3797 = vst.msk [vmem:[#allocation4] sm:$0x3] %vm2286, %v3795
  %v3798 = vld [vmem:[#allocation3] sm:$0xff]
  %v3799 = vld [vmem:[#allocation3 + $0x8] sm:$0xff]
  %v3800 = vmax.f32 %v3798, 0.0
  %v3801 = vmax.f32 %v3799, 0.0
  %v3802 = vld [vmem:[%s7] sm:$0xff]
  %v3803 = vld [vmem:[#allocation4] sm:$0xff]
  %v3804 = vld [vmem:[#allocation4 + $0x8] sm:$0xff]
  %v3805 = vmax.f32 %v3803, 0.0
  %v3806 = vmax.f32 %v3804, 0.0
  %v3807 = vld [vmem:[%s7 + $0x8] sm:$0xff]
  %v3809 = vsel %vm2079, %v3805, 0
  %v3812 = vsel %vm2079, %v3806, 0
  %3814 = vmatprep.subr.mxu0 0.0
  %3815 = vmatpush1.msra.mxu0 %v3807
  %3816 = vmatprep.subr.mxu0 0.0
  %3817 = vmatpush1.msra.mxu0 0.0
  %3818 = vmatprep.subr.mxu0 0.0
  %3819 = vmatpush1.msra.mxu0 0.0
  %3820 = vmatprep.subr.mxu0 0.0
  %3821 = vmatpush1.msra.mxu0 0.0
  %3822 = vmatprep.subr.mxu0 0.0
  %3823 = vmatpush1.msra.mxu0 0.0
  %3824 = vmatprep.subr.mxu0 0.0
  %3825 = vmatpush1.msra.mxu0 0.0
  %3826 = vmatprep.subr.mxu0 0.0
  %3827 = vmatpush1.msra.mxu0 0.0
  %3828 = vmatprep.subr.mxu0 0.0
  %3829 = vmatpush1.msra.mxu0 0.0
  %3830 = vmatprep.subr.mxu0 0.0
  %3831 = vmatpush1.msra.mxu0 0.0
  %3832 = vmatprep.subr.mxu0 0.0
  %3833 = vmatpush1.msra.mxu0 0.0
  %3834 = vmatprep.subr.mxu0 0.0
  %3835 = vmatpush1.msra.mxu0 0.0
  %3836 = vmatprep.subr.mxu0 0.0
  %3837 = vmatpush1.msra.mxu0 0.0
  %3838 = vmatprep.subr.mxu0 0.0
  %3839 = vmatpush1.msra.mxu0 0.0
  %3840 = vmatprep.subr.mxu0 0.0
  %3841 = vmatpush1.msra.mxu0 0.0
  %3842 = vmatprep.subr.mxu0 0.0
  %3843 = vmatpush1.msra.mxu0 0.0
  %3844 = vmatprep.subr.mxu0 0.0
  %3845 = vmatpush1.msra.mxu0 0.0
  %3846 = vmatprep.subr.mxu0 0.0
  %3847 = vmatpush1.msra.mxu0 0.0
  %3848 = vmatprep.subr.mxu0 0.0
  %3849 = vmatpush1.msra.mxu0 0.0
  %3850 = vmatprep.subr.mxu0 0.0
  %3851 = vmatpush1.msra.mxu0 0.0
  %3852 = vmatprep.subr.mxu0 0.0
  %3853 = vmatpush1.msra.mxu0 0.0
  %3854 = vmatprep.subr.mxu0 0.0
  %3855 = vmatpush1.msra.mxu0 0.0
  %3856 = vmatprep.subr.mxu0 0.0
  %3857 = vmatpush1.msra.mxu0 0.0
  %3858 = vmatprep.subr.mxu0 0.0
  %3859 = vmatpush1.msra.mxu0 0.0
  %3860 = vmatprep.subr.mxu0 0.0
  %3861 = vmatpush1.msra.mxu0 0.0
  %3862 = vmatprep.subr.mxu0 0.0
  %3863 = vmatpush1.msra.mxu0 0.0
  %3864 = vmatprep.subr.mxu0 0.0
  %3865 = vmatpush1.msra.mxu0 0.0
  %3866 = vmatprep.subr.mxu0 0.0
  %3867 = vmatpush1.msra.mxu0 0.0
  %3868 = vmatprep.subr.mxu0 0.0
  %3869 = vmatpush1.msra.mxu0 0.0
  %3870 = vmatprep.subr.mxu0 0.0
  %3871 = vmatpush1.msra.mxu0 0.0
  %3872 = vmatprep.subr.mxu0 0.0
  %3873 = vmatpush1.msra.mxu0 0.0
  %3874 = vmatprep.subr.mxu0 0.0
  %3875 = vmatpush1.msra.mxu0 0.0
  %3876 = vmatprep.subr.mxu0 0.0
  %3877 = vmatpush1.msra.mxu0 0.0
  %3878 = vmatprep.mubr.f32.mxu0 0.0
  %3879 = vmatmul.mubr.f32.gmra.mrb[0].mxu0 %v3809
  %v3880 = vpop.f32.mrb[0].mxu0
  %v3881 = vadd.f32 0.0, %v3880
  %v3882 = vpop.f32.mrb[0].mxu0
  %3883 = vmatprep.mubr.f32.mxu0 0.0
  %3884 = vmatmul.mubr.f32.gmra.mrb[0].mxu0 %v3812
  %v3885 = vpop.f32.mrb[0].mxu0
  %v3886 = vadd.f32 0.0, %v3885
  %v3887 = vpop.f32.mrb[0].mxu0
  %3888 = vdwg.mxu0
  %v3890 = vsel %vm2079, %v3800, 0
  %v3893 = vsel %vm2079, %v3801, 0
  %3895 = vmatprep.subr.mxu0 0.0
  %3896 = vmatpush1.msra.mxu0 %v3802
  %3897 = vmatprep.subr.mxu0 0.0
  %3898 = vmatpush1.msra.mxu0 0.0
  %3899 = vmatprep.subr.mxu0 0.0
  %3900 = vmatpush1.msra.mxu0 0.0
  %3901 = vmatprep.subr.mxu0 0.0
  %3902 = vmatpush1.msra.mxu0 0.0
  %3903 = vmatprep.subr.mxu0 0.0
  %3904 = vmatpush1.msra.mxu0 0.0
  %3905 = vmatprep.subr.mxu0 0.0
  %3906 = vmatpush1.msra.mxu0 0.0
  %3907 = vmatprep.subr.mxu0 0.0
  %3908 = vmatpush1.msra.mxu0 0.0
  %3909 = vmatprep.subr.mxu0 0.0
  %3910 = vmatpush1.msra.mxu0 0.0
  %3911 = vmatprep.subr.mxu0 0.0
  %3912 = vmatpush1.msra.mxu0 0.0
  %3913 = vmatprep.subr.mxu0 0.0
  %3914 = vmatpush1.msra.mxu0 0.0
  %3915 = vmatprep.subr.mxu0 0.0
  %3916 = vmatpush1.msra.mxu0 0.0
  %3917 = vmatprep.subr.mxu0 0.0
  %3918 = vmatpush1.msra.mxu0 0.0
  %3919 = vmatprep.subr.mxu0 0.0
  %3920 = vmatpush1.msra.mxu0 0.0
  %3921 = vmatprep.subr.mxu0 0.0
  %3922 = vmatpush1.msra.mxu0 0.0
  %3923 = vmatprep.subr.mxu0 0.0
  %3924 = vmatpush1.msra.mxu0 0.0
  %3925 = vmatprep.subr.mxu0 0.0
  %3926 = vmatpush1.msra.mxu0 0.0
  %3927 = vmatprep.subr.mxu0 0.0
  %3928 = vmatpush1.msra.mxu0 0.0
  %3929 = vmatprep.subr.mxu0 0.0
  %3930 = vmatpush1.msra.mxu0 0.0
  %3931 = vmatprep.subr.mxu0 0.0
  %3932 = vmatpush1.msra.mxu0 0.0
  %3933 = vmatprep.subr.mxu0 0.0
  %3934 = vmatpush1.msra.mxu0 0.0
  %3935 = vmatprep.subr.mxu0 0.0
  %3936 = vmatpush1.msra.mxu0 0.0
  %3937 = vmatprep.subr.mxu0 0.0
  %3938 = vmatpush1.msra.mxu0 0.0
  %3939 = vmatprep.subr.mxu0 0.0
  %3940 = vmatpush1.msra.mxu0 0.0
  %3941 = vmatprep.subr.mxu0 0.0
  %3942 = vmatpush1.msra.mxu0 0.0
  %3943 = vmatprep.subr.mxu0 0.0
  %3944 = vmatpush1.msra.mxu0 0.0
  %3945 = vmatprep.subr.mxu0 0.0
  %3946 = vmatpush1.msra.mxu0 0.0
  %3947 = vmatprep.subr.mxu0 0.0
  %3948 = vmatpush1.msra.mxu0 0.0
  %3949 = vmatprep.subr.mxu0 0.0
  %3950 = vmatpush1.msra.mxu0 0.0
  %3951 = vmatprep.subr.mxu0 0.0
  %3952 = vmatpush1.msra.mxu0 0.0
  %3953 = vmatprep.subr.mxu0 0.0
  %3954 = vmatpush1.msra.mxu0 0.0
  %3955 = vmatprep.subr.mxu0 0.0
  %3956 = vmatpush1.msra.mxu0 0.0
  %3957 = vmatprep.subr.mxu0 0.0
  %3958 = vmatpush1.msra.mxu0 0.0
  %3959 = vmatprep.mubr.f32.mxu0 0.0
  %3960 = vmatmul.mubr.f32.gmra.mrb[0].mxu0 %v3890
  %v3961 = vpop.f32.mrb[0].mxu0
  %v3962 = vadd.f32 %v3881, %v3961
  %v3963 = vpop.f32.mrb[0].mxu0
  %3964 = vmatprep.mubr.f32.mxu0 0.0
  %3965 = vmatmul.mubr.f32.gmra.mrb[0].mxu0 %v3893
  %v3966 = vpop.f32.mrb[0].mxu0
  %v3967 = vadd.f32 %v3886, %v3966
  %v3968 = vpop.f32.mrb[0].mxu0
  %3969 = vdwg.mxu0
  %v3970 = vld [vmem:[%s8] sm:$0x1]
  %v3972 = vlaneseq
  %v3973 = vshrl.u32 %v3972, 7
  %v3974 = vsub.s32 0, %v3973
  %v3975 = vrot.slane %v3970, %v3974
  %v3977 = vadd.f32 %v3962, %v3975
  %v3978 = vadd.f32 %v3967, %v3975
  %3979 = vst [vmem:[%s9] sm:$0xff] %v3977
  %3980 = vst [vmem:[%s9 + $0x8] sm:$0xff] %v3978
  // Predicated region
  $region38: #{demapper_lstm_forward.1} parent=0 // pred_check
    _
  $region39: #{demapper_lstm_forward.1} parent=0 // pred_check_branch
    %3982 = sbr.rel (0) target = $region41
  $region40: #{demapper_lstm_forward.1} parent=0 // pred_region
    _
  $region41: #{demapper_lstm_forward.1} parent=0 // pred_fallthru
    _
  // Predicated region
  $region42: #{demapper_lstm_forward.1} parent=0 // pred_check
    _
  $region43: #{demapper_lstm_forward.1} parent=0 // pred_check_branch
    %3984 = sbr.rel (0) target = $region45
  $region44: #{demapper_lstm_forward.1} parent=0 // pred_region
    _
  $region45: #{demapper_lstm_forward.1} parent=0 // pred_fallthru
    _

</llo_original>
